<compile_context>
chip_gen: v5e
topology: v5e:2x2
jax: 0.10.0
libtpu: 0.0.40
codegen_flags: <defaults>
</compile_context>

<pallas_src>
import functools

import jax
import jax.numpy as jnp
from jax import lax
from jax.experimental import pallas as pl
from jax.experimental.pallas import tpu as pltpu


def _attention_kernel(x_ref, wqkv_t_ref, wo_t_ref, cos_ref, sin_ref, o_ref,
                      *, batch, seq, num_heads, scaling):
    BS, H = o_ref.shape
    dh = H // num_heads
    half = dh // 2

    x = x_ref[...]                          # (B*S, H) bf16

    def _mm(a, b):                          # plain NN matmul, f32 MXU accumulation
        return jnp.dot(a, b, preferred_element_type=jnp.float32)

    # Fused QKV projection: ONE wide matmul (M=B*S, K=H, N=3H).
    qkv = _mm(x, wqkv_t_ref[...])           # (B*S, 3H) f32

    cos = cos_ref[...]                      # (S, dh) f32
    sin_signed = sin_ref[...]               # (S, dh) f32, rotate_half sign folded in
    wo_t = wo_t_ref[...]                    # (H, H) bf16

    def _rope(t):                           # t: (S, dh) f32
        # rotate_half(t) * sin == concat(t[half:], t[:half]) * sin_signed
        rolled = jnp.concatenate([t[:, half:], t[:, :half]], axis=1)
        return t * cos + rolled * sin_signed

    # Static (fully unrolled) loops over batch and heads; all slices static.
    for b in range(batch):
        rows = slice(b * seq, (b + 1) * seq)
        out_b = jnp.zeros((seq, H), jnp.float32)        # per-head o_proj accumulator
        for h in range(num_heads):
            qcol = slice(h * dh, (h + 1) * dh)
            kcol = slice(H + h * dh, H + (h + 1) * dh)
            vcol = slice(2 * H + h * dh, 2 * H + (h + 1) * dh)

            q = _rope(qkv[rows, qcol]).astype(jnp.bfloat16)    # (S, dh)
            k = _rope(qkv[rows, kcol]).astype(jnp.bfloat16)    # (S, dh)
            v = qkv[rows, vcol].astype(jnp.bfloat16)           # (S, dh)

            # scores = q @ k.T (f32 acc); softmax in f32 (matches torch).
            scores = lax.dot_general(
                q, k, (((1,), (1,)), ((), ())),
                preferred_element_type=jnp.float32) * scaling  # (S, S)
            scores = scores - jnp.max(scores, axis=-1, keepdims=True)
            e = jnp.exp(scores)
            probs = e / jnp.sum(e, axis=-1, keepdims=True)     # exact f32 softmax

            ctx = _mm(probs.astype(jnp.bfloat16), v)           # (S, dh) f32
            out_b = out_b + _mm(ctx.astype(jnp.bfloat16),
                                wo_t[h * dh:(h + 1) * dh, :])  # (S, H)

        o_ref[rows, :] = out_b.astype(o_ref.dtype)             # lane-dense store


def prepare_attention_params(wq, wk, wv, wo, cos, sin, num_heads):
    """One-time host-side prep (cache these across calls):
       fused + transposed bf16 weights, f32 cos, sign-folded f32 sin."""
    H = wq.shape[1]
    dh = H // num_heads
    wqkv_t = jnp.concatenate([wq.T, wk.T, wv.T], axis=1).astype(jnp.bfloat16)  # (H,3H)
    wo_t = wo.T.astype(jnp.bfloat16)                                           # (H,H)
    sign = jnp.concatenate([-jnp.ones((dh // 2,), jnp.float32),
                            jnp.ones((dh // 2,), jnp.float32)])
    sin_signed = sin.astype(jnp.float32) * sign[None, :]
    cos_f32 = cos.astype(jnp.float32)
    return wqkv_t, wo_t, cos_f32, sin_signed


@functools.partial(jax.jit, static_argnames=("num_heads",))
def smollm2_attention_pallas(x, wqkv_t, wo_t, cos, sin_signed, num_heads):
    """x: (B,S,H) f32.  wqkv_t: (H,3H) bf16, wo_t: (H,H) bf16 (prepared)."""
    B, S, H = x.shape
    dh = H // num_heads
    scaling = dh ** -0.5
    BS = B * S

    # Fold batch into the matmul M dimension; bf16 MXU operands.
    x2d = x.astype(jnp.bfloat16).reshape(BS, H)

    kernel = functools.partial(_attention_kernel, batch=B, seq=S,
                               num_heads=num_heads, scaling=scaling)

    flops = 8 * BS * H * H + 4 * B * num_heads * S * S * dh
    bytes_accessed = BS * H * 2 + 4 * H * H * 2 + 2 * S * dh * 4 + BS * H * 4
    cost = pl.CostEstimate(flops=flops,
                           transcendentals=B * num_heads * S * S,
                           bytes_accessed=bytes_accessed)

    # Computed (small) scoped-VMEM bound instead of a blanket large limit.
    vmem_bytes = (2 * bytes_accessed            # double-buffered blocks
                  + 4 * BS * 3 * H * 4)         # f32 qkv / accumulator headroom
    vmem_limit = int(min(32 * 1024 * 1024, max(4 * 1024 * 1024, vmem_bytes)))

    out2d = pl.pallas_call(
        kernel,
        out_shape=jax.ShapeDtypeStruct((BS, H), jnp.float32),
        grid_spec=pltpu.PrefetchScalarGridSpec(
            num_scalar_prefetch=0,
            grid=(1,),
            in_specs=[
                pl.BlockSpec((BS, H), lambda i: (0, 0)),      # x (bf16, B folded)
                pl.BlockSpec((H, 3 * H), lambda i: (0, 0)),   # fused Wqkv.T (bf16)
                pl.BlockSpec((H, H), lambda i: (0, 0)),       # Wo.T (bf16)
                pl.BlockSpec((S, dh), lambda i: (0, 0)),      # cos (f32)
                pl.BlockSpec((S, dh), lambda i: (0, 0)),      # sin * sign (f32)
            ],
            out_specs=pl.BlockSpec((BS, H), lambda i: (0, 0)),
        ),
        compiler_params=pltpu.CompilerParams(
            dimension_semantics=("arbitrary",),
            vmem_limit_bytes=vmem_limit),
        cost_estimate=cost,
    )(x2d, wqkv_t, wo_t, cos, sin_signed)

    return out2d.reshape(B, S, H)


# ----------------------------------------------------------------------------
# Pure-JAX f32 reference (mirrors the PyTorch forward with rotary_emb, no mask,
# no kv-cache).
# ----------------------------------------------------------------------------
def _rotate_half(t):
    d = t.shape[-1]
    return jnp.concatenate([-t[..., d // 2:], t[..., : d // 2]], axis=-1)


def _reference(x, wq, wk, wv, wo, cos, sin, num_heads):
    B, S, H = x.shape
    dh = H // num_heads
    q = (x @ wq.T).reshape(B, S, num_heads, dh).transpose(0, 2, 1, 3)
    k = (x @ wk.T).reshape(B, S, num_heads, dh).transpose(0, 2, 1, 3)
    v = (x @ wv.T).reshape(B, S, num_heads, dh).transpose(0, 2, 1, 3)
    c = cos[None, None]
    s = sin[None, None]
    q = q * c + _rotate_half(q) * s
    k = k * c + _rotate_half(k) * s
    scores = jnp.einsum("bhqd,bhkd->bhqk", q, k) * (dh ** -0.5)
    probs = jax.nn.softmax(scores.astype(jnp.float32), axis=-1)
    ctx = jnp.einsum("bhqk,bhkd->bhqd", probs, v)
    ctx = ctx.transpose(0, 2, 1, 3).reshape(B, S, H)
    return ctx @ wo.T


if __name__ == "__main__":
    B, S, H, NH = 2, 16, 384, 3     # small shapes; H divisible by num_heads
    DH = H // NH                    # 128 -> lane-aligned head slices

    key = jax.random.PRNGKey(0)
    kx, kq, kk, kv, ko = jax.random.split(key, 5)
    init = 0.02  # config.initializer_range
    x = jax.random.normal(kx, (B, S, H), jnp.float32)
    wq = init * jax.random.normal(kq, (H, H), jnp.float32)
    wk = init * jax.random.normal(kk, (H, H), jnp.float32)
    wv = init * jax.random.normal(kv, (H, H), jnp.float32)
    wo = init * jax.random.normal(ko, (H, H), jnp.float32)

    # Rotary embedding table for position_ids = arange(S) (LLaMA-style).
    inv_freq = 1.0 / (10000.0 ** (jnp.arange(0, DH, 2, dtype=jnp.float32) / DH))
    pos = jnp.arange(S, dtype=jnp.float32)
    freqs = jnp.einsum("s,d->sd", pos, inv_freq)          # (S, DH/2)
    emb = jnp.concatenate([freqs, freqs], axis=-1)        # (S, DH)
    cos = jnp.cos(emb)
    sin = jnp.sin(emb)

    # One-time weight prep (fused/transposed bf16 weights, sign-folded sin).
    wqkv_t, wo_t, cos_p, sin_p = prepare_attention_params(
        wq, wk, wv, wo, cos, sin, NH)

    out = smollm2_attention_pallas(x, wqkv_t, wo_t, cos_p, sin_p, NH)
    out = jax.block_until_ready(out)

    ref = _reference(x, wq, wk, wv, wo, cos, sin, NH)
    assert out.shape == (B, S, H)
    # bf16 MXU operands (f32 accumulation) -> loosened tolerance vs f32 reference.
    max_err = float(jnp.max(jnp.abs(out - ref)))
    assert jnp.allclose(out, ref, atol=2e-2, rtol=2e-2), max_err
    print("KERNEL_OK")
</pallas_src>

<mosaic_0001>
module attributes {stable_mosaic.version = 11 : i64} {
  func.func @_attention_kernel(%arg0: i32, %arg1: memref<32x384xbf16, #tpu.memory_space<vmem>>, %arg2: memref<384x1152xbf16, #tpu.memory_space<vmem>>, %arg3: memref<384x384xbf16, #tpu.memory_space<vmem>>, %arg4: memref<16x128xf32, #tpu.memory_space<vmem>>, %arg5: memref<16x128xf32, #tpu.memory_space<vmem>>, %arg6: memref<32x384xf32, #tpu.memory_space<vmem>>) attributes {dimension_semantics = [#tpu.dimension_semantics<arbitrary>], iteration_bounds = array<i64: 1>, scalar_prefetch = 0 : i64, scratch_operands = 0 : i64, tpu.core_type = #tpu.core_type<tc>, window_params = [{pipeline_mode = #tpu.pipeline_mode<synchronous>, transform_indices = @transform_0, window_bounds = array<i64: 32, 384>}, {pipeline_mode = #tpu.pipeline_mode<synchronous>, transform_indices = @transform_1, window_bounds = array<i64: 384, 1152>}, {pipeline_mode = #tpu.pipeline_mode<synchronous>, transform_indices = @transform_2, window_bounds = array<i64: 384, 384>}, {pipeline_mode = #tpu.pipeline_mode<synchronous>, transform_indices = @transform_3, window_bounds = array<i64: 16, 128>}, {pipeline_mode = #tpu.pipeline_mode<synchronous>, transform_indices = @transform_4, window_bounds = array<i64: 16, 128>}, {pipeline_mode = #tpu.pipeline_mode<synchronous>, transform_indices = @transform_5, window_bounds = array<i64: 32, 384>}]} {
    %c0 = arith.constant 0 : index
    %c0_0 = arith.constant 0 : index
    %0 = vector.load %arg1[%c0, %c0_0] : memref<32x384xbf16, #tpu.memory_space<vmem>>, vector<32x384xbf16>
    %c0_1 = arith.constant 0 : index
    %c0_2 = arith.constant 0 : index
    %1 = vector.load %arg2[%c0_1, %c0_2] : memref<384x1152xbf16, #tpu.memory_space<vmem>>, vector<384x1152xbf16>
    %cst = arith.constant dense<0.000000e+00> : vector<32x1152xf32>
    %2 = tpu.matmul %0, %1, %cst {dimension_numbers = #tpu.dot_dimension_numbers<[1], [0], [0], [1], [0, 0, 1, 1], [], []>} : vector<32x384xbf16>, vector<384x1152xbf16>, vector<32x1152xf32> -> vector<32x1152xf32>
    %c0_3 = arith.constant 0 : index
    %c0_4 = arith.constant 0 : index
    %3 = vector.load %arg4[%c0_3, %c0_4] : memref<16x128xf32, #tpu.memory_space<vmem>>, vector<16x128xf32>
    %c0_5 = arith.constant 0 : index
    %c0_6 = arith.constant 0 : index
    %4 = vector.load %arg5[%c0_5, %c0_6] : memref<16x128xf32, #tpu.memory_space<vmem>>, vector<16x128xf32>
    %c0_7 = arith.constant 0 : index
    %c0_8 = arith.constant 0 : index
    %5 = vector.load %arg3[%c0_7, %c0_8] : memref<384x384xbf16, #tpu.memory_space<vmem>>, vector<384x384xbf16>
    %cst_9 = arith.constant 0.000000e+00 : f32
    %6 = vector.broadcast %cst_9 : f32 to vector<16x384xf32>
    %7 = vector.extract_strided_slice %2 {offsets = [0, 0], sizes = [16, 128], strides = [1, 1]} : vector<32x1152xf32> to vector<16x128xf32>
    %8 = vector.extract_strided_slice %7 {offsets = [0, 64], sizes = [16, 64], strides = [1, 1]} : vector<16x128xf32> to vector<16x64xf32>
    %9 = vector.extract_strided_slice %7 {offsets = [0, 0], sizes = [16, 64], strides = [1, 1]} : vector<16x128xf32> to vector<16x64xf32>
    %10 = tpu.concatenate %8, %9 in 1 : vector<16x64xf32>, vector<16x64xf32> -> vector<16x128xf32>
    %11 = arith.mulf %7, %3 : vector<16x128xf32>
    %12 = arith.mulf %10, %4 : vector<16x128xf32>
    %13 = arith.addf %11, %12 : vector<16x128xf32>
    %14 = arith.truncf %13 : vector<16x128xf32> to vector<16x128xbf16>
    %15 = vector.extract_strided_slice %2 {offsets = [0, 384], sizes = [16, 128], strides = [1, 1]} : vector<32x1152xf32> to vector<16x128xf32>
    %16 = vector.extract_strided_slice %15 {offsets = [0, 64], sizes = [16, 64], strides = [1, 1]} : vector<16x128xf32> to vector<16x64xf32>
    %17 = vector.extract_strided_slice %15 {offsets = [0, 0], sizes = [16, 64], strides = [1, 1]} : vector<16x128xf32> to vector<16x64xf32>
    %18 = tpu.concatenate %16, %17 in 1 : vector<16x64xf32>, vector<16x64xf32> -> vector<16x128xf32>
    %19 = arith.mulf %15, %3 : vector<16x128xf32>
    %20 = arith.mulf %18, %4 : vector<16x128xf32>
    %21 = arith.addf %19, %20 : vector<16x128xf32>
    %22 = arith.truncf %21 : vector<16x128xf32> to vector<16x128xbf16>
    %23 = vector.extract_strided_slice %2 {offsets = [0, 768], sizes = [16, 128], strides = [1, 1]} : vector<32x1152xf32> to vector<16x128xf32>
    %24 = arith.truncf %23 : vector<16x128xf32> to vector<16x128xbf16>
    %cst_10 = arith.constant dense<0.000000e+00> : vector<16x16xf32>
    %25 = tpu.matmul %14, %22, %cst_10 {dimension_numbers = #tpu.dot_dimension_numbers<[1], [1], [0], [0], [0, 0, 1, 0], [], []>} : vector<16x128xbf16>, vector<16x128xbf16>, vector<16x16xf32> -> vector<16x16xf32>
    %cst_11 = arith.constant 0.0883883461 : f32
    %26 = vector.broadcast %cst_11 : f32 to vector<16x16xf32>
    %27 = arith.mulf %25, %26 : vector<16x16xf32>
    %cst_12 = arith.constant dense<0xFF800000> : vector<16xf32>
    %28 = vector.multi_reduction <maximumf>, %27, %cst_12 [1] : vector<16x16xf32> to vector<16xf32>
    %29 = vector.shape_cast %28 : vector<16xf32> to vector<16x1xf32>
    %30 = vector.broadcast %29 : vector<16x1xf32> to vector<16x16xf32>
    %31 = arith.subf %27, %30 : vector<16x16xf32>
    %32 = math.exp %31 : vector<16x16xf32>
    %cst_13 = arith.constant dense<0.000000e+00> : vector<16xf32>
    %33 = vector.multi_reduction <add>, %32, %cst_13 [1] : vector<16x16xf32> to vector<16xf32>
    %34 = vector.shape_cast %33 : vector<16xf32> to vector<16x1xf32>
    %35 = vector.broadcast %34 : vector<16x1xf32> to vector<16x16xf32>
    %36 = arith.divf %32, %35 : vector<16x16xf32>
    %37 = arith.truncf %36 : vector<16x16xf32> to vector<16x16xbf16>
    %cst_14 = arith.constant dense<0.000000e+00> : vector<16x128xf32>
    %38 = tpu.matmul %37, %24, %cst_14 {dimension_numbers = #tpu.dot_dimension_numbers<[1], [0], [0], [1], [0, 0, 1, 1], [], []>} : vector<16x16xbf16>, vector<16x128xbf16>, vector<16x128xf32> -> vector<16x128xf32>
    %39 = arith.truncf %38 : vector<16x128xf32> to vector<16x128xbf16>
    %40 = vector.extract_strided_slice %5 {offsets = [0, 0], sizes = [128, 384], strides = [1, 1]} : vector<384x384xbf16> to vector<128x384xbf16>
    %cst_15 = arith.constant dense<0.000000e+00> : vector<16x384xf32>
    %41 = tpu.matmul %39, %40, %cst_15 {dimension_numbers = #tpu.dot_dimension_numbers<[1], [0], [0], [1], [0, 0, 1, 1], [], []>} : vector<16x128xbf16>, vector<128x384xbf16>, vector<16x384xf32> -> vector<16x384xf32>
    %42 = arith.addf %6, %41 : vector<16x384xf32>
    %43 = vector.extract_strided_slice %2 {offsets = [0, 128], sizes = [16, 128], strides = [1, 1]} : vector<32x1152xf32> to vector<16x128xf32>
    %44 = vector.extract_strided_slice %43 {offsets = [0, 64], sizes = [16, 64], strides = [1, 1]} : vector<16x128xf32> to vector<16x64xf32>
    %45 = vector.extract_strided_slice %43 {offsets = [0, 0], sizes = [16, 64], strides = [1, 1]} : vector<16x128xf32> to vector<16x64xf32>
    %46 = tpu.concatenate %44, %45 in 1 : vector<16x64xf32>, vector<16x64xf32> -> vector<16x128xf32>
    %47 = arith.mulf %43, %3 : vector<16x128xf32>
    %48 = arith.mulf %46, %4 : vector<16x128xf32>
    %49 = arith.addf %47, %48 : vector<16x128xf32>
    %50 = arith.truncf %49 : vector<16x128xf32> to vector<16x128xbf16>
    %51 = vector.extract_strided_slice %2 {offsets = [0, 512], sizes = [16, 128], strides = [1, 1]} : vector<32x1152xf32> to vector<16x128xf32>
    %52 = vector.extract_strided_slice %51 {offsets = [0, 64], sizes = [16, 64], strides = [1, 1]} : vector<16x128xf32> to vector<16x64xf32>
    %53 = vector.extract_strided_slice %51 {offsets = [0, 0], sizes = [16, 64], strides = [1, 1]} : vector<16x128xf32> to vector<16x64xf32>
    %54 = tpu.concatenate %52, %53 in 1 : vector<16x64xf32>, vector<16x64xf32> -> vector<16x128xf32>
    %55 = arith.mulf %51, %3 : vector<16x128xf32>
    %56 = arith.mulf %54, %4 : vector<16x128xf32>
    %57 = arith.addf %55, %56 : vector<16x128xf32>
    %58 = arith.truncf %57 : vector<16x128xf32> to vector<16x128xbf16>
    %59 = vector.extract_strided_slice %2 {offsets = [0, 896], sizes = [16, 128], strides = [1, 1]} : vector<32x1152xf32> to vector<16x128xf32>
    %60 = arith.truncf %59 : vector<16x128xf32> to vector<16x128xbf16>
    %cst_16 = arith.constant dense<0.000000e+00> : vector<16x16xf32>
    %61 = tpu.matmul %50, %58, %cst_16 {dimension_numbers = #tpu.dot_dimension_numbers<[1], [1], [0], [0], [0, 0, 1, 0], [], []>} : vector<16x128xbf16>, vector<16x128xbf16>, vector<16x16xf32> -> vector<16x16xf32>
    %cst_17 = arith.constant 0.0883883461 : f32
    %62 = vector.broadcast %cst_17 : f32 to vector<16x16xf32>
    %63 = arith.mulf %61, %62 : vector<16x16xf32>
    %cst_18 = arith.constant dense<0xFF800000> : vector<16xf32>
    %64 = vector.multi_reduction <maximumf>, %63, %cst_18 [1] : vector<16x16xf32> to vector<16xf32>
    %65 = vector.shape_cast %64 : vector<16xf32> to vector<16x1xf32>
    %66 = vector.broadcast %65 : vector<16x1xf32> to vector<16x16xf32>
    %67 = arith.subf %63, %66 : vector<16x16xf32>
    %68 = math.exp %67 : vector<16x16xf32>
    %cst_19 = arith.constant dense<0.000000e+00> : vector<16xf32>
    %69 = vector.multi_reduction <add>, %68, %cst_19 [1] : vector<16x16xf32> to vector<16xf32>
    %70 = vector.shape_cast %69 : vector<16xf32> to vector<16x1xf32>
    %71 = vector.broadcast %70 : vector<16x1xf32> to vector<16x16xf32>
    %72 = arith.divf %68, %71 : vector<16x16xf32>
    %73 = arith.truncf %72 : vector<16x16xf32> to vector<16x16xbf16>
    %cst_20 = arith.constant dense<0.000000e+00> : vector<16x128xf32>
    %74 = tpu.matmul %73, %60, %cst_20 {dimension_numbers = #tpu.dot_dimension_numbers<[1], [0], [0], [1], [0, 0, 1, 1], [], []>} : vector<16x16xbf16>, vector<16x128xbf16>, vector<16x128xf32> -> vector<16x128xf32>
    %75 = arith.truncf %74 : vector<16x128xf32> to vector<16x128xbf16>
    %76 = vector.extract_strided_slice %5 {offsets = [128, 0], sizes = [128, 384], strides = [1, 1]} : vector<384x384xbf16> to vector<128x384xbf16>
    %cst_21 = arith.constant dense<0.000000e+00> : vector<16x384xf32>
    %77 = tpu.matmul %75, %76, %cst_21 {dimension_numbers = #tpu.dot_dimension_numbers<[1], [0], [0], [1], [0, 0, 1, 1], [], []>} : vector<16x128xbf16>, vector<128x384xbf16>, vector<16x384xf32> -> vector<16x384xf32>
    %78 = arith.addf %42, %77 : vector<16x384xf32>
    %79 = vector.extract_strided_slice %2 {offsets = [0, 256], sizes = [16, 128], strides = [1, 1]} : vector<32x1152xf32> to vector<16x128xf32>
    %80 = vector.extract_strided_slice %79 {offsets = [0, 64], sizes = [16, 64], strides = [1, 1]} : vector<16x128xf32> to vector<16x64xf32>
    %81 = vector.extract_strided_slice %79 {offsets = [0, 0], sizes = [16, 64], strides = [1, 1]} : vector<16x128xf32> to vector<16x64xf32>
    %82 = tpu.concatenate %80, %81 in 1 : vector<16x64xf32>, vector<16x64xf32> -> vector<16x128xf32>
    %83 = arith.mulf %79, %3 : vector<16x128xf32>
    %84 = arith.mulf %82, %4 : vector<16x128xf32>
    %85 = arith.addf %83, %84 : vector<16x128xf32>
    %86 = arith.truncf %85 : vector<16x128xf32> to vector<16x128xbf16>
    %87 = vector.extract_strided_slice %2 {offsets = [0, 640], sizes = [16, 128], strides = [1, 1]} : vector<32x1152xf32> to vector<16x128xf32>
    %88 = vector.extract_strided_slice %87 {offsets = [0, 64], sizes = [16, 64], strides = [1, 1]} : vector<16x128xf32> to vector<16x64xf32>
    %89 = vector.extract_strided_slice %87 {offsets = [0, 0], sizes = [16, 64], strides = [1, 1]} : vector<16x128xf32> to vector<16x64xf32>
    %90 = tpu.concatenate %88, %89 in 1 : vector<16x64xf32>, vector<16x64xf32> -> vector<16x128xf32>
    %91 = arith.mulf %87, %3 : vector<16x128xf32>
    %92 = arith.mulf %90, %4 : vector<16x128xf32>
    %93 = arith.addf %91, %92 : vector<16x128xf32>
    %94 = arith.truncf %93 : vector<16x128xf32> to vector<16x128xbf16>
    %95 = vector.extract_strided_slice %2 {offsets = [0, 1024], sizes = [16, 128], strides = [1, 1]} : vector<32x1152xf32> to vector<16x128xf32>
    %96 = arith.truncf %95 : vector<16x128xf32> to vector<16x128xbf16>
    %cst_22 = arith.constant dense<0.000000e+00> : vector<16x16xf32>
    %97 = tpu.matmul %86, %94, %cst_22 {dimension_numbers = #tpu.dot_dimension_numbers<[1], [1], [0], [0], [0, 0, 1, 0], [], []>} : vector<16x128xbf16>, vector<16x128xbf16>, vector<16x16xf32> -> vector<16x16xf32>
    %cst_23 = arith.constant 0.0883883461 : f32
    %98 = vector.broadcast %cst_23 : f32 to vector<16x16xf32>
    %99 = arith.mulf %97, %98 : vector<16x16xf32>
    %cst_24 = arith.constant dense<0xFF800000> : vector<16xf32>
    %100 = vector.multi_reduction <maximumf>, %99, %cst_24 [1] : vector<16x16xf32> to vector<16xf32>
    %101 = vector.shape_cast %100 : vector<16xf32> to vector<16x1xf32>
    %102 = vector.broadcast %101 : vector<16x1xf32> to vector<16x16xf32>
    %103 = arith.subf %99, %102 : vector<16x16xf32>
    %104 = math.exp %103 : vector<16x16xf32>
    %cst_25 = arith.constant dense<0.000000e+00> : vector<16xf32>
    %105 = vector.multi_reduction <add>, %104, %cst_25 [1] : vector<16x16xf32> to vector<16xf32>
    %106 = vector.shape_cast %105 : vector<16xf32> to vector<16x1xf32>
    %107 = vector.broadcast %106 : vector<16x1xf32> to vector<16x16xf32>
    %108 = arith.divf %104, %107 : vector<16x16xf32>
    %109 = arith.truncf %108 : vector<16x16xf32> to vector<16x16xbf16>
    %cst_26 = arith.constant dense<0.000000e+00> : vector<16x128xf32>
    %110 = tpu.matmul %109, %96, %cst_26 {dimension_numbers = #tpu.dot_dimension_numbers<[1], [0], [0], [1], [0, 0, 1, 1], [], []>} : vector<16x16xbf16>, vector<16x128xbf16>, vector<16x128xf32> -> vector<16x128xf32>
    %111 = arith.truncf %110 : vector<16x128xf32> to vector<16x128xbf16>
    %112 = vector.extract_strided_slice %5 {offsets = [256, 0], sizes = [128, 384], strides = [1, 1]} : vector<384x384xbf16> to vector<128x384xbf16>
    %cst_27 = arith.constant dense<0.000000e+00> : vector<16x384xf32>
    %113 = tpu.matmul %111, %112, %cst_27 {dimension_numbers = #tpu.dot_dimension_numbers<[1], [0], [0], [1], [0, 0, 1, 1], [], []>} : vector<16x128xbf16>, vector<128x384xbf16>, vector<16x384xf32> -> vector<16x384xf32>
    %114 = arith.addf %78, %113 : vector<16x384xf32>
    %c0_28 = arith.constant 0 : index
    %c0_29 = arith.constant 0 : index
    %115 = vector.load %arg6[%c0_28, %c0_29] : memref<32x384xf32, #tpu.memory_space<vmem>>, vector<16x384xf32>
    tpu.vector_store %arg6[%c0_28, %c0_29], %114 {strides = array<i32>} : memref<32x384xf32, #tpu.memory_space<vmem>>, vector<16x384xf32>,
    %cst_30 = arith.constant 0.000000e+00 : f32
    %116 = vector.broadcast %cst_30 : f32 to vector<16x384xf32>
    %117 = vector.extract_strided_slice %2 {offsets = [16, 0], sizes = [16, 128], strides = [1, 1]} : vector<32x1152xf32> to vector<16x128xf32>
    %118 = vector.extract_strided_slice %117 {offsets = [0, 64], sizes = [16, 64], strides = [1, 1]} : vector<16x128xf32> to vector<16x64xf32>
    %119 = vector.extract_strided_slice %117 {offsets = [0, 0], sizes = [16, 64], strides = [1, 1]} : vector<16x128xf32> to vector<16x64xf32>
    %120 = tpu.concatenate %118, %119 in 1 : vector<16x64xf32>, vector<16x64xf32> -> vector<16x128xf32>
    %121 = arith.mulf %117, %3 : vector<16x128xf32>
    %122 = arith.mulf %120, %4 : vector<16x128xf32>
    %123 = arith.addf %121, %122 : vector<16x128xf32>
    %124 = arith.truncf %123 : vector<16x128xf32> to vector<16x128xbf16>
    %125 = vector.extract_strided_slice %2 {offsets = [16, 384], sizes = [16, 128], strides = [1, 1]} : vector<32x1152xf32> to vector<16x128xf32>
    %126 = vector.extract_strided_slice %125 {offsets = [0, 64], sizes = [16, 64], strides = [1, 1]} : vector<16x128xf32> to vector<16x64xf32>
    %127 = vector.extract_strided_slice %125 {offsets = [0, 0], sizes = [16, 64], strides = [1, 1]} : vector<16x128xf32> to vector<16x64xf32>
    %128 = tpu.concatenate %126, %127 in 1 : vector<16x64xf32>, vector<16x64xf32> -> vector<16x128xf32>
    %129 = arith.mulf %125, %3 : vector<16x128xf32>
    %130 = arith.mulf %128, %4 : vector<16x128xf32>
    %131 = arith.addf %129, %130 : vector<16x128xf32>
    %132 = arith.truncf %131 : vector<16x128xf32> to vector<16x128xbf16>
    %133 = vector.extract_strided_slice %2 {offsets = [16, 768], sizes = [16, 128], strides = [1, 1]} : vector<32x1152xf32> to vector<16x128xf32>
    %134 = arith.truncf %133 : vector<16x128xf32> to vector<16x128xbf16>
    %cst_31 = arith.constant dense<0.000000e+00> : vector<16x16xf32>
    %135 = tpu.matmul %124, %132, %cst_31 {dimension_numbers = #tpu.dot_dimension_numbers<[1], [1], [0], [0], [0, 0, 1, 0], [], []>} : vector<16x128xbf16>, vector<16x128xbf16>, vector<16x16xf32> -> vector<16x16xf32>
    %cst_32 = arith.constant 0.0883883461 : f32
    %136 = vector.broadcast %cst_32 : f32 to vector<16x16xf32>
    %137 = arith.mulf %135, %136 : vector<16x16xf32>
    %cst_33 = arith.constant dense<0xFF800000> : vector<16xf32>
    %138 = vector.multi_reduction <maximumf>, %137, %cst_33 [1] : vector<16x16xf32> to vector<16xf32>
    %139 = vector.shape_cast %138 : vector<16xf32> to vector<16x1xf32>
    %140 = vector.broadcast %139 : vector<16x1xf32> to vector<16x16xf32>
    %141 = arith.subf %137, %140 : vector<16x16xf32>
    %142 = math.exp %141 : vector<16x16xf32>
    %cst_34 = arith.constant dense<0.000000e+00> : vector<16xf32>
    %143 = vector.multi_reduction <add>, %142, %cst_34 [1] : vector<16x16xf32> to vector<16xf32>
    %144 = vector.shape_cast %143 : vector<16xf32> to vector<16x1xf32>
    %145 = vector.broadcast %144 : vector<16x1xf32> to vector<16x16xf32>
    %146 = arith.divf %142, %145 : vector<16x16xf32>
    %147 = arith.truncf %146 : vector<16x16xf32> to vector<16x16xbf16>
    %cst_35 = arith.constant dense<0.000000e+00> : vector<16x128xf32>
    %148 = tpu.matmul %147, %134, %cst_35 {dimension_numbers = #tpu.dot_dimension_numbers<[1], [0], [0], [1], [0, 0, 1, 1], [], []>} : vector<16x16xbf16>, vector<16x128xbf16>, vector<16x128xf32> -> vector<16x128xf32>
    %149 = arith.truncf %148 : vector<16x128xf32> to vector<16x128xbf16>
    %150 = vector.extract_strided_slice %5 {offsets = [0, 0], sizes = [128, 384], strides = [1, 1]} : vector<384x384xbf16> to vector<128x384xbf16>
    %cst_36 = arith.constant dense<0.000000e+00> : vector<16x384xf32>
    %151 = tpu.matmul %149, %150, %cst_36 {dimension_numbers = #tpu.dot_dimension_numbers<[1], [0], [0], [1], [0, 0, 1, 1], [], []>} : vector<16x128xbf16>, vector<128x384xbf16>, vector<16x384xf32> -> vector<16x384xf32>
    %152 = arith.addf %116, %151 : vector<16x384xf32>
    %153 = vector.extract_strided_slice %2 {offsets = [16, 128], sizes = [16, 128], strides = [1, 1]} : vector<32x1152xf32> to vector<16x128xf32>
    %154 = vector.extract_strided_slice %153 {offsets = [0, 64], sizes = [16, 64], strides = [1, 1]} : vector<16x128xf32> to vector<16x64xf32>
    %155 = vector.extract_strided_slice %153 {offsets = [0, 0], sizes = [16, 64], strides = [1, 1]} : vector<16x128xf32> to vector<16x64xf32>
    %156 = tpu.concatenate %154, %155 in 1 : vector<16x64xf32>, vector<16x64xf32> -> vector<16x128xf32>
    %157 = arith.mulf %153, %3 : vector<16x128xf32>
    %158 = arith.mulf %156, %4 : vector<16x128xf32>
    %159 = arith.addf %157, %158 : vector<16x128xf32>
    %160 = arith.truncf %159 : vector<16x128xf32> to vector<16x128xbf16>
    %161 = vector.extract_strided_slice %2 {offsets = [16, 512], sizes = [16, 128], strides = [1, 1]} : vector<32x1152xf32> to vector<16x128xf32>
    %162 = vector.extract_strided_slice %161 {offsets = [0, 64], sizes = [16, 64], strides = [1, 1]} : vector<16x128xf32> to vector<16x64xf32>
    %163 = vector.extract_strided_slice %161 {offsets = [0, 0], sizes = [16, 64], strides = [1, 1]} : vector<16x128xf32> to vector<16x64xf32>
    %164 = tpu.concatenate %162, %163 in 1 : vector<16x64xf32>, vector<16x64xf32> -> vector<16x128xf32>
    %165 = arith.mulf %161, %3 : vector<16x128xf32>
    %166 = arith.mulf %164, %4 : vector<16x128xf32>
    %167 = arith.addf %165, %166 : vector<16x128xf32>
    %168 = arith.truncf %167 : vector<16x128xf32> to vector<16x128xbf16>
    %169 = vector.extract_strided_slice %2 {offsets = [16, 896], sizes = [16, 128], strides = [1, 1]} : vector<32x1152xf32> to vector<16x128xf32>
    %170 = arith.truncf %169 : vector<16x128xf32> to vector<16x128xbf16>
    %cst_37 = arith.constant dense<0.000000e+00> : vector<16x16xf32>
    %171 = tpu.matmul %160, %168, %cst_37 {dimension_numbers = #tpu.dot_dimension_numbers<[1], [1], [0], [0], [0, 0, 1, 0], [], []>} : vector<16x128xbf16>, vector<16x128xbf16>, vector<16x16xf32> -> vector<16x16xf32>
    %cst_38 = arith.constant 0.0883883461 : f32
    %172 = vector.broadcast %cst_38 : f32 to vector<16x16xf32>
    %173 = arith.mulf %171, %172 : vector<16x16xf32>
    %cst_39 = arith.constant dense<0xFF800000> : vector<16xf32>
    %174 = vector.multi_reduction <maximumf>, %173, %cst_39 [1] : vector<16x16xf32> to vector<16xf32>
    %175 = vector.shape_cast %174 : vector<16xf32> to vector<16x1xf32>
    %176 = vector.broadcast %175 : vector<16x1xf32> to vector<16x16xf32>
    %177 = arith.subf %173, %176 : vector<16x16xf32>
    %178 = math.exp %177 : vector<16x16xf32>
    %cst_40 = arith.constant dense<0.000000e+00> : vector<16xf32>
    %179 = vector.multi_reduction <add>, %178, %cst_40 [1] : vector<16x16xf32> to vector<16xf32>
    %180 = vector.shape_cast %179 : vector<16xf32> to vector<16x1xf32>
    %181 = vector.broadcast %180 : vector<16x1xf32> to vector<16x16xf32>
    %182 = arith.divf %178, %181 : vector<16x16xf32>
    %183 = arith.truncf %182 : vector<16x16xf32> to vector<16x16xbf16>
    %cst_41 = arith.constant dense<0.000000e+00> : vector<16x128xf32>
    %184 = tpu.matmul %183, %170, %cst_41 {dimension_numbers = #tpu.dot_dimension_numbers<[1], [0], [0], [1], [0, 0, 1, 1], [], []>} : vector<16x16xbf16>, vector<16x128xbf16>, vector<16x128xf32> -> vector<16x128xf32>
    %185 = arith.truncf %184 : vector<16x128xf32> to vector<16x128xbf16>
    %186 = vector.extract_strided_slice %5 {offsets = [128, 0], sizes = [128, 384], strides = [1, 1]} : vector<384x384xbf16> to vector<128x384xbf16>
    %cst_42 = arith.constant dense<0.000000e+00> : vector<16x384xf32>
    %187 = tpu.matmul %185, %186, %cst_42 {dimension_numbers = #tpu.dot_dimension_numbers<[1], [0], [0], [1], [0, 0, 1, 1], [], []>} : vector<16x128xbf16>, vector<128x384xbf16>, vector<16x384xf32> -> vector<16x384xf32>
    %188 = arith.addf %152, %187 : vector<16x384xf32>
    %189 = vector.extract_strided_slice %2 {offsets = [16, 256], sizes = [16, 128], strides = [1, 1]} : vector<32x1152xf32> to vector<16x128xf32>
    %190 = vector.extract_strided_slice %189 {offsets = [0, 64], sizes = [16, 64], strides = [1, 1]} : vector<16x128xf32> to vector<16x64xf32>
    %191 = vector.extract_strided_slice %189 {offsets = [0, 0], sizes = [16, 64], strides = [1, 1]} : vector<16x128xf32> to vector<16x64xf32>
    %192 = tpu.concatenate %190, %191 in 1 : vector<16x64xf32>, vector<16x64xf32> -> vector<16x128xf32>
    %193 = arith.mulf %189, %3 : vector<16x128xf32>
    %194 = arith.mulf %192, %4 : vector<16x128xf32>
    %195 = arith.addf %193, %194 : vector<16x128xf32>
    %196 = arith.truncf %195 : vector<16x128xf32> to vector<16x128xbf16>
    %197 = vector.extract_strided_slice %2 {offsets = [16, 640], sizes = [16, 128], strides = [1, 1]} : vector<32x1152xf32> to vector<16x128xf32>
    %198 = vector.extract_strided_slice %197 {offsets = [0, 64], sizes = [16, 64], strides = [1, 1]} : vector<16x128xf32> to vector<16x64xf32>
    %199 = vector.extract_strided_slice %197 {offsets = [0, 0], sizes = [16, 64], strides = [1, 1]} : vector<16x128xf32> to vector<16x64xf32>
    %200 = tpu.concatenate %198, %199 in 1 : vector<16x64xf32>, vector<16x64xf32> -> vector<16x128xf32>
    %201 = arith.mulf %197, %3 : vector<16x128xf32>
    %202 = arith.mulf %200, %4 : vector<16x128xf32>
    %203 = arith.addf %201, %202 : vector<16x128xf32>
    %204 = arith.truncf %203 : vector<16x128xf32> to vector<16x128xbf16>
    %205 = vector.extract_strided_slice %2 {offsets = [16, 1024], sizes = [16, 128], strides = [1, 1]} : vector<32x1152xf32> to vector<16x128xf32>
    %206 = arith.truncf %205 : vector<16x128xf32> to vector<16x128xbf16>
    %cst_43 = arith.constant dense<0.000000e+00> : vector<16x16xf32>
    %207 = tpu.matmul %196, %204, %cst_43 {dimension_numbers = #tpu.dot_dimension_numbers<[1], [1], [0], [0], [0, 0, 1, 0], [], []>} : vector<16x128xbf16>, vector<16x128xbf16>, vector<16x16xf32> -> vector<16x16xf32>
    %cst_44 = arith.constant 0.0883883461 : f32
    %208 = vector.broadcast %cst_44 : f32 to vector<16x16xf32>
    %209 = arith.mulf %207, %208 : vector<16x16xf32>
    %cst_45 = arith.constant dense<0xFF800000> : vector<16xf32>
    %210 = vector.multi_reduction <maximumf>, %209, %cst_45 [1] : vector<16x16xf32> to vector<16xf32>
    %211 = vector.shape_cast %210 : vector<16xf32> to vector<16x1xf32>
    %212 = vector.broadcast %211 : vector<16x1xf32> to vector<16x16xf32>
    %213 = arith.subf %209, %212 : vector<16x16xf32>
    %214 = math.exp %213 : vector<16x16xf32>
    %cst_46 = arith.constant dense<0.000000e+00> : vector<16xf32>
    %215 = vector.multi_reduction <add>, %214, %cst_46 [1] : vector<16x16xf32> to vector<16xf32>
    %216 = vector.shape_cast %215 : vector<16xf32> to vector<16x1xf32>
    %217 = vector.broadcast %216 : vector<16x1xf32> to vector<16x16xf32>
    %218 = arith.divf %214, %217 : vector<16x16xf32>
    %219 = arith.truncf %218 : vector<16x16xf32> to vector<16x16xbf16>
    %cst_47 = arith.constant dense<0.000000e+00> : vector<16x128xf32>
    %220 = tpu.matmul %219, %206, %cst_47 {dimension_numbers = #tpu.dot_dimension_numbers<[1], [0], [0], [1], [0, 0, 1, 1], [], []>} : vector<16x16xbf16>, vector<16x128xbf16>, vector<16x128xf32> -> vector<16x128xf32>
    %221 = arith.truncf %220 : vector<16x128xf32> to vector<16x128xbf16>
    %222 = vector.extract_strided_slice %5 {offsets = [256, 0], sizes = [128, 384], strides = [1, 1]} : vector<384x384xbf16> to vector<128x384xbf16>
    %cst_48 = arith.constant dense<0.000000e+00> : vector<16x384xf32>
    %223 = tpu.matmul %221, %222, %cst_48 {dimension_numbers = #tpu.dot_dimension_numbers<[1], [0], [0], [1], [0, 0, 1, 1], [], []>} : vector<16x128xbf16>, vector<128x384xbf16>, vector<16x384xf32> -> vector<16x384xf32>
    %224 = arith.addf %188, %223 : vector<16x384xf32>
    %c16 = arith.constant 16 : index
    %c0_49 = arith.constant 0 : index
    %225 = vector.load %arg6[%c16, %c0_49] : memref<32x384xf32, #tpu.memory_space<vmem>>, vector<16x384xf32>
    tpu.vector_store %arg6[%c16, %c0_49], %224 {strides = array<i32>} : memref<32x384xf32, #tpu.memory_space<vmem>>, vector<16x384xf32>,
    return
  }
  func.func @transform_0(%arg0: i32) -> (i32, i32) {
    %c0_i32 = arith.constant 0 : i32
    %c0_i32_0 = arith.constant 0 : i32
    %c0_i32_1 = arith.constant 0 : i32
    return %c0_i32, %c0_i32_0 : i32, i32
  }
  func.func @transform_1(%arg0: i32) -> (i32, i32) {
    %c0_i32 = arith.constant 0 : i32
    %c0_i32_0 = arith.constant 0 : i32
    %c0_i32_1 = arith.constant 0 : i32
    return %c0_i32, %c0_i32_0 : i32, i32
  }
  func.func @transform_2(%arg0: i32) -> (i32, i32) {
    %c0_i32 = arith.constant 0 : i32
    %c0_i32_0 = arith.constant 0 : i32
    %c0_i32_1 = arith.constant 0 : i32
    return %c0_i32, %c0_i32_0 : i32, i32
  }
  func.func @transform_3(%arg0: i32) -> (i32, i32) {
    %c0_i32 = arith.constant 0 : i32
    %c0_i32_0 = arith.constant 0 : i32
    %c0_i32_1 = arith.constant 0 : i32
    return %c0_i32, %c0_i32_0 : i32, i32
  }
  func.func @transform_4(%arg0: i32) -> (i32, i32) {
    %c0_i32 = arith.constant 0 : i32
    %c0_i32_0 = arith.constant 0 : i32
    %c0_i32_1 = arith.constant 0 : i32
    return %c0_i32, %c0_i32_0 : i32, i32
  }
  func.func @transform_5(%arg0: i32) -> (i32, i32) {
    %c0_i32 = arith.constant 0 : i32
    %c0_i32_0 = arith.constant 0 : i32
    %c0_i32_1 = arith.constant 0 : i32
    return %c0_i32, %c0_i32_0 : i32, i32
  }
}

</mosaic_0001>

<llo_original>
// kernel: smollm2_attention_pallas.1
$region0: #{smollm2_attention_pallas.1}
  #allocation0 [shape = 'u32[]', space=smem, size = 0x4, offset = 0x4, fixed_abs, tag = 'smem constant byte address 0x4 - core index']
  #allocation1 [shape = 'u32[72,128]{1,0:T(1,128)}', space=vmem, size = 0x9000, scoped, tag = 'internal scratch']
  %s0 = inlined_call_operand.vmem [shape: bf16[32,384], index: 0, kind: input, shape index: {}]
  %s1 = inlined_call_operand.hbm [shape: bf16[384,1152], index: 1, kind: input, shape index: {}]
  %s2 = inlined_call_operand.hbm [shape: bf16[384,384], index: 2, kind: input, shape index: {}]
  %s3 = inlined_call_operand.vmem [shape: f32[16,128], index: 3, kind: input, shape index: {}]
  %s4 = inlined_call_operand.vmem [shape: f32[16,128], index: 4, kind: input, shape index: {}]
  %s5 = inlined_call_operand.hbm [shape: f32[32,384], index: 5, kind: output, shape index: {}]
  %s6 = sld [smem:[#allocation0]]
  $region38: #{smollm2_attention_pallas.1} parent=0
    _
  %s8 = ssub.s32 1, %s6
  %s9 = scalar_select 0, %s8, %s6
  $region1: #{smollm2_attention_pallas.1} parent=0
    #allocation2 [shape = 'u8[884736]{0}', space=vmem, size = 0xd8000, scoped, tag = 'input window, operand 1, single buffered']
    #allocation3 [shape = 's32[1]{0}', space=sflag, size = 0x4, scoped, tag = 'scoped memory for smollm2_attention_pallas.1']
    #allocation4 [shape = 's32[1]{0}', space=sflag, size = 0x4, scoped, tag = 'scoped memory for smollm2_attention_pallas.1']
    #allocation5 [shape = 'u8[294912]{0}', space=vmem, size = 0x48000, scoped, tag = 'input window, operand 2, single buffered']
    #allocation6 [shape = 's32[1]{0}', space=sflag, size = 0x4, scoped, tag = 'scoped memory for smollm2_attention_pallas.1']
    #allocation7 [shape = 'u8[49152]{0}', space=vmem, size = 0xc000, scoped, tag = 'output window, operand 0, single buffered']
    %10 = vsyncpa [#allocation3], 0
    %11 = vsyncpa [#allocation6], 0
    %12 = vsyncpa [#allocation4], 0
    // Predicated region
    $region2: #{smollm2_attention_pallas.1} parent=1 // pred_check
      _
    $region3: #{smollm2_attention_pallas.1} parent=1 // pred_check_branch
      %14 = sbr.rel (0) target = $region5
    $region4: #{smollm2_attention_pallas.1} parent=1 // pred_region
      _
    $region5: #{smollm2_attention_pallas.1} parent=1 // pred_fallthru
      _
    // Predicated region
    $region6: #{smollm2_attention_pallas.1} parent=1 // pred_check
      _
    $region7: #{smollm2_attention_pallas.1} parent=1 // pred_check_branch
      %16 = sbr.rel (0) target = $region9
    $region8: #{smollm2_attention_pallas.1} parent=1 // pred_region
      %18 = vsyncadd [#allocation3], 0
      %s19 = sshll.u32 %s1, 4
      %s20 = int_to_ptr.hbm [resolvable:$true] %s19
      %s21 = sshll.u32 [#allocation2], 4
      %s22 = int_to_ptr.vmem [resolvable:$true] %s21
      %27 = dma.hbm_to_vmem [thread:$0]  %s20, 27648, %s22, [#allocation3], 576, 576, 36
    $region9: #{smollm2_attention_pallas.1} parent=1 // pred_fallthru
      _
    // Predicated region
    $region10: #{smollm2_attention_pallas.1} parent=1 // pred_check
      _
    $region11: #{smollm2_attention_pallas.1} parent=1 // pred_check_branch
      %29 = sbr.rel (0) target = $region13
    $region12: #{smollm2_attention_pallas.1} parent=1 // pred_region
      %31 = vsyncadd [#allocation6], 0
      %s32 = sshll.u32 %s2, 4
      %s33 = int_to_ptr.hbm [resolvable:$true] %s32
      %s34 = sshll.u32 [#allocation5], 4
      %s35 = int_to_ptr.vmem [resolvable:$true] %s34
      %40 = dma.hbm_to_vmem [thread:$0]  %s33, 9216, %s35, [#allocation6], 192, 192, 12
    $region13: #{smollm2_attention_pallas.1} parent=1 // pred_fallthru
      _
    // Predicated region
    $region14: #{smollm2_attention_pallas.1} parent=1 // pred_check
      _
    $region15: #{smollm2_attention_pallas.1} parent=1 // pred_check_branch
      %42 = sbr.rel (0) target = $region17
    $region16: #{smollm2_attention_pallas.1} parent=1 // pred_region
      _
    $region17: #{smollm2_attention_pallas.1} parent=1 // pred_fallthru
      _
    // Predicated region
    $region18: #{smollm2_attention_pallas.1} parent=1 // pred_check
      _
    $region19: #{smollm2_attention_pallas.1} parent=1 // pred_check_branch
      %44 = sbr.rel (0) target = $region21
    $region20: #{smollm2_attention_pallas.1} parent=1 // pred_region
      _
    $region21: #{smollm2_attention_pallas.1} parent=1 // pred_fallthru
      _
    // Predicated region
    $region22: #{smollm2_attention_pallas.1} parent=1 // pred_check
      _
    $region23: #{smollm2_attention_pallas.1} parent=1 // pred_check_branch
      %46 = sbr.rel (0) target = $region25
    $region24: #{smollm2_attention_pallas.1} parent=1 // pred_region
      %48 = dma.done [#allocation3], 27648
    $region25: #{smollm2_attention_pallas.1} parent=1 // pred_fallthru
      _
    // Predicated region
    $region26: #{smollm2_attention_pallas.1} parent=1 // pred_check
      _
    $region27: #{smollm2_attention_pallas.1} parent=1 // pred_check_branch
      %50 = sbr.rel (0) target = $region29
    $region28: #{smollm2_attention_pallas.1} parent=1 // pred_region
      %52 = dma.done [#allocation6], 9216
    $region29: #{smollm2_attention_pallas.1} parent=1 // pred_fallthru
      _
    %v54 = vld [vmem:[%s0] sm:$0xff]
    %v55 = vld [vmem:[%s0 + $0x8] sm:$0xf]
    %v56 = vld [vmem:[%s0 + $0xc] sm:$0xff]
    %v57 = vld [vmem:[%s0 + $0x14] sm:$0xf]
    %v58 = vld [vmem:[%s0 + $0x18] sm:$0xff]
    %v59 = vld [vmem:[%s0 + $0x20] sm:$0xf]
    %v60 = vld [vmem:[%s0 + $0x24] sm:$0xff]
    %v61 = vld [vmem:[%s0 + $0x2c] sm:$0xf]
    %v62 = vld [vmem:[#allocation2] sm:$0xff]
    %v63 = vld [vmem:[#allocation2 + $0x8] sm:$0xff]
    %v64 = vld [vmem:[#allocation2 + $0x10] sm:$0xff]
    %v65 = vld [vmem:[#allocation2 + $0x18] sm:$0xff]
    %v66 = vld [vmem:[#allocation2 + $0x20] sm:$0xf]
    %v67 = vld [vmem:[#allocation2 + $0x24] sm:$0xff]
    %v68 = vld [vmem:[#allocation2 + $0x2c] sm:$0xff]
    %v69 = vld [vmem:[#allocation2 + $0x34] sm:$0xff]
    %v70 = vld [vmem:[#allocation2 + $0x3c] sm:$0xff]
    %v71 = vld [vmem:[#allocation2 + $0x44] sm:$0xf]
    %v72 = vld [vmem:[#allocation2 + $0x48] sm:$0xff]
    %v73 = vld [vmem:[#allocation2 + $0x50] sm:$0xff]
    %v74 = vld [vmem:[#allocation2 + $0x58] sm:$0xff]
    %v75 = vld [vmem:[#allocation2 + $0x60] sm:$0xff]
    %v76 = vld [vmem:[#allocation2 + $0x68] sm:$0xf]
    %v77 = vld [vmem:[#allocation2 + $0x6c] sm:$0xff]
    %v78 = vld [vmem:[#allocation2 + $0x74] sm:$0xff]
    %v79 = vld [vmem:[#allocation2 + $0x7c] sm:$0xff]
    %v80 = vld [vmem:[#allocation2 + $0x84] sm:$0xff]
    %v81 = vld [vmem:[#allocation2 + $0x8c] sm:$0xf]
    %v82 = vld [vmem:[#allocation2 + $0x90] sm:$0xff]
    %v83 = vld [vmem:[#allocation2 + $0x98] sm:$0xff]
    %v84 = vld [vmem:[#allocation2 + $0xa0] sm:$0xff]
    %v85 = vld [vmem:[#allocation2 + $0xa8] sm:$0xff]
    %v86 = vld [vmem:[#allocation2 + $0xb0] sm:$0xf]
    %v87 = vld [vmem:[#allocation2 + $0xb4] sm:$0xff]
    %v88 = vld [vmem:[#allocation2 + $0xbc] sm:$0xff]
    %v89 = vld [vmem:[#allocation2 + $0xc4] sm:$0xff]
    %v90 = vld [vmem:[#allocation2 + $0xcc] sm:$0xff]
    %v91 = vld [vmem:[#allocation2 + $0xd4] sm:$0xf]
    %v92 = vld [vmem:[#allocation2 + $0xd8] sm:$0xff]
    %v93 = vld [vmem:[#allocation2 + $0xe0] sm:$0xff]
    %v94 = vld [vmem:[#allocation2 + $0xe8] sm:$0xff]
    %v95 = vld [vmem:[#allocation2 + $0xf0] sm:$0xff]
    %v96 = vld [vmem:[#allocation2 + $0xf8] sm:$0xf]
    %v97 = vld [vmem:[#allocation2 + $0xfc] sm:$0xff]
    %v98 = vld [vmem:[#allocation2 + $0x104] sm:$0xff]
    %v99 = vld [vmem:[#allocation2 + $0x10c] sm:$0xff]
    %v100 = vld [vmem:[#allocation2 + $0x114] sm:$0xff]
    %v101 = vld [vmem:[#allocation2 + $0x11c] sm:$0xf]
    %v102 = vld [vmem:[#allocation2 + $0x120] sm:$0xff]
    %v103 = vld [vmem:[#allocation2 + $0x128] sm:$0xff]
    %v104 = vld [vmem:[#allocation2 + $0x130] sm:$0xff]
    %v105 = vld [vmem:[#allocation2 + $0x138] sm:$0xff]
    %v106 = vld [vmem:[#allocation2 + $0x140] sm:$0xf]
    %v107 = vld [vmem:[#allocation2 + $0x144] sm:$0xff]
    %v108 = vld [vmem:[#allocation2 + $0x14c] sm:$0xff]
    %v109 = vld [vmem:[#allocation2 + $0x154] sm:$0xff]
    %v110 = vld [vmem:[#allocation2 + $0x15c] sm:$0xff]
    %v111 = vld [vmem:[#allocation2 + $0x164] sm:$0xf]
    %v112 = vld [vmem:[#allocation2 + $0x168] sm:$0xff]
    %v113 = vld [vmem:[#allocation2 + $0x170] sm:$0xff]
    %v114 = vld [vmem:[#allocation2 + $0x178] sm:$0xff]
    %v115 = vld [vmem:[#allocation2 + $0x180] sm:$0xff]
    %v116 = vld [vmem:[#allocation2 + $0x188] sm:$0xf]
    %v117 = vld [vmem:[#allocation2 + $0x18c] sm:$0xff]
    %v118 = vld [vmem:[#allocation2 + $0x194] sm:$0xff]
    %v119 = vld [vmem:[#allocation2 + $0x19c] sm:$0xff]
    %v120 = vld [vmem:[#allocation2 + $0x1a4] sm:$0xff]
    %v121 = vld [vmem:[#allocation2 + $0x1ac] sm:$0xf]
    %v122 = vld [vmem:[#allocation2 + $0x1b0] sm:$0xff]
    %v123 = vld [vmem:[#allocation2 + $0x1b8] sm:$0xff]
    %v124 = vld [vmem:[#allocation2 + $0x1c0] sm:$0xff]
    %v125 = vld [vmem:[#allocation2 + $0x1c8] sm:$0xff]
    %v126 = vld [vmem:[#allocation2 + $0x1d0] sm:$0xf]
    %v127 = vld [vmem:[#allocation2 + $0x1d4] sm:$0xff]
    %v128 = vld [vmem:[#allocation2 + $0x1dc] sm:$0xff]
    %v129 = vld [vmem:[#allocation2 + $0x1e4] sm:$0xff]
    %v130 = vld [vmem:[#allocation2 + $0x1ec] sm:$0xff]
    %v131 = vld [vmem:[#allocation2 + $0x1f4] sm:$0xf]
    %v132 = vld [vmem:[#allocation2 + $0x1f8] sm:$0xff]
    %v133 = vld [vmem:[#allocation2 + $0x200] sm:$0xff]
    %v134 = vld [vmem:[#allocation2 + $0x208] sm:$0xff]
    %v135 = vld [vmem:[#allocation2 + $0x210] sm:$0xff]
    %v136 = vld [vmem:[#allocation2 + $0x218] sm:$0xf]
    %v137 = vld [vmem:[#allocation2 + $0x21c] sm:$0xff]
    %v138 = vld [vmem:[#allocation2 + $0x224] sm:$0xff]
    %v139 = vld [vmem:[#allocation2 + $0x22c] sm:$0xff]
    %v140 = vld [vmem:[#allocation2 + $0x234] sm:$0xff]
    %v141 = vld [vmem:[#allocation2 + $0x23c] sm:$0xf]
    %v142 = vld [vmem:[#allocation2 + $0x240] sm:$0xff]
    %v143 = vld [vmem:[#allocation2 + $0x248] sm:$0xff]
    %v144 = vld [vmem:[#allocation2 + $0x250] sm:$0xff]
    %v145 = vld [vmem:[#allocation2 + $0x258] sm:$0xff]
    %v146 = vld [vmem:[#allocation2 + $0x260] sm:$0xf]
    %v147 = vld [vmem:[#allocation2 + $0x264] sm:$0xff]
    %v148 = vld [vmem:[#allocation2 + $0x26c] sm:$0xff]
    %v149 = vld [vmem:[#allocation2 + $0x274] sm:$0xff]
    %v150 = vld [vmem:[#allocation2 + $0x27c] sm:$0xff]
    %v151 = vld [vmem:[#allocation2 + $0x284] sm:$0xf]
    %v152 = vld [vmem:[#allocation2 + $0x288] sm:$0xff]
    %v153 = vld [vmem:[#allocation2 + $0x290] sm:$0xff]
    %v154 = vld [vmem:[#allocation2 + $0x298] sm:$0xff]
    %v155 = vld [vmem:[#allocation2 + $0x2a0] sm:$0xff]
    %v156 = vld [vmem:[#allocation2 + $0x2a8] sm:$0xf]
    %v157 = vld [vmem:[#allocation2 + $0x2ac] sm:$0xff]
    %v158 = vld [vmem:[#allocation2 + $0x2b4] sm:$0xff]
    %v159 = vld [vmem:[#allocation2 + $0x2bc] sm:$0xff]
    %v160 = vld [vmem:[#allocation2 + $0x2c4] sm:$0xff]
    %v161 = vld [vmem:[#allocation2 + $0x2cc] sm:$0xf]
    %v162 = vld [vmem:[#allocation2 + $0x2d0] sm:$0xff]
    %v163 = vld [vmem:[#allocation2 + $0x2d8] sm:$0xff]
    %v164 = vld [vmem:[#allocation2 + $0x2e0] sm:$0xff]
    %v165 = vld [vmem:[#allocation2 + $0x2e8] sm:$0xff]
    %v166 = vld [vmem:[#allocation2 + $0x2f0] sm:$0xf]
    %v167 = vld [vmem:[#allocation2 + $0x2f4] sm:$0xff]
    %v168 = vld [vmem:[#allocation2 + $0x2fc] sm:$0xff]
    %v169 = vld [vmem:[#allocation2 + $0x304] sm:$0xff]
    %v170 = vld [vmem:[#allocation2 + $0x30c] sm:$0xff]
    %v171 = vld [vmem:[#allocation2 + $0x314] sm:$0xf]
    %v172 = vld [vmem:[#allocation2 + $0x318] sm:$0xff]
    %v173 = vld [vmem:[#allocation2 + $0x320] sm:$0xff]
    %v174 = vld [vmem:[#allocation2 + $0x328] sm:$0xff]
    %v175 = vld [vmem:[#allocation2 + $0x330] sm:$0xff]
    %v176 = vld [vmem:[#allocation2 + $0x338] sm:$0xf]
    %v177 = vld [vmem:[#allocation2 + $0x33c] sm:$0xff]
    %v178 = vld [vmem:[#allocation2 + $0x344] sm:$0xff]
    %v179 = vld [vmem:[#allocation2 + $0x34c] sm:$0xff]
    %v180 = vld [vmem:[#allocation2 + $0x354] sm:$0xff]
    %v181 = vld [vmem:[#allocation2 + $0x35c] sm:$0xf]
    %v182 = vld [vmem:[#allocation2 + $0x360] sm:$0xff]
    %v183 = vld [vmem:[#allocation2 + $0x368] sm:$0xff]
    %v184 = vld [vmem:[#allocation2 + $0x370] sm:$0xff]
    %v185 = vld [vmem:[#allocation2 + $0x378] sm:$0xff]
    %v186 = vld [vmem:[#allocation2 + $0x380] sm:$0xf]
    %v187 = vld [vmem:[#allocation2 + $0x384] sm:$0xff]
    %v188 = vld [vmem:[#allocation2 + $0x38c] sm:$0xff]
    %v189 = vld [vmem:[#allocation2 + $0x394] sm:$0xff]
    %v190 = vld [vmem:[#allocation2 + $0x39c] sm:$0xff]
    %v191 = vld [vmem:[#allocation2 + $0x3a4] sm:$0xf]
    %v192 = vld [vmem:[#allocation2 + $0x3a8] sm:$0xff]
    %v193 = vld [vmem:[#allocation2 + $0x3b0] sm:$0xff]
    %v194 = vld [vmem:[#allocation2 + $0x3b8] sm:$0xff]
    %v195 = vld [vmem:[#allocation2 + $0x3c0] sm:$0xff]
    %v196 = vld [vmem:[#allocation2 + $0x3c8] sm:$0xf]
    %v197 = vld [vmem:[#allocation2 + $0x3cc] sm:$0xff]
    %v198 = vld [vmem:[#allocation2 + $0x3d4] sm:$0xff]
    %v199 = vld [vmem:[#allocation2 + $0x3dc] sm:$0xff]
    %v200 = vld [vmem:[#allocation2 + $0x3e4] sm:$0xff]
    %v201 = vld [vmem:[#allocation2 + $0x3ec] sm:$0xf]
    %v202 = vld [vmem:[#allocation2 + $0x3f0] sm:$0xff]
    %v203 = vld [vmem:[#allocation2 + $0x3f8] sm:$0xff]
    %v204 = vld [vmem:[#allocation2 + $0x400] sm:$0xff]
    %v205 = vld [vmem:[#allocation2 + $0x408] sm:$0xff]
    %v206 = vld [vmem:[#allocation2 + $0x410] sm:$0xf]
    %v207 = vld [vmem:[#allocation2 + $0x414] sm:$0xff]
    %v208 = vld [vmem:[#allocation2 + $0x41c] sm:$0xff]
    %v209 = vld [vmem:[#allocation2 + $0x424] sm:$0xff]
    %v210 = vld [vmem:[#allocation2 + $0x42c] sm:$0xff]
    %v211 = vld [vmem:[#allocation2 + $0x434] sm:$0xf]
    %v212 = vld [vmem:[#allocation2 + $0x438] sm:$0xff]
    %v213 = vld [vmem:[#allocation2 + $0x440] sm:$0xff]
    %v214 = vld [vmem:[#allocation2 + $0x448] sm:$0xff]
    %v215 = vld [vmem:[#allocation2 + $0x450] sm:$0xff]
    %v216 = vld [vmem:[#allocation2 + $0x458] sm:$0xf]
    %v217 = vld [vmem:[#allocation2 + $0x45c] sm:$0xff]
    %v218 = vld [vmem:[#allocation2 + $0x464] sm:$0xff]
    %v219 = vld [vmem:[#allocation2 + $0x46c] sm:$0xff]
    %v220 = vld [vmem:[#allocation2 + $0x474] sm:$0xff]
    %v221 = vld [vmem:[#allocation2 + $0x47c] sm:$0xf]
    %v222 = vld [vmem:[#allocation2 + $0x480] sm:$0xff]
    %v223 = vld [vmem:[#allocation2 + $0x488] sm:$0xff]
    %v224 = vld [vmem:[#allocation2 + $0x490] sm:$0xff]
    %v225 = vld [vmem:[#allocation2 + $0x498] sm:$0xff]
    %v226 = vld [vmem:[#allocation2 + $0x4a0] sm:$0xf]
    %v227 = vld [vmem:[#allocation2 + $0x4a4] sm:$0xff]
    %v228 = vld [vmem:[#allocation2 + $0x4ac] sm:$0xff]
    %v229 = vld [vmem:[#allocation2 + $0x4b4] sm:$0xff]
    %v230 = vld [vmem:[#allocation2 + $0x4bc] sm:$0xff]
    %v231 = vld [vmem:[#allocation2 + $0x4c4] sm:$0xf]
    %v232 = vld [vmem:[#allocation2 + $0x4c8] sm:$0xff]
    %v233 = vld [vmem:[#allocation2 + $0x4d0] sm:$0xff]
    %v234 = vld [vmem:[#allocation2 + $0x4d8] sm:$0xff]
    %v235 = vld [vmem:[#allocation2 + $0x4e0] sm:$0xff]
    %v236 = vld [vmem:[#allocation2 + $0x4e8] sm:$0xf]
    %v237 = vld [vmem:[#allocation2 + $0x4ec] sm:$0xff]
    %v238 = vld [vmem:[#allocation2 + $0x4f4] sm:$0xff]
    %v239 = vld [vmem:[#allocation2 + $0x4fc] sm:$0xff]
    %v240 = vld [vmem:[#allocation2 + $0x504] sm:$0xff]
    %v241 = vld [vmem:[#allocation2 + $0x50c] sm:$0xf]
    %v242 = vld [vmem:[#allocation2 + $0x510] sm:$0xff]
    %v243 = vld [vmem:[#allocation2 + $0x518] sm:$0xff]
    %v244 = vld [vmem:[#allocation2 + $0x520] sm:$0xff]
    %v245 = vld [vmem:[#allocation2 + $0x528] sm:$0xff]
    %v246 = vld [vmem:[#allocation2 + $0x530] sm:$0xf]
    %v247 = vld [vmem:[#allocation2 + $0x534] sm:$0xff]
    %v248 = vld [vmem:[#allocation2 + $0x53c] sm:$0xff]
    %v249 = vld [vmem:[#allocation2 + $0x544] sm:$0xff]
    %v250 = vld [vmem:[#allocation2 + $0x54c] sm:$0xff]
    %v251 = vld [vmem:[#allocation2 + $0x554] sm:$0xf]
    %v252 = vld [vmem:[#allocation2 + $0x558] sm:$0xff]
    %v253 = vld [vmem:[#allocation2 + $0x560] sm:$0xff]
    %v254 = vld [vmem:[#allocation2 + $0x568] sm:$0xff]
    %v255 = vld [vmem:[#allocation2 + $0x570] sm:$0xff]
    %v256 = vld [vmem:[#allocation2 + $0x578] sm:$0xf]
    %v257 = vld [vmem:[#allocation2 + $0x57c] sm:$0xff]
    %v258 = vld [vmem:[#allocation2 + $0x584] sm:$0xff]
    %v259 = vld [vmem:[#allocation2 + $0x58c] sm:$0xff]
    %v260 = vld [vmem:[#allocation2 + $0x594] sm:$0xff]
    %v261 = vld [vmem:[#allocation2 + $0x59c] sm:$0xf]
    %v262 = vld [vmem:[#allocation2 + $0x5a0] sm:$0xff]
    %v263 = vld [vmem:[#allocation2 + $0x5a8] sm:$0xff]
    %v264 = vld [vmem:[#allocation2 + $0x5b0] sm:$0xff]
    %v265 = vld [vmem:[#allocation2 + $0x5b8] sm:$0xff]
    %v266 = vld [vmem:[#allocation2 + $0x5c0] sm:$0xf]
    %v267 = vld [vmem:[#allocation2 + $0x5c4] sm:$0xff]
    %v268 = vld [vmem:[#allocation2 + $0x5cc] sm:$0xff]
    %v269 = vld [vmem:[#allocation2 + $0x5d4] sm:$0xff]
    %v270 = vld [vmem:[#allocation2 + $0x5dc] sm:$0xff]
    %v271 = vld [vmem:[#allocation2 + $0x5e4] sm:$0xf]
    %v272 = vld [vmem:[#allocation2 + $0x5e8] sm:$0xff]
    %v273 = vld [vmem:[#allocation2 + $0x5f0] sm:$0xff]
    %v274 = vld [vmem:[#allocation2 + $0x5f8] sm:$0xff]
    %v275 = vld [vmem:[#allocation2 + $0x600] sm:$0xff]
    %v276 = vld [vmem:[#allocation2 + $0x608] sm:$0xf]
    %v277 = vld [vmem:[#allocation2 + $0x60c] sm:$0xff]
    %v278 = vld [vmem:[#allocation2 + $0x614] sm:$0xff]
    %v279 = vld [vmem:[#allocation2 + $0x61c] sm:$0xff]
    %v280 = vld [vmem:[#allocation2 + $0x624] sm:$0xff]
    %v281 = vld [vmem:[#allocation2 + $0x62c] sm:$0xf]
    %v282 = vld [vmem:[#allocation2 + $0x630] sm:$0xff]
    %v283 = vld [vmem:[#allocation2 + $0x638] sm:$0xff]
    %v284 = vld [vmem:[#allocation2 + $0x640] sm:$0xff]
    %v285 = vld [vmem:[#allocation2 + $0x648] sm:$0xff]
    %v286 = vld [vmem:[#allocation2 + $0x650] sm:$0xf]
    %v287 = vld [vmem:[#allocation2 + $0x654] sm:$0xff]
    %v288 = vld [vmem:[#allocation2 + $0x65c] sm:$0xff]
    %v289 = vld [vmem:[#allocation2 + $0x664] sm:$0xff]
    %v290 = vld [vmem:[#allocation2 + $0x66c] sm:$0xff]
    %v291 = vld [vmem:[#allocation2 + $0x674] sm:$0xf]
    %v292 = vld [vmem:[#allocation2 + $0x678] sm:$0xff]
    %v293 = vld [vmem:[#allocation2 + $0x680] sm:$0xff]
    %v294 = vld [vmem:[#allocation2 + $0x688] sm:$0xff]
    %v295 = vld [vmem:[#allocation2 + $0x690] sm:$0xff]
    %v296 = vld [vmem:[#allocation2 + $0x698] sm:$0xf]
    %v297 = vld [vmem:[#allocation2 + $0x69c] sm:$0xff]
    %v298 = vld [vmem:[#allocation2 + $0x6a4] sm:$0xff]
    %v299 = vld [vmem:[#allocation2 + $0x6ac] sm:$0xff]
    %v300 = vld [vmem:[#allocation2 + $0x6b4] sm:$0xff]
    %v301 = vld [vmem:[#allocation2 + $0x6bc] sm:$0xf]
    %v310 = vunpack.c.l.b16 %v54
    %v311 = vunpack.c.h.b16 %v54
    %v312 = vunpack.c.l.b16 %v55
    %v313 = vunpack.c.l.b16 %v56
    %v314 = vunpack.c.h.b16 %v56
    %v315 = vunpack.c.l.b16 %v57
    %v316 = vunpack.c.l.b16 %v58
    %v317 = vunpack.c.h.b16 %v58
    %v318 = vunpack.c.l.b16 %v59
    %v319 = vunpack.c.l.b16 %v60
    %v320 = vunpack.c.h.b16 %v60
    %v321 = vunpack.c.l.b16 %v61
    %v322 = vpack.c.b16 %v313, %v310
    %v323 = vpack.c.b16 %v314, %v311
    %v324 = vpack.c.b16 %v315, %v312
    %v325 = vpack.c.b16 %v319, %v316
    %v326 = vpack.c.b16 %v320, %v317
    %v327 = vpack.c.b16 %v321, %v318
    %v574 = vunpack.c.l.b16 %v62
    %v575 = vunpack.c.h.b16 %v62
    %v576 = vunpack.c.l.b16 %v63
    %v577 = vunpack.c.h.b16 %v63
    %v578 = vunpack.c.l.b16 %v64
    %v579 = vunpack.c.h.b16 %v64
    %v580 = vunpack.c.l.b16 %v65
    %v581 = vunpack.c.h.b16 %v65
    %v582 = vunpack.c.l.b16 %v66
    %v583 = vunpack.c.l.b16 %v67
    %v584 = vunpack.c.h.b16 %v67
    %v585 = vunpack.c.l.b16 %v68
    %v586 = vunpack.c.h.b16 %v68
    %v587 = vunpack.c.l.b16 %v69
    %v588 = vunpack.c.h.b16 %v69
    %v589 = vunpack.c.l.b16 %v70
    %v590 = vunpack.c.h.b16 %v70
    %v591 = vunpack.c.l.b16 %v71
    %v592 = vunpack.c.l.b16 %v72
    %v593 = vunpack.c.h.b16 %v72
    %v594 = vunpack.c.l.b16 %v73
    %v595 = vunpack.c.h.b16 %v73
    %v596 = vunpack.c.l.b16 %v74
    %v597 = vunpack.c.h.b16 %v74
    %v598 = vunpack.c.l.b16 %v75
    %v599 = vunpack.c.h.b16 %v75
    %v600 = vunpack.c.l.b16 %v76
    %v601 = vunpack.c.l.b16 %v77
    %v602 = vunpack.c.h.b16 %v77
    %v603 = vunpack.c.l.b16 %v78
    %v604 = vunpack.c.h.b16 %v78
    %v605 = vunpack.c.l.b16 %v79
    %v606 = vunpack.c.h.b16 %v79
    %v607 = vunpack.c.l.b16 %v80
    %v608 = vunpack.c.h.b16 %v80
    %v609 = vunpack.c.l.b16 %v81
    %v610 = vunpack.c.l.b16 %v82
    %v611 = vunpack.c.h.b16 %v82
    %v612 = vunpack.c.l.b16 %v83
    %v613 = vunpack.c.h.b16 %v83
    %v614 = vunpack.c.l.b16 %v84
    %v615 = vunpack.c.h.b16 %v84
    %v616 = vunpack.c.l.b16 %v85
    %v617 = vunpack.c.h.b16 %v85
    %v618 = vunpack.c.l.b16 %v86
    %v619 = vunpack.c.l.b16 %v87
    %v620 = vunpack.c.h.b16 %v87
    %v621 = vunpack.c.l.b16 %v88
    %v622 = vunpack.c.h.b16 %v88
    %v623 = vunpack.c.l.b16 %v89
    %v624 = vunpack.c.h.b16 %v89
    %v625 = vunpack.c.l.b16 %v90
    %v626 = vunpack.c.h.b16 %v90
    %v627 = vunpack.c.l.b16 %v91
    %v628 = vunpack.c.l.b16 %v92
    %v629 = vunpack.c.h.b16 %v92
    %v630 = vunpack.c.l.b16 %v93
    %v631 = vunpack.c.h.b16 %v93
    %v632 = vunpack.c.l.b16 %v94
    %v633 = vunpack.c.h.b16 %v94
    %v634 = vunpack.c.l.b16 %v95
    %v635 = vunpack.c.h.b16 %v95
    %v636 = vunpack.c.l.b16 %v96
    %v637 = vunpack.c.l.b16 %v97
    %v638 = vunpack.c.h.b16 %v97
    %v639 = vunpack.c.l.b16 %v98
    %v640 = vunpack.c.h.b16 %v98
    %v641 = vunpack.c.l.b16 %v99
    %v642 = vunpack.c.h.b16 %v99
    %v643 = vunpack.c.l.b16 %v100
    %v644 = vunpack.c.h.b16 %v100
    %v645 = vunpack.c.l.b16 %v101
    %v646 = vunpack.c.l.b16 %v102
    %v647 = vunpack.c.h.b16 %v102
    %v648 = vunpack.c.l.b16 %v103
    %v649 = vunpack.c.h.b16 %v103
    %v650 = vunpack.c.l.b16 %v104
    %v651 = vunpack.c.h.b16 %v104
    %v652 = vunpack.c.l.b16 %v105
    %v653 = vunpack.c.h.b16 %v105
    %v654 = vunpack.c.l.b16 %v106
    %v655 = vunpack.c.l.b16 %v107
    %v656 = vunpack.c.h.b16 %v107
    %v657 = vunpack.c.l.b16 %v108
    %v658 = vunpack.c.h.b16 %v108
    %v659 = vunpack.c.l.b16 %v109
    %v660 = vunpack.c.h.b16 %v109
    %v661 = vunpack.c.l.b16 %v110
    %v662 = vunpack.c.h.b16 %v110
    %v663 = vunpack.c.l.b16 %v111
    %v664 = vunpack.c.l.b16 %v112
    %v665 = vunpack.c.h.b16 %v112
    %v666 = vunpack.c.l.b16 %v113
    %v667 = vunpack.c.h.b16 %v113
    %v668 = vunpack.c.l.b16 %v114
    %v669 = vunpack.c.h.b16 %v114
    %v670 = vunpack.c.l.b16 %v115
    %v671 = vunpack.c.h.b16 %v115
    %v672 = vunpack.c.l.b16 %v116
    %v673 = vunpack.c.l.b16 %v117
    %v674 = vunpack.c.h.b16 %v117
    %v675 = vunpack.c.l.b16 %v118
    %v676 = vunpack.c.h.b16 %v118
    %v677 = vunpack.c.l.b16 %v119
    %v678 = vunpack.c.h.b16 %v119
    %v679 = vunpack.c.l.b16 %v120
    %v680 = vunpack.c.h.b16 %v120
    %v681 = vunpack.c.l.b16 %v121
    %v682 = vunpack.c.l.b16 %v122
    %v683 = vunpack.c.h.b16 %v122
    %v684 = vunpack.c.l.b16 %v123
    %v685 = vunpack.c.h.b16 %v123
    %v686 = vunpack.c.l.b16 %v124
    %v687 = vunpack.c.h.b16 %v124
    %v688 = vunpack.c.l.b16 %v125
    %v689 = vunpack.c.h.b16 %v125
    %v690 = vunpack.c.l.b16 %v126
    %v691 = vunpack.c.l.b16 %v127
    %v692 = vunpack.c.h.b16 %v127
    %v693 = vunpack.c.l.b16 %v128
    %v694 = vunpack.c.h.b16 %v128
    %v695 = vunpack.c.l.b16 %v129
    %v696 = vunpack.c.h.b16 %v129
    %v697 = vunpack.c.l.b16 %v130
    %v698 = vunpack.c.h.b16 %v130
    %v699 = vunpack.c.l.b16 %v131
    %v700 = vunpack.c.l.b16 %v132
    %v701 = vunpack.c.h.b16 %v132
    %v702 = vunpack.c.l.b16 %v133
    %v703 = vunpack.c.h.b16 %v133
    %v704 = vunpack.c.l.b16 %v134
    %v705 = vunpack.c.h.b16 %v134
    %v706 = vunpack.c.l.b16 %v135
    %v707 = vunpack.c.h.b16 %v135
    %v708 = vunpack.c.l.b16 %v136
    %v709 = vunpack.c.l.b16 %v137
    %v710 = vunpack.c.h.b16 %v137
    %v711 = vunpack.c.l.b16 %v138
    %v712 = vunpack.c.h.b16 %v138
    %v713 = vunpack.c.l.b16 %v139
    %v714 = vunpack.c.h.b16 %v139
    %v715 = vunpack.c.l.b16 %v140
    %v716 = vunpack.c.h.b16 %v140
    %v717 = vunpack.c.l.b16 %v141
    %v718 = vunpack.c.l.b16 %v142
    %v719 = vunpack.c.h.b16 %v142
    %v720 = vunpack.c.l.b16 %v143
    %v721 = vunpack.c.h.b16 %v143
    %v722 = vunpack.c.l.b16 %v144
    %v723 = vunpack.c.h.b16 %v144
    %v724 = vunpack.c.l.b16 %v145
    %v725 = vunpack.c.h.b16 %v145
    %v726 = vunpack.c.l.b16 %v146
    %v727 = vunpack.c.l.b16 %v147
    %v728 = vunpack.c.h.b16 %v147
    %v729 = vunpack.c.l.b16 %v148
    %v730 = vunpack.c.h.b16 %v148
    %v731 = vunpack.c.l.b16 %v149
    %v732 = vunpack.c.h.b16 %v149
    %v733 = vunpack.c.l.b16 %v150
    %v734 = vunpack.c.h.b16 %v150
    %v735 = vunpack.c.l.b16 %v151
    %v736 = vunpack.c.l.b16 %v152
    %v737 = vunpack.c.h.b16 %v152
    %v738 = vunpack.c.l.b16 %v153
    %v739 = vunpack.c.h.b16 %v153
    %v740 = vunpack.c.l.b16 %v154
    %v741 = vunpack.c.h.b16 %v154
    %v742 = vunpack.c.l.b16 %v155
    %v743 = vunpack.c.h.b16 %v155
    %v744 = vunpack.c.l.b16 %v156
    %v745 = vunpack.c.l.b16 %v157
    %v746 = vunpack.c.h.b16 %v157
    %v747 = vunpack.c.l.b16 %v158
    %v748 = vunpack.c.h.b16 %v158
    %v749 = vunpack.c.l.b16 %v159
    %v750 = vunpack.c.h.b16 %v159
    %v751 = vunpack.c.l.b16 %v160
    %v752 = vunpack.c.h.b16 %v160
    %v753 = vunpack.c.l.b16 %v161
    %v754 = vunpack.c.l.b16 %v162
    %v755 = vunpack.c.h.b16 %v162
    %v756 = vunpack.c.l.b16 %v163
    %v757 = vunpack.c.h.b16 %v163
    %v758 = vunpack.c.l.b16 %v164
    %v759 = vunpack.c.h.b16 %v164
    %v760 = vunpack.c.l.b16 %v165
    %v761 = vunpack.c.h.b16 %v165
    %v762 = vunpack.c.l.b16 %v166
    %v763 = vunpack.c.l.b16 %v167
    %v764 = vunpack.c.h.b16 %v167
    %v765 = vunpack.c.l.b16 %v168
    %v766 = vunpack.c.h.b16 %v168
    %v767 = vunpack.c.l.b16 %v169
    %v768 = vunpack.c.h.b16 %v169
    %v769 = vunpack.c.l.b16 %v170
    %v770 = vunpack.c.h.b16 %v170
    %v771 = vunpack.c.l.b16 %v171
    %v772 = vunpack.c.l.b16 %v172
    %v773 = vunpack.c.h.b16 %v172
    %v774 = vunpack.c.l.b16 %v173
    %v775 = vunpack.c.h.b16 %v173
    %v776 = vunpack.c.l.b16 %v174
    %v777 = vunpack.c.h.b16 %v174
    %v778 = vunpack.c.l.b16 %v175
    %v779 = vunpack.c.h.b16 %v175
    %v780 = vunpack.c.l.b16 %v176
    %v781 = vunpack.c.l.b16 %v177
    %v782 = vunpack.c.h.b16 %v177
    %v783 = vunpack.c.l.b16 %v178
    %v784 = vunpack.c.h.b16 %v178
    %v785 = vunpack.c.l.b16 %v179
    %v786 = vunpack.c.h.b16 %v179
    %v787 = vunpack.c.l.b16 %v180
    %v788 = vunpack.c.h.b16 %v180
    %v789 = vunpack.c.l.b16 %v181
    %v790 = vunpack.c.l.b16 %v182
    %v791 = vunpack.c.h.b16 %v182
    %v792 = vunpack.c.l.b16 %v183
    %v793 = vunpack.c.h.b16 %v183
    %v794 = vunpack.c.l.b16 %v184
    %v795 = vunpack.c.h.b16 %v184
    %v796 = vunpack.c.l.b16 %v185
    %v797 = vunpack.c.h.b16 %v185
    %v798 = vunpack.c.l.b16 %v186
    %v799 = vunpack.c.l.b16 %v187
    %v800 = vunpack.c.h.b16 %v187
    %v801 = vunpack.c.l.b16 %v188
    %v802 = vunpack.c.h.b16 %v188
    %v803 = vunpack.c.l.b16 %v189
    %v804 = vunpack.c.h.b16 %v189
    %v805 = vunpack.c.l.b16 %v190
    %v806 = vunpack.c.h.b16 %v190
    %v807 = vunpack.c.l.b16 %v191
    %v808 = vunpack.c.l.b16 %v192
    %v809 = vunpack.c.h.b16 %v192
    %v810 = vunpack.c.l.b16 %v193
    %v811 = vunpack.c.h.b16 %v193
    %v812 = vunpack.c.l.b16 %v194
    %v813 = vunpack.c.h.b16 %v194
    %v814 = vunpack.c.l.b16 %v195
    %v815 = vunpack.c.h.b16 %v195
    %v816 = vunpack.c.l.b16 %v196
    %v817 = vunpack.c.l.b16 %v197
    %v818 = vunpack.c.h.b16 %v197
    %v819 = vunpack.c.l.b16 %v198
    %v820 = vunpack.c.h.b16 %v198
    %v821 = vunpack.c.l.b16 %v199
    %v822 = vunpack.c.h.b16 %v199
    %v823 = vunpack.c.l.b16 %v200
    %v824 = vunpack.c.h.b16 %v200
    %v825 = vunpack.c.l.b16 %v201
    %v826 = vunpack.c.l.b16 %v202
    %v827 = vunpack.c.h.b16 %v202
    %v828 = vunpack.c.l.b16 %v203
    %v829 = vunpack.c.h.b16 %v203
    %v830 = vunpack.c.l.b16 %v204
    %v831 = vunpack.c.h.b16 %v204
    %v832 = vunpack.c.l.b16 %v205
    %v833 = vunpack.c.h.b16 %v205
    %v834 = vunpack.c.l.b16 %v206
    %v835 = vunpack.c.l.b16 %v207
    %v836 = vunpack.c.h.b16 %v207
    %v837 = vunpack.c.l.b16 %v208
    %v838 = vunpack.c.h.b16 %v208
    %v839 = vunpack.c.l.b16 %v209
    %v840 = vunpack.c.h.b16 %v209
    %v841 = vunpack.c.l.b16 %v210
    %v842 = vunpack.c.h.b16 %v210
    %v843 = vunpack.c.l.b16 %v211
    %v844 = vunpack.c.l.b16 %v212
    %v845 = vunpack.c.h.b16 %v212
    %v846 = vunpack.c.l.b16 %v213
    %v847 = vunpack.c.h.b16 %v213
    %v848 = vunpack.c.l.b16 %v214
    %v849 = vunpack.c.h.b16 %v214
    %v850 = vunpack.c.l.b16 %v215
    %v851 = vunpack.c.h.b16 %v215
    %v852 = vunpack.c.l.b16 %v216
    %v853 = vunpack.c.l.b16 %v217
    %v854 = vunpack.c.h.b16 %v217
    %v855 = vunpack.c.l.b16 %v218
    %v856 = vunpack.c.h.b16 %v218
    %v857 = vunpack.c.l.b16 %v219
    %v858 = vunpack.c.h.b16 %v219
    %v859 = vunpack.c.l.b16 %v220
    %v860 = vunpack.c.h.b16 %v220
    %v861 = vunpack.c.l.b16 %v221
    %v862 = vunpack.c.l.b16 %v222
    %v863 = vunpack.c.h.b16 %v222
    %v864 = vunpack.c.l.b16 %v223
    %v865 = vunpack.c.h.b16 %v223
    %v866 = vunpack.c.l.b16 %v224
    %v867 = vunpack.c.h.b16 %v224
    %v868 = vunpack.c.l.b16 %v225
    %v869 = vunpack.c.h.b16 %v225
    %v870 = vunpack.c.l.b16 %v226
    %v871 = vunpack.c.l.b16 %v227
    %v872 = vunpack.c.h.b16 %v227
    %v873 = vunpack.c.l.b16 %v228
    %v874 = vunpack.c.h.b16 %v228
    %v875 = vunpack.c.l.b16 %v229
    %v876 = vunpack.c.h.b16 %v229
    %v877 = vunpack.c.l.b16 %v230
    %v878 = vunpack.c.h.b16 %v230
    %v879 = vunpack.c.l.b16 %v231
    %v880 = vunpack.c.l.b16 %v232
    %v881 = vunpack.c.h.b16 %v232
    %v882 = vunpack.c.l.b16 %v233
    %v883 = vunpack.c.h.b16 %v233
    %v884 = vunpack.c.l.b16 %v234
    %v885 = vunpack.c.h.b16 %v234
    %v886 = vunpack.c.l.b16 %v235
    %v887 = vunpack.c.h.b16 %v235
    %v888 = vunpack.c.l.b16 %v236
    %v889 = vunpack.c.l.b16 %v237
    %v890 = vunpack.c.h.b16 %v237
    %v891 = vunpack.c.l.b16 %v238
    %v892 = vunpack.c.h.b16 %v238
    %v893 = vunpack.c.l.b16 %v239
    %v894 = vunpack.c.h.b16 %v239
    %v895 = vunpack.c.l.b16 %v240
    %v896 = vunpack.c.h.b16 %v240
    %v897 = vunpack.c.l.b16 %v241
    %v898 = vunpack.c.l.b16 %v242
    %v899 = vunpack.c.h.b16 %v242
    %v900 = vunpack.c.l.b16 %v243
    %v901 = vunpack.c.h.b16 %v243
    %v902 = vunpack.c.l.b16 %v244
    %v903 = vunpack.c.h.b16 %v244
    %v904 = vunpack.c.l.b16 %v245
    %v905 = vunpack.c.h.b16 %v245
    %v906 = vunpack.c.l.b16 %v246
    %v907 = vunpack.c.l.b16 %v247
    %v908 = vunpack.c.h.b16 %v247
    %v909 = vunpack.c.l.b16 %v248
    %v910 = vunpack.c.h.b16 %v248
    %v911 = vunpack.c.l.b16 %v249
    %v912 = vunpack.c.h.b16 %v249
    %v913 = vunpack.c.l.b16 %v250
    %v914 = vunpack.c.h.b16 %v250
    %v915 = vunpack.c.l.b16 %v251
    %v916 = vunpack.c.l.b16 %v252
    %v917 = vunpack.c.h.b16 %v252
    %v918 = vunpack.c.l.b16 %v253
    %v919 = vunpack.c.h.b16 %v253
    %v920 = vunpack.c.l.b16 %v254
    %v921 = vunpack.c.h.b16 %v254
    %v922 = vunpack.c.l.b16 %v255
    %v923 = vunpack.c.h.b16 %v255
    %v924 = vunpack.c.l.b16 %v256
    %v925 = vunpack.c.l.b16 %v257
    %v926 = vunpack.c.h.b16 %v257
    %v927 = vunpack.c.l.b16 %v258
    %v928 = vunpack.c.h.b16 %v258
    %v929 = vunpack.c.l.b16 %v259
    %v930 = vunpack.c.h.b16 %v259
    %v931 = vunpack.c.l.b16 %v260
    %v932 = vunpack.c.h.b16 %v260
    %v933 = vunpack.c.l.b16 %v261
    %v934 = vunpack.c.l.b16 %v262
    %v935 = vunpack.c.h.b16 %v262
    %v936 = vunpack.c.l.b16 %v263
    %v937 = vunpack.c.h.b16 %v263
    %v938 = vunpack.c.l.b16 %v264
    %v939 = vunpack.c.h.b16 %v264
    %v940 = vunpack.c.l.b16 %v265
    %v941 = vunpack.c.h.b16 %v265
    %v942 = vunpack.c.l.b16 %v266
    %v943 = vunpack.c.l.b16 %v267
    %v944 = vunpack.c.h.b16 %v267
    %v945 = vunpack.c.l.b16 %v268
    %v946 = vunpack.c.h.b16 %v268
    %v947 = vunpack.c.l.b16 %v269
    %v948 = vunpack.c.h.b16 %v269
    %v949 = vunpack.c.l.b16 %v270
    %v950 = vunpack.c.h.b16 %v270
    %v951 = vunpack.c.l.b16 %v271
    %v952 = vunpack.c.l.b16 %v272
    %v953 = vunpack.c.h.b16 %v272
    %v954 = vunpack.c.l.b16 %v273
    %v955 = vunpack.c.h.b16 %v273
    %v956 = vunpack.c.l.b16 %v274
    %v957 = vunpack.c.h.b16 %v274
    %v958 = vunpack.c.l.b16 %v275
    %v959 = vunpack.c.h.b16 %v275
    %v960 = vunpack.c.l.b16 %v276
    %v961 = vunpack.c.l.b16 %v277
    %v962 = vunpack.c.h.b16 %v277
    %v963 = vunpack.c.l.b16 %v278
    %v964 = vunpack.c.h.b16 %v278
    %v965 = vunpack.c.l.b16 %v279
    %v966 = vunpack.c.h.b16 %v279
    %v967 = vunpack.c.l.b16 %v280
    %v968 = vunpack.c.h.b16 %v280
    %v969 = vunpack.c.l.b16 %v281
    %v970 = vunpack.c.l.b16 %v282
    %v971 = vunpack.c.h.b16 %v282
    %v972 = vunpack.c.l.b16 %v283
    %v973 = vunpack.c.h.b16 %v283
    %v974 = vunpack.c.l.b16 %v284
    %v975 = vunpack.c.h.b16 %v284
    %v976 = vunpack.c.l.b16 %v285
    %v977 = vunpack.c.h.b16 %v285
    %v978 = vunpack.c.l.b16 %v286
    %v979 = vunpack.c.l.b16 %v287
    %v980 = vunpack.c.h.b16 %v287
    %v981 = vunpack.c.l.b16 %v288
    %v982 = vunpack.c.h.b16 %v288
    %v983 = vunpack.c.l.b16 %v289
    %v984 = vunpack.c.h.b16 %v289
    %v985 = vunpack.c.l.b16 %v290
    %v986 = vunpack.c.h.b16 %v290
    %v987 = vunpack.c.l.b16 %v291
    %v988 = vunpack.c.l.b16 %v292
    %v989 = vunpack.c.h.b16 %v292
    %v990 = vunpack.c.l.b16 %v293
    %v991 = vunpack.c.h.b16 %v293
    %v992 = vunpack.c.l.b16 %v294
    %v993 = vunpack.c.h.b16 %v294
    %v994 = vunpack.c.l.b16 %v295
    %v995 = vunpack.c.h.b16 %v295
    %v996 = vunpack.c.l.b16 %v296
    %v997 = vunpack.c.l.b16 %v297
    %v998 = vunpack.c.h.b16 %v297
    %v999 = vunpack.c.l.b16 %v298
    %v1000 = vunpack.c.h.b16 %v298
    %v1001 = vunpack.c.l.b16 %v299
    %v1002 = vunpack.c.h.b16 %v299
    %v1003 = vunpack.c.l.b16 %v300
    %v1004 = vunpack.c.h.b16 %v300
    %v1005 = vunpack.c.l.b16 %v301
    %v1006 = vpack.c.b16 %v583, %v574
    %v1007 = vpack.c.b16 %v584, %v575
    %v1008 = vpack.c.b16 %v585, %v576
    %v1009 = vpack.c.b16 %v586, %v577
    %v1010 = vpack.c.b16 %v587, %v578
    %v1011 = vpack.c.b16 %v588, %v579
    %v1012 = vpack.c.b16 %v589, %v580
    %v1013 = vpack.c.b16 %v590, %v581
    %v1014 = vpack.c.b16 %v591, %v582
    %v1015 = vpack.c.b16 %v601, %v592
    %v1016 = vpack.c.b16 %v602, %v593
    %v1017 = vpack.c.b16 %v603, %v594
    %v1018 = vpack.c.b16 %v604, %v595
    %v1019 = vpack.c.b16 %v605, %v596
    %v1020 = vpack.c.b16 %v606, %v597
    %v1021 = vpack.c.b16 %v607, %v598
    %v1022 = vpack.c.b16 %v608, %v599
    %v1023 = vpack.c.b16 %v609, %v600
    %v1024 = vpack.c.b16 %v619, %v610
    %v1025 = vpack.c.b16 %v620, %v611
    %v1026 = vpack.c.b16 %v621, %v612
    %v1027 = vpack.c.b16 %v622, %v613
    %v1028 = vpack.c.b16 %v623, %v614
    %v1029 = vpack.c.b16 %v624, %v615
    %v1030 = vpack.c.b16 %v625, %v616
    %v1031 = vpack.c.b16 %v626, %v617
    %v1032 = vpack.c.b16 %v627, %v618
    %v1033 = vpack.c.b16 %v637, %v628
    %v1034 = vpack.c.b16 %v638, %v629
    %v1035 = vpack.c.b16 %v639, %v630
    %v1036 = vpack.c.b16 %v640, %v631
    %v1037 = vpack.c.b16 %v641, %v632
    %v1038 = vpack.c.b16 %v642, %v633
    %v1039 = vpack.c.b16 %v643, %v634
    %v1040 = vpack.c.b16 %v644, %v635
    %v1041 = vpack.c.b16 %v645, %v636
    %v1042 = vpack.c.b16 %v655, %v646
    %v1043 = vpack.c.b16 %v656, %v647
    %v1044 = vpack.c.b16 %v657, %v648
    %v1045 = vpack.c.b16 %v658, %v649
    %v1046 = vpack.c.b16 %v659, %v650
    %v1047 = vpack.c.b16 %v660, %v651
    %v1048 = vpack.c.b16 %v661, %v652
    %v1049 = vpack.c.b16 %v662, %v653
    %v1050 = vpack.c.b16 %v663, %v654
    %v1051 = vpack.c.b16 %v673, %v664
    %v1052 = vpack.c.b16 %v674, %v665
    %v1053 = vpack.c.b16 %v675, %v666
    %v1054 = vpack.c.b16 %v676, %v667
    %v1055 = vpack.c.b16 %v677, %v668
    %v1056 = vpack.c.b16 %v678, %v669
    %v1057 = vpack.c.b16 %v679, %v670
    %v1058 = vpack.c.b16 %v680, %v671
    %v1059 = vpack.c.b16 %v681, %v672
    %v1060 = vpack.c.b16 %v691, %v682
    %v1061 = vpack.c.b16 %v692, %v683
    %v1062 = vpack.c.b16 %v693, %v684
    %v1063 = vpack.c.b16 %v694, %v685
    %v1064 = vpack.c.b16 %v695, %v686
    %v1065 = vpack.c.b16 %v696, %v687
    %v1066 = vpack.c.b16 %v697, %v688
    %v1067 = vpack.c.b16 %v698, %v689
    %v1068 = vpack.c.b16 %v699, %v690
    %v1069 = vpack.c.b16 %v709, %v700
    %v1070 = vpack.c.b16 %v710, %v701
    %v1071 = vpack.c.b16 %v711, %v702
    %v1072 = vpack.c.b16 %v712, %v703
    %v1073 = vpack.c.b16 %v713, %v704
    %v1074 = vpack.c.b16 %v714, %v705
    %v1075 = vpack.c.b16 %v715, %v706
    %v1076 = vpack.c.b16 %v716, %v707
    %v1077 = vpack.c.b16 %v717, %v708
    %v1078 = vpack.c.b16 %v727, %v718
    %v1079 = vpack.c.b16 %v728, %v719
    %v1080 = vpack.c.b16 %v729, %v720
    %v1081 = vpack.c.b16 %v730, %v721
    %v1082 = vpack.c.b16 %v731, %v722
    %v1083 = vpack.c.b16 %v732, %v723
    %v1084 = vpack.c.b16 %v733, %v724
    %v1085 = vpack.c.b16 %v734, %v725
    %v1086 = vpack.c.b16 %v735, %v726
    %v1087 = vpack.c.b16 %v745, %v736
    %v1088 = vpack.c.b16 %v746, %v737
    %v1089 = vpack.c.b16 %v747, %v738
    %v1090 = vpack.c.b16 %v748, %v739
    %v1091 = vpack.c.b16 %v749, %v740
    %v1092 = vpack.c.b16 %v750, %v741
    %v1093 = vpack.c.b16 %v751, %v742
    %v1094 = vpack.c.b16 %v752, %v743
    %v1095 = vpack.c.b16 %v753, %v744
    %v1096 = vpack.c.b16 %v763, %v754
    %v1097 = vpack.c.b16 %v764, %v755
    %v1098 = vpack.c.b16 %v765, %v756
    %v1099 = vpack.c.b16 %v766, %v757
    %v1100 = vpack.c.b16 %v767, %v758
    %v1101 = vpack.c.b16 %v768, %v759
    %v1102 = vpack.c.b16 %v769, %v760
    %v1103 = vpack.c.b16 %v770, %v761
    %v1104 = vpack.c.b16 %v771, %v762
    %v1105 = vpack.c.b16 %v781, %v772
    %v1106 = vpack.c.b16 %v782, %v773
    %v1107 = vpack.c.b16 %v783, %v774
    %v1108 = vpack.c.b16 %v784, %v775
    %v1109 = vpack.c.b16 %v785, %v776
    %v1110 = vpack.c.b16 %v786, %v777
    %v1111 = vpack.c.b16 %v787, %v778
    %v1112 = vpack.c.b16 %v788, %v779
    %v1113 = vpack.c.b16 %v789, %v780
    %v1114 = vpack.c.b16 %v799, %v790
    %v1115 = vpack.c.b16 %v800, %v791
    %v1116 = vpack.c.b16 %v801, %v792
    %v1117 = vpack.c.b16 %v802, %v793
    %v1118 = vpack.c.b16 %v803, %v794
    %v1119 = vpack.c.b16 %v804, %v795
    %v1120 = vpack.c.b16 %v805, %v796
    %v1121 = vpack.c.b16 %v806, %v797
    %v1122 = vpack.c.b16 %v807, %v798
    %v1123 = vpack.c.b16 %v817, %v808
    %v1124 = vpack.c.b16 %v818, %v809
    %v1125 = vpack.c.b16 %v819, %v810
    %v1126 = vpack.c.b16 %v820, %v811
    %v1127 = vpack.c.b16 %v821, %v812
    %v1128 = vpack.c.b16 %v822, %v813
    %v1129 = vpack.c.b16 %v823, %v814
    %v1130 = vpack.c.b16 %v824, %v815
    %v1131 = vpack.c.b16 %v825, %v816
    %v1132 = vpack.c.b16 %v835, %v826
    %v1133 = vpack.c.b16 %v836, %v827
    %v1134 = vpack.c.b16 %v837, %v828
    %v1135 = vpack.c.b16 %v838, %v829
    %v1136 = vpack.c.b16 %v839, %v830
    %v1137 = vpack.c.b16 %v840, %v831
    %v1138 = vpack.c.b16 %v841, %v832
    %v1139 = vpack.c.b16 %v842, %v833
    %v1140 = vpack.c.b16 %v843, %v834
    %v1141 = vpack.c.b16 %v853, %v844
    %v1142 = vpack.c.b16 %v854, %v845
    %v1143 = vpack.c.b16 %v855, %v846
    %v1144 = vpack.c.b16 %v856, %v847
    %v1145 = vpack.c.b16 %v857, %v848
    %v1146 = vpack.c.b16 %v858, %v849
    %v1147 = vpack.c.b16 %v859, %v850
    %v1148 = vpack.c.b16 %v860, %v851
    %v1149 = vpack.c.b16 %v861, %v852
    %v1150 = vpack.c.b16 %v871, %v862
    %v1151 = vpack.c.b16 %v872, %v863
    %v1152 = vpack.c.b16 %v873, %v864
    %v1153 = vpack.c.b16 %v874, %v865
    %v1154 = vpack.c.b16 %v875, %v866
    %v1155 = vpack.c.b16 %v876, %v867
    %v1156 = vpack.c.b16 %v877, %v868
    %v1157 = vpack.c.b16 %v878, %v869
    %v1158 = vpack.c.b16 %v879, %v870
    %v1159 = vpack.c.b16 %v889, %v880
    %v1160 = vpack.c.b16 %v890, %v881
    %v1161 = vpack.c.b16 %v891, %v882
    %v1162 = vpack.c.b16 %v892, %v883
    %v1163 = vpack.c.b16 %v893, %v884
    %v1164 = vpack.c.b16 %v894, %v885
    %v1165 = vpack.c.b16 %v895, %v886
    %v1166 = vpack.c.b16 %v896, %v887
    %v1167 = vpack.c.b16 %v897, %v888
    %v1168 = vpack.c.b16 %v907, %v898
    %v1169 = vpack.c.b16 %v908, %v899
    %v1170 = vpack.c.b16 %v909, %v900
    %v1171 = vpack.c.b16 %v910, %v901
    %v1172 = vpack.c.b16 %v911, %v902
    %v1173 = vpack.c.b16 %v912, %v903
    %v1174 = vpack.c.b16 %v913, %v904
    %v1175 = vpack.c.b16 %v914, %v905
    %v1176 = vpack.c.b16 %v915, %v906
    %v1177 = vpack.c.b16 %v925, %v916
    %v1178 = vpack.c.b16 %v926, %v917
    %v1179 = vpack.c.b16 %v927, %v918
    %v1180 = vpack.c.b16 %v928, %v919
    %v1181 = vpack.c.b16 %v929, %v920
    %v1182 = vpack.c.b16 %v930, %v921
    %v1183 = vpack.c.b16 %v931, %v922
    %v1184 = vpack.c.b16 %v932, %v923
    %v1185 = vpack.c.b16 %v933, %v924
    %v1186 = vpack.c.b16 %v943, %v934
    %v1187 = vpack.c.b16 %v944, %v935
    %v1188 = vpack.c.b16 %v945, %v936
    %v1189 = vpack.c.b16 %v946, %v937
    %v1190 = vpack.c.b16 %v947, %v938
    %v1191 = vpack.c.b16 %v948, %v939
    %v1192 = vpack.c.b16 %v949, %v940
    %v1193 = vpack.c.b16 %v950, %v941
    %v1194 = vpack.c.b16 %v951, %v942
    %v1195 = vpack.c.b16 %v961, %v952
    %v1196 = vpack.c.b16 %v962, %v953
    %v1197 = vpack.c.b16 %v963, %v954
    %v1198 = vpack.c.b16 %v964, %v955
    %v1199 = vpack.c.b16 %v965, %v956
    %v1200 = vpack.c.b16 %v966, %v957
    %v1201 = vpack.c.b16 %v967, %v958
    %v1202 = vpack.c.b16 %v968, %v959
    %v1203 = vpack.c.b16 %v969, %v960
    %v1204 = vpack.c.b16 %v979, %v970
    %v1205 = vpack.c.b16 %v980, %v971
    %v1206 = vpack.c.b16 %v981, %v972
    %v1207 = vpack.c.b16 %v982, %v973
    %v1208 = vpack.c.b16 %v983, %v974
    %v1209 = vpack.c.b16 %v984, %v975
    %v1210 = vpack.c.b16 %v985, %v976
    %v1211 = vpack.c.b16 %v986, %v977
    %v1212 = vpack.c.b16 %v987, %v978
    %v1213 = vpack.c.b16 %v997, %v988
    %v1214 = vpack.c.b16 %v998, %v989
    %v1215 = vpack.c.b16 %v999, %v990
    %v1216 = vpack.c.b16 %v1000, %v991
    %v1217 = vpack.c.b16 %v1001, %v992
    %v1218 = vpack.c.b16 %v1002, %v993
    %v1219 = vpack.c.b16 %v1003, %v994
    %v1220 = vpack.c.b16 %v1004, %v995
    %v1221 = vpack.c.b16 %v1005, %v996
    %1438 = vmatpush.bf16.msra.mxu0 %v1069
    %1439 = vmatpush.bf16.msra.mxu0 %v1060
    %1440 = vmatpush.bf16.msra.mxu0 %v1051
    %1441 = vmatpush.bf16.msra.mxu0 %v1042
    %1442 = vmatpush.bf16.msra.mxu0 %v1033
    %1443 = vmatpush.bf16.msra.mxu0 %v1024
    %1444 = vmatpush.bf16.msra.mxu0 %v1015
    %1445 = vmatpush.bf16.msra.mxu0 %v1006
    %1446 = vmatmul.bf16.gmra.mxu0 %v322
    %v1447 = vpop.f32.mrf.mxu0
    %v1448 = vadd.f32 0.0, %v1447
    %v1449 = vpop.f32.mrf.mxu0
    %v1450 = vadd.f32 0.0, %v1449
    %1451 = vmatmul.bf16.gmra.mxu0 %v325
    %v1452 = vpop.f32.mrf.mxu0
    %v1453 = vadd.f32 0.0, %v1452
    %v1454 = vpop.f32.mrf.mxu0
    %v1455 = vadd.f32 0.0, %v1454
    %1456 = vdwg.mxu0
    %1457 = vmatpush.bf16.msra.mxu0 %v1141
    %1458 = vmatpush.bf16.msra.mxu0 %v1132
    %1459 = vmatpush.bf16.msra.mxu0 %v1123
    %1460 = vmatpush.bf16.msra.mxu0 %v1114
    %1461 = vmatpush.bf16.msra.mxu0 %v1105
    %1462 = vmatpush.bf16.msra.mxu0 %v1096
    %1463 = vmatpush.bf16.msra.mxu0 %v1087
    %1464 = vmatpush.bf16.msra.mxu0 %v1078
    %1465 = vmatmul.bf16.gmra.mxu0 %v323
    %v1466 = vpop.f32.mrf.mxu0
    %v1467 = vadd.f32 %v1448, %v1466
    %v1468 = vpop.f32.mrf.mxu0
    %v1469 = vadd.f32 %v1450, %v1468
    %1470 = vmatmul.bf16.gmra.mxu0 %v326
    %v1471 = vpop.f32.mrf.mxu0
    %v1472 = vadd.f32 %v1453, %v1471
    %v1473 = vpop.f32.mrf.mxu0
    %v1474 = vadd.f32 %v1455, %v1473
    %1475 = vdwg.mxu0
    %1476 = vmatpush.bf16.msra.mxu0 %v1213
    %1477 = vmatpush.bf16.msra.mxu0 %v1204
    %1478 = vmatpush.bf16.msra.mxu0 %v1195
    %1479 = vmatpush.bf16.msra.mxu0 %v1186
    %1480 = vmatpush.bf16.msra.mxu0 %v1177
    %1481 = vmatpush.bf16.msra.mxu0 %v1168
    %1482 = vmatpush.bf16.msra.mxu0 %v1159
    %1483 = vmatpush.bf16.msra.mxu0 %v1150
    %1484 = vmatmul.bf16.gmra.mxu0 %v324
    %v1485 = vpop.f32.mrf.mxu0
    %v1486 = vadd.f32 %v1467, %v1485
    %v1487 = vpop.f32.mrf.mxu0
    %v1488 = vadd.f32 %v1469, %v1487
    %1489 = vmatmul.bf16.gmra.mxu0 %v327
    %v1490 = vpop.f32.mrf.mxu0
    %v1491 = vadd.f32 %v1472, %v1490
    %v1492 = vpop.f32.mrf.mxu0
    %v1493 = vadd.f32 %v1474, %v1492
    %1494 = vdwg.mxu0
    %1495 = vmatpush.bf16.msra.mxu0 %v1070
    %1496 = vmatpush.bf16.msra.mxu0 %v1061
    %1497 = vmatpush.bf16.msra.mxu0 %v1052
    %1498 = vmatpush.bf16.msra.mxu0 %v1043
    %1499 = vmatpush.bf16.msra.mxu0 %v1034
    %1500 = vmatpush.bf16.msra.mxu0 %v1025
    %1501 = vmatpush.bf16.msra.mxu0 %v1016
    %1502 = vmatpush.bf16.msra.mxu0 %v1007
    %1503 = vmatmul.bf16.gmra.mxu0 %v322
    %v1504 = vpop.f32.mrf.mxu0
    %v1505 = vadd.f32 0.0, %v1504
    %v1506 = vpop.f32.mrf.mxu0
    %v1507 = vadd.f32 0.0, %v1506
    %1508 = vmatmul.bf16.gmra.mxu0 %v325
    %v1509 = vpop.f32.mrf.mxu0
    %v1510 = vadd.f32 0.0, %v1509
    %v1511 = vpop.f32.mrf.mxu0
    %v1512 = vadd.f32 0.0, %v1511
    %1513 = vdwg.mxu0
    %1514 = vmatpush.bf16.msra.mxu0 %v1142
    %1515 = vmatpush.bf16.msra.mxu0 %v1133
    %1516 = vmatpush.bf16.msra.mxu0 %v1124
    %1517 = vmatpush.bf16.msra.mxu0 %v1115
    %1518 = vmatpush.bf16.msra.mxu0 %v1106
    %1519 = vmatpush.bf16.msra.mxu0 %v1097
    %1520 = vmatpush.bf16.msra.mxu0 %v1088
    %1521 = vmatpush.bf16.msra.mxu0 %v1079
    %1522 = vmatmul.bf16.gmra.mxu0 %v323
    %v1523 = vpop.f32.mrf.mxu0
    %v1524 = vadd.f32 %v1505, %v1523
    %v1525 = vpop.f32.mrf.mxu0
    %v1526 = vadd.f32 %v1507, %v1525
    %1527 = vmatmul.bf16.gmra.mxu0 %v326
    %v1528 = vpop.f32.mrf.mxu0
    %v1529 = vadd.f32 %v1510, %v1528
    %v1530 = vpop.f32.mrf.mxu0
    %v1531 = vadd.f32 %v1512, %v1530
    %1532 = vdwg.mxu0
    %1533 = vmatpush.bf16.msra.mxu0 %v1214
    %1534 = vmatpush.bf16.msra.mxu0 %v1205
    %1535 = vmatpush.bf16.msra.mxu0 %v1196
    %1536 = vmatpush.bf16.msra.mxu0 %v1187
    %1537 = vmatpush.bf16.msra.mxu0 %v1178
    %1538 = vmatpush.bf16.msra.mxu0 %v1169
    %1539 = vmatpush.bf16.msra.mxu0 %v1160
    %1540 = vmatpush.bf16.msra.mxu0 %v1151
    %1541 = vmatmul.bf16.gmra.mxu0 %v324
    %v1542 = vpop.f32.mrf.mxu0
    %v1543 = vadd.f32 %v1524, %v1542
    %v1544 = vpop.f32.mrf.mxu0
    %v1545 = vadd.f32 %v1526, %v1544
    %1546 = vmatmul.bf16.gmra.mxu0 %v327
    %v1547 = vpop.f32.mrf.mxu0
    %v1548 = vadd.f32 %v1529, %v1547
    %v1549 = vpop.f32.mrf.mxu0
    %v1550 = vadd.f32 %v1531, %v1549
    %1551 = vdwg.mxu0
    %1552 = vmatpush.bf16.msra.mxu0 %v1071
    %1553 = vmatpush.bf16.msra.mxu0 %v1062
    %1554 = vmatpush.bf16.msra.mxu0 %v1053
    %1555 = vmatpush.bf16.msra.mxu0 %v1044
    %1556 = vmatpush.bf16.msra.mxu0 %v1035
    %1557 = vmatpush.bf16.msra.mxu0 %v1026
    %1558 = vmatpush.bf16.msra.mxu0 %v1017
    %1559 = vmatpush.bf16.msra.mxu0 %v1008
    %1560 = vmatmul.bf16.gmra.mxu0 %v322
    %v1561 = vpop.f32.mrf.mxu0
    %v1562 = vadd.f32 0.0, %v1561
    %v1563 = vpop.f32.mrf.mxu0
    %v1564 = vadd.f32 0.0, %v1563
    %1565 = vmatmul.bf16.gmra.mxu0 %v325
    %v1566 = vpop.f32.mrf.mxu0
    %v1567 = vadd.f32 0.0, %v1566
    %v1568 = vpop.f32.mrf.mxu0
    %v1569 = vadd.f32 0.0, %v1568
    %1570 = vdwg.mxu0
    %1571 = vmatpush.bf16.msra.mxu0 %v1143
    %1572 = vmatpush.bf16.msra.mxu0 %v1134
    %1573 = vmatpush.bf16.msra.mxu0 %v1125
    %1574 = vmatpush.bf16.msra.mxu0 %v1116
    %1575 = vmatpush.bf16.msra.mxu0 %v1107
    %1576 = vmatpush.bf16.msra.mxu0 %v1098
    %1577 = vmatpush.bf16.msra.mxu0 %v1089
    %1578 = vmatpush.bf16.msra.mxu0 %v1080
    %1579 = vmatmul.bf16.gmra.mxu0 %v323
    %v1580 = vpop.f32.mrf.mxu0
    %v1581 = vadd.f32 %v1562, %v1580
    %v1582 = vpop.f32.mrf.mxu0
    %v1583 = vadd.f32 %v1564, %v1582
    %1584 = vmatmul.bf16.gmra.mxu0 %v326
    %v1585 = vpop.f32.mrf.mxu0
    %v1586 = vadd.f32 %v1567, %v1585
    %v1587 = vpop.f32.mrf.mxu0
    %v1588 = vadd.f32 %v1569, %v1587
    %1589 = vdwg.mxu0
    %1590 = vmatpush.bf16.msra.mxu0 %v1215
    %1591 = vmatpush.bf16.msra.mxu0 %v1206
    %1592 = vmatpush.bf16.msra.mxu0 %v1197
    %1593 = vmatpush.bf16.msra.mxu0 %v1188
    %1594 = vmatpush.bf16.msra.mxu0 %v1179
    %1595 = vmatpush.bf16.msra.mxu0 %v1170
    %1596 = vmatpush.bf16.msra.mxu0 %v1161
    %1597 = vmatpush.bf16.msra.mxu0 %v1152
    %1598 = vmatmul.bf16.gmra.mxu0 %v324
    %v1599 = vpop.f32.mrf.mxu0
    %v1600 = vadd.f32 %v1581, %v1599
    %v1601 = vpop.f32.mrf.mxu0
    %v1602 = vadd.f32 %v1583, %v1601
    %1603 = vmatmul.bf16.gmra.mxu0 %v327
    %v1604 = vpop.f32.mrf.mxu0
    %v1605 = vadd.f32 %v1586, %v1604
    %v1606 = vpop.f32.mrf.mxu0
    %v1607 = vadd.f32 %v1588, %v1606
    %1608 = vdwg.mxu0
    %1609 = vmatpush.bf16.msra.mxu0 %v1072
    %1610 = vmatpush.bf16.msra.mxu0 %v1063
    %1611 = vmatpush.bf16.msra.mxu0 %v1054
    %1612 = vmatpush.bf16.msra.mxu0 %v1045
    %1613 = vmatpush.bf16.msra.mxu0 %v1036
    %1614 = vmatpush.bf16.msra.mxu0 %v1027
    %1615 = vmatpush.bf16.msra.mxu0 %v1018
    %1616 = vmatpush.bf16.msra.mxu0 %v1009
    %1617 = vmatmul.bf16.gmra.mxu0 %v322
    %v1618 = vpop.f32.mrf.mxu0
    %v1619 = vadd.f32 0.0, %v1618
    %v1620 = vpop.f32.mrf.mxu0
    %v1621 = vadd.f32 0.0, %v1620
    %1622 = vmatmul.bf16.gmra.mxu0 %v325
    %v1623 = vpop.f32.mrf.mxu0
    %v1624 = vadd.f32 0.0, %v1623
    %v1625 = vpop.f32.mrf.mxu0
    %v1626 = vadd.f32 0.0, %v1625
    %1627 = vdwg.mxu0
    %1628 = vmatpush.bf16.msra.mxu0 %v1144
    %1629 = vmatpush.bf16.msra.mxu0 %v1135
    %1630 = vmatpush.bf16.msra.mxu0 %v1126
    %1631 = vmatpush.bf16.msra.mxu0 %v1117
    %1632 = vmatpush.bf16.msra.mxu0 %v1108
    %1633 = vmatpush.bf16.msra.mxu0 %v1099
    %1634 = vmatpush.bf16.msra.mxu0 %v1090
    %1635 = vmatpush.bf16.msra.mxu0 %v1081
    %1636 = vmatmul.bf16.gmra.mxu0 %v323
    %v1637 = vpop.f32.mrf.mxu0
    %v1638 = vadd.f32 %v1619, %v1637
    %v1639 = vpop.f32.mrf.mxu0
    %v1640 = vadd.f32 %v1621, %v1639
    %1641 = vmatmul.bf16.gmra.mxu0 %v326
    %v1642 = vpop.f32.mrf.mxu0
    %v1643 = vadd.f32 %v1624, %v1642
    %v1644 = vpop.f32.mrf.mxu0
    %v1645 = vadd.f32 %v1626, %v1644
    %1646 = vdwg.mxu0
    %1647 = vmatpush.bf16.msra.mxu0 %v1216
    %1648 = vmatpush.bf16.msra.mxu0 %v1207
    %1649 = vmatpush.bf16.msra.mxu0 %v1198
    %1650 = vmatpush.bf16.msra.mxu0 %v1189
    %1651 = vmatpush.bf16.msra.mxu0 %v1180
    %1652 = vmatpush.bf16.msra.mxu0 %v1171
    %1653 = vmatpush.bf16.msra.mxu0 %v1162
    %1654 = vmatpush.bf16.msra.mxu0 %v1153
    %1655 = vmatmul.bf16.gmra.mxu0 %v324
    %v1656 = vpop.f32.mrf.mxu0
    %v1657 = vadd.f32 %v1638, %v1656
    %v1658 = vpop.f32.mrf.mxu0
    %v1659 = vadd.f32 %v1640, %v1658
    %1660 = vmatmul.bf16.gmra.mxu0 %v327
    %v1661 = vpop.f32.mrf.mxu0
    %v1662 = vadd.f32 %v1643, %v1661
    %v1663 = vpop.f32.mrf.mxu0
    %v1664 = vadd.f32 %v1645, %v1663
    %1665 = vdwg.mxu0
    %1666 = vmatpush.bf16.msra.mxu0 %v1073
    %1667 = vmatpush.bf16.msra.mxu0 %v1064
    %1668 = vmatpush.bf16.msra.mxu0 %v1055
    %1669 = vmatpush.bf16.msra.mxu0 %v1046
    %1670 = vmatpush.bf16.msra.mxu0 %v1037
    %1671 = vmatpush.bf16.msra.mxu0 %v1028
    %1672 = vmatpush.bf16.msra.mxu0 %v1019
    %1673 = vmatpush.bf16.msra.mxu0 %v1010
    %1674 = vmatmul.bf16.gmra.mxu0 %v322
    %v1675 = vpop.f32.mrf.mxu0
    %v1676 = vadd.f32 0.0, %v1675
    %v1677 = vpop.f32.mrf.mxu0
    %v1678 = vadd.f32 0.0, %v1677
    %1679 = vmatmul.bf16.gmra.mxu0 %v325
    %v1680 = vpop.f32.mrf.mxu0
    %v1681 = vadd.f32 0.0, %v1680
    %v1682 = vpop.f32.mrf.mxu0
    %v1683 = vadd.f32 0.0, %v1682
    %1684 = vdwg.mxu0
    %1685 = vmatpush.bf16.msra.mxu0 %v1145
    %1686 = vmatpush.bf16.msra.mxu0 %v1136
    %1687 = vmatpush.bf16.msra.mxu0 %v1127
    %1688 = vmatpush.bf16.msra.mxu0 %v1118
    %1689 = vmatpush.bf16.msra.mxu0 %v1109
    %1690 = vmatpush.bf16.msra.mxu0 %v1100
    %1691 = vmatpush.bf16.msra.mxu0 %v1091
    %1692 = vmatpush.bf16.msra.mxu0 %v1082
    %1693 = vmatmul.bf16.gmra.mxu0 %v323
    %v1694 = vpop.f32.mrf.mxu0
    %v1695 = vadd.f32 %v1676, %v1694
    %v1696 = vpop.f32.mrf.mxu0
    %v1697 = vadd.f32 %v1678, %v1696
    %1698 = vmatmul.bf16.gmra.mxu0 %v326
    %v1699 = vpop.f32.mrf.mxu0
    %v1700 = vadd.f32 %v1681, %v1699
    %v1701 = vpop.f32.mrf.mxu0
    %v1702 = vadd.f32 %v1683, %v1701
    %1703 = vdwg.mxu0
    %1704 = vmatpush.bf16.msra.mxu0 %v1217
    %1705 = vmatpush.bf16.msra.mxu0 %v1208
    %1706 = vmatpush.bf16.msra.mxu0 %v1199
    %1707 = vmatpush.bf16.msra.mxu0 %v1190
    %1708 = vmatpush.bf16.msra.mxu0 %v1181
    %1709 = vmatpush.bf16.msra.mxu0 %v1172
    %1710 = vmatpush.bf16.msra.mxu0 %v1163
    %1711 = vmatpush.bf16.msra.mxu0 %v1154
    %1712 = vmatmul.bf16.gmra.mxu0 %v324
    %v1713 = vpop.f32.mrf.mxu0
    %v1714 = vadd.f32 %v1695, %v1713
    %v1715 = vpop.f32.mrf.mxu0
    %v1716 = vadd.f32 %v1697, %v1715
    %1717 = vmatmul.bf16.gmra.mxu0 %v327
    %v1718 = vpop.f32.mrf.mxu0
    %v1719 = vadd.f32 %v1700, %v1718
    %v1720 = vpop.f32.mrf.mxu0
    %v1721 = vadd.f32 %v1702, %v1720
    %1722 = vdwg.mxu0
    %1723 = vmatpush.bf16.msra.mxu0 %v1074
    %1724 = vmatpush.bf16.msra.mxu0 %v1065
    %1725 = vmatpush.bf16.msra.mxu0 %v1056
    %1726 = vmatpush.bf16.msra.mxu0 %v1047
    %1727 = vmatpush.bf16.msra.mxu0 %v1038
    %1728 = vmatpush.bf16.msra.mxu0 %v1029
    %1729 = vmatpush.bf16.msra.mxu0 %v1020
    %1730 = vmatpush.bf16.msra.mxu0 %v1011
    %1731 = vmatmul.bf16.gmra.mxu0 %v322
    %v1732 = vpop.f32.mrf.mxu0
    %v1733 = vadd.f32 0.0, %v1732
    %v1734 = vpop.f32.mrf.mxu0
    %v1735 = vadd.f32 0.0, %v1734
    %1736 = vmatmul.bf16.gmra.mxu0 %v325
    %v1737 = vpop.f32.mrf.mxu0
    %v1738 = vadd.f32 0.0, %v1737
    %v1739 = vpop.f32.mrf.mxu0
    %v1740 = vadd.f32 0.0, %v1739
    %1741 = vdwg.mxu0
    %1742 = vmatpush.bf16.msra.mxu0 %v1146
    %1743 = vmatpush.bf16.msra.mxu0 %v1137
    %1744 = vmatpush.bf16.msra.mxu0 %v1128
    %1745 = vmatpush.bf16.msra.mxu0 %v1119
    %1746 = vmatpush.bf16.msra.mxu0 %v1110
    %1747 = vmatpush.bf16.msra.mxu0 %v1101
    %1748 = vmatpush.bf16.msra.mxu0 %v1092
    %1749 = vmatpush.bf16.msra.mxu0 %v1083
    %1750 = vmatmul.bf16.gmra.mxu0 %v323
    %v1751 = vpop.f32.mrf.mxu0
    %v1752 = vadd.f32 %v1733, %v1751
    %v1753 = vpop.f32.mrf.mxu0
    %v1754 = vadd.f32 %v1735, %v1753
    %1755 = vmatmul.bf16.gmra.mxu0 %v326
    %v1756 = vpop.f32.mrf.mxu0
    %v1757 = vadd.f32 %v1738, %v1756
    %v1758 = vpop.f32.mrf.mxu0
    %v1759 = vadd.f32 %v1740, %v1758
    %1760 = vdwg.mxu0
    %1761 = vmatpush.bf16.msra.mxu0 %v1218
    %1762 = vmatpush.bf16.msra.mxu0 %v1209
    %1763 = vmatpush.bf16.msra.mxu0 %v1200
    %1764 = vmatpush.bf16.msra.mxu0 %v1191
    %1765 = vmatpush.bf16.msra.mxu0 %v1182
    %1766 = vmatpush.bf16.msra.mxu0 %v1173
    %1767 = vmatpush.bf16.msra.mxu0 %v1164
    %1768 = vmatpush.bf16.msra.mxu0 %v1155
    %1769 = vmatmul.bf16.gmra.mxu0 %v324
    %v1770 = vpop.f32.mrf.mxu0
    %v1771 = vadd.f32 %v1752, %v1770
    %v1772 = vpop.f32.mrf.mxu0
    %v1773 = vadd.f32 %v1754, %v1772
    %1774 = vmatmul.bf16.gmra.mxu0 %v327
    %v1775 = vpop.f32.mrf.mxu0
    %v1776 = vadd.f32 %v1757, %v1775
    %v1777 = vpop.f32.mrf.mxu0
    %v1778 = vadd.f32 %v1759, %v1777
    %1779 = vdwg.mxu0
    %1780 = vmatpush.bf16.msra.mxu0 %v1075
    %1781 = vmatpush.bf16.msra.mxu0 %v1066
    %1782 = vmatpush.bf16.msra.mxu0 %v1057
    %1783 = vmatpush.bf16.msra.mxu0 %v1048
    %1784 = vmatpush.bf16.msra.mxu0 %v1039
    %1785 = vmatpush.bf16.msra.mxu0 %v1030
    %1786 = vmatpush.bf16.msra.mxu0 %v1021
    %1787 = vmatpush.bf16.msra.mxu0 %v1012
    %1788 = vmatmul.bf16.gmra.mxu0 %v322
    %v1789 = vpop.f32.mrf.mxu0
    %v1790 = vadd.f32 0.0, %v1789
    %v1791 = vpop.f32.mrf.mxu0
    %v1792 = vadd.f32 0.0, %v1791
    %1793 = vmatmul.bf16.gmra.mxu0 %v325
    %v1794 = vpop.f32.mrf.mxu0
    %v1795 = vadd.f32 0.0, %v1794
    %v1796 = vpop.f32.mrf.mxu0
    %v1797 = vadd.f32 0.0, %v1796
    %1798 = vdwg.mxu0
    %1799 = vmatpush.bf16.msra.mxu0 %v1147
    %1800 = vmatpush.bf16.msra.mxu0 %v1138
    %1801 = vmatpush.bf16.msra.mxu0 %v1129
    %1802 = vmatpush.bf16.msra.mxu0 %v1120
    %1803 = vmatpush.bf16.msra.mxu0 %v1111
    %1804 = vmatpush.bf16.msra.mxu0 %v1102
    %1805 = vmatpush.bf16.msra.mxu0 %v1093
    %1806 = vmatpush.bf16.msra.mxu0 %v1084
    %1807 = vmatmul.bf16.gmra.mxu0 %v323
    %v1808 = vpop.f32.mrf.mxu0
    %v1809 = vadd.f32 %v1790, %v1808
    %v1810 = vpop.f32.mrf.mxu0
    %v1811 = vadd.f32 %v1792, %v1810
    %1812 = vmatmul.bf16.gmra.mxu0 %v326
    %v1813 = vpop.f32.mrf.mxu0
    %v1814 = vadd.f32 %v1795, %v1813
    %v1815 = vpop.f32.mrf.mxu0
    %v1816 = vadd.f32 %v1797, %v1815
    %1817 = vdwg.mxu0
    %1818 = vmatpush.bf16.msra.mxu0 %v1219
    %1819 = vmatpush.bf16.msra.mxu0 %v1210
    %1820 = vmatpush.bf16.msra.mxu0 %v1201
    %1821 = vmatpush.bf16.msra.mxu0 %v1192
    %1822 = vmatpush.bf16.msra.mxu0 %v1183
    %1823 = vmatpush.bf16.msra.mxu0 %v1174
    %1824 = vmatpush.bf16.msra.mxu0 %v1165
    %1825 = vmatpush.bf16.msra.mxu0 %v1156
    %1826 = vmatmul.bf16.gmra.mxu0 %v324
    %v1827 = vpop.f32.mrf.mxu0
    %v1828 = vadd.f32 %v1809, %v1827
    %v1829 = vpop.f32.mrf.mxu0
    %v1830 = vadd.f32 %v1811, %v1829
    %1831 = vmatmul.bf16.gmra.mxu0 %v327
    %v1832 = vpop.f32.mrf.mxu0
    %v1833 = vadd.f32 %v1814, %v1832
    %v1834 = vpop.f32.mrf.mxu0
    %v1835 = vadd.f32 %v1816, %v1834
    %1836 = vdwg.mxu0
    %1837 = vmatpush.bf16.msra.mxu0 %v1076
    %1838 = vmatpush.bf16.msra.mxu0 %v1067
    %1839 = vmatpush.bf16.msra.mxu0 %v1058
    %1840 = vmatpush.bf16.msra.mxu0 %v1049
    %1841 = vmatpush.bf16.msra.mxu0 %v1040
    %1842 = vmatpush.bf16.msra.mxu0 %v1031
    %1843 = vmatpush.bf16.msra.mxu0 %v1022
    %1844 = vmatpush.bf16.msra.mxu0 %v1013
    %1845 = vmatmul.bf16.gmra.mxu0 %v322
    %v1846 = vpop.f32.mrf.mxu0
    %v1847 = vadd.f32 0.0, %v1846
    %v1848 = vpop.f32.mrf.mxu0
    %v1849 = vadd.f32 0.0, %v1848
    %1850 = vmatmul.bf16.gmra.mxu0 %v325
    %v1851 = vpop.f32.mrf.mxu0
    %v1852 = vadd.f32 0.0, %v1851
    %v1853 = vpop.f32.mrf.mxu0
    %v1854 = vadd.f32 0.0, %v1853
    %1855 = vdwg.mxu0
    %1856 = vmatpush.bf16.msra.mxu0 %v1148
    %1857 = vmatpush.bf16.msra.mxu0 %v1139
    %1858 = vmatpush.bf16.msra.mxu0 %v1130
    %1859 = vmatpush.bf16.msra.mxu0 %v1121
    %1860 = vmatpush.bf16.msra.mxu0 %v1112
    %1861 = vmatpush.bf16.msra.mxu0 %v1103
    %1862 = vmatpush.bf16.msra.mxu0 %v1094
    %1863 = vmatpush.bf16.msra.mxu0 %v1085
    %1864 = vmatmul.bf16.gmra.mxu0 %v323
    %v1865 = vpop.f32.mrf.mxu0
    %v1866 = vadd.f32 %v1847, %v1865
    %v1867 = vpop.f32.mrf.mxu0
    %v1868 = vadd.f32 %v1849, %v1867
    %1869 = vmatmul.bf16.gmra.mxu0 %v326
    %v1870 = vpop.f32.mrf.mxu0
    %v1871 = vadd.f32 %v1852, %v1870
    %v1872 = vpop.f32.mrf.mxu0
    %v1873 = vadd.f32 %v1854, %v1872
    %1874 = vdwg.mxu0
    %1875 = vmatpush.bf16.msra.mxu0 %v1220
    %1876 = vmatpush.bf16.msra.mxu0 %v1211
    %1877 = vmatpush.bf16.msra.mxu0 %v1202
    %1878 = vmatpush.bf16.msra.mxu0 %v1193
    %1879 = vmatpush.bf16.msra.mxu0 %v1184
    %1880 = vmatpush.bf16.msra.mxu0 %v1175
    %1881 = vmatpush.bf16.msra.mxu0 %v1166
    %1882 = vmatpush.bf16.msra.mxu0 %v1157
    %1883 = vmatmul.bf16.gmra.mxu0 %v324
    %v1884 = vpop.f32.mrf.mxu0
    %v1885 = vadd.f32 %v1866, %v1884
    %v1886 = vpop.f32.mrf.mxu0
    %v1887 = vadd.f32 %v1868, %v1886
    %1888 = vmatmul.bf16.gmra.mxu0 %v327
    %v1889 = vpop.f32.mrf.mxu0
    %v1890 = vadd.f32 %v1871, %v1889
    %v1891 = vpop.f32.mrf.mxu0
    %v1892 = vadd.f32 %v1873, %v1891
    %1893 = vdwg.mxu0
    %1894 = vmatpush.bf16.msra.mxu0 %v1077
    %1895 = vmatpush.bf16.msra.mxu0 %v1068
    %1896 = vmatpush.bf16.msra.mxu0 %v1059
    %1897 = vmatpush.bf16.msra.mxu0 %v1050
    %1898 = vmatpush.bf16.msra.mxu0 %v1041
    %1899 = vmatpush.bf16.msra.mxu0 %v1032
    %1900 = vmatpush.bf16.msra.mxu0 %v1023
    %1901 = vmatpush.bf16.msra.mxu0 %v1014
    %1902 = vmatmul.bf16.gmra.mxu0 %v322
    %v1903 = vpop.f32.mrf.mxu0
    %v1904 = vadd.f32 0.0, %v1903
    %v1905 = vpop.f32.mrf.mxu0
    %v1906 = vadd.f32 0.0, %v1905
    %1907 = vmatmul.bf16.gmra.mxu0 %v325
    %v1908 = vpop.f32.mrf.mxu0
    %v1909 = vadd.f32 0.0, %v1908
    %v1910 = vpop.f32.mrf.mxu0
    %v1911 = vadd.f32 0.0, %v1910
    %1912 = vdwg.mxu0
    %1913 = vmatpush.bf16.msra.mxu0 %v1149
    %1914 = vmatpush.bf16.msra.mxu0 %v1140
    %1915 = vmatpush.bf16.msra.mxu0 %v1131
    %1916 = vmatpush.bf16.msra.mxu0 %v1122
    %1917 = vmatpush.bf16.msra.mxu0 %v1113
    %1918 = vmatpush.bf16.msra.mxu0 %v1104
    %1919 = vmatpush.bf16.msra.mxu0 %v1095
    %1920 = vmatpush.bf16.msra.mxu0 %v1086
    %1921 = vmatmul.bf16.gmra.mxu0 %v323
    %v1922 = vpop.f32.mrf.mxu0
    %v1923 = vadd.f32 %v1904, %v1922
    %v1924 = vpop.f32.mrf.mxu0
    %v1925 = vadd.f32 %v1906, %v1924
    %1926 = vmatmul.bf16.gmra.mxu0 %v326
    %v1927 = vpop.f32.mrf.mxu0
    %v1928 = vadd.f32 %v1909, %v1927
    %v1929 = vpop.f32.mrf.mxu0
    %v1930 = vadd.f32 %v1911, %v1929
    %1931 = vdwg.mxu0
    %1932 = vmatpush.bf16.msra.mxu0 %v1221
    %1933 = vmatpush.bf16.msra.mxu0 %v1212
    %1934 = vmatpush.bf16.msra.mxu0 %v1203
    %1935 = vmatpush.bf16.msra.mxu0 %v1194
    %1936 = vmatpush.bf16.msra.mxu0 %v1185
    %1937 = vmatpush.bf16.msra.mxu0 %v1176
    %1938 = vmatpush.bf16.msra.mxu0 %v1167
    %1939 = vmatpush.bf16.msra.mxu0 %v1158
    %1940 = vmatmul.bf16.gmra.mxu0 %v324
    %v1941 = vpop.f32.mrf.mxu0
    %v1942 = vadd.f32 %v1923, %v1941
    %v1943 = vpop.f32.mrf.mxu0
    %v1944 = vadd.f32 %v1925, %v1943
    %1945 = vmatmul.bf16.gmra.mxu0 %v327
    %v1946 = vpop.f32.mrf.mxu0
    %v1947 = vadd.f32 %v1928, %v1946
    %v1948 = vpop.f32.mrf.mxu0
    %v1949 = vadd.f32 %v1930, %v1948
    %1950 = vdwg.mxu0
    %v1951 = vld [vmem:[%s3] sm:$0xff]
    %v1952 = vld [vmem:[%s3 + $0x8] sm:$0xff]
    %v1953 = vld [vmem:[%s4] sm:$0xff]
    %v1954 = vld [vmem:[%s4 + $0x8] sm:$0xff]
    %v1955 = vld [vmem:[#allocation5] sm:$0xff]
    %v1956 = vld [vmem:[#allocation5 + $0x8] sm:$0xf]
    %v1957 = vld [vmem:[#allocation5 + $0xc] sm:$0xff]
    %v1958 = vld [vmem:[#allocation5 + $0x14] sm:$0xf]
    %v1959 = vld [vmem:[#allocation5 + $0x18] sm:$0xff]
    %v1960 = vld [vmem:[#allocation5 + $0x20] sm:$0xf]
    %v1961 = vld [vmem:[#allocation5 + $0x24] sm:$0xff]
    %v1962 = vld [vmem:[#allocation5 + $0x2c] sm:$0xf]
    %v1963 = vld [vmem:[#allocation5 + $0x30] sm:$0xff]
    %v1964 = vld [vmem:[#allocation5 + $0x38] sm:$0xf]
    %v1965 = vld [vmem:[#allocation5 + $0x3c] sm:$0xff]
    %v1966 = vld [vmem:[#allocation5 + $0x44] sm:$0xf]
    %v1967 = vld [vmem:[#allocation5 + $0x48] sm:$0xff]
    %v1968 = vld [vmem:[#allocation5 + $0x50] sm:$0xf]
    %v1969 = vld [vmem:[#allocation5 + $0x54] sm:$0xff]
    %v1970 = vld [vmem:[#allocation5 + $0x5c] sm:$0xf]
    %v1971 = vld [vmem:[#allocation5 + $0x60] sm:$0xff]
    %v1972 = vld [vmem:[#allocation5 + $0x68] sm:$0xf]
    %v1973 = vld [vmem:[#allocation5 + $0x6c] sm:$0xff]
    %v1974 = vld [vmem:[#allocation5 + $0x74] sm:$0xf]
    %v1975 = vld [vmem:[#allocation5 + $0x78] sm:$0xff]
    %v1976 = vld [vmem:[#allocation5 + $0x80] sm:$0xf]
    %v1977 = vld [vmem:[#allocation5 + $0x84] sm:$0xff]
    %v1978 = vld [vmem:[#allocation5 + $0x8c] sm:$0xf]
    %v1979 = vld [vmem:[#allocation5 + $0x90] sm:$0xff]
    %v1980 = vld [vmem:[#allocation5 + $0x98] sm:$0xf]
    %v1981 = vld [vmem:[#allocation5 + $0x9c] sm:$0xff]
    %v1982 = vld [vmem:[#allocation5 + $0xa4] sm:$0xf]
    %v1983 = vld [vmem:[#allocation5 + $0xa8] sm:$0xff]
    %v1984 = vld [vmem:[#allocation5 + $0xb0] sm:$0xf]
    %v1985 = vld [vmem:[#allocation5 + $0xb4] sm:$0xff]
    %v1986 = vld [vmem:[#allocation5 + $0xbc] sm:$0xf]
    %v1987 = vld [vmem:[#allocation5 + $0xc0] sm:$0xff]
    %v1988 = vld [vmem:[#allocation5 + $0xc8] sm:$0xf]
    %v1989 = vld [vmem:[#allocation5 + $0xcc] sm:$0xff]
    %v1990 = vld [vmem:[#allocation5 + $0xd4] sm:$0xf]
    %v1991 = vld [vmem:[#allocation5 + $0xd8] sm:$0xff]
    %v1992 = vld [vmem:[#allocation5 + $0xe0] sm:$0xf]
    %v1993 = vld [vmem:[#allocation5 + $0xe4] sm:$0xff]
    %v1994 = vld [vmem:[#allocation5 + $0xec] sm:$0xf]
    %v1995 = vld [vmem:[#allocation5 + $0xf0] sm:$0xff]
    %v1996 = vld [vmem:[#allocation5 + $0xf8] sm:$0xf]
    %v1997 = vld [vmem:[#allocation5 + $0xfc] sm:$0xff]
    %v1998 = vld [vmem:[#allocation5 + $0x104] sm:$0xf]
    %v1999 = vld [vmem:[#allocation5 + $0x108] sm:$0xff]
    %v2000 = vld [vmem:[#allocation5 + $0x110] sm:$0xf]
    %v2001 = vld [vmem:[#allocation5 + $0x114] sm:$0xff]
    %v2002 = vld [vmem:[#allocation5 + $0x11c] sm:$0xf]
    %v2003 = vld [vmem:[#allocation5 + $0x120] sm:$0xff]
    %v2004 = vld [vmem:[#allocation5 + $0x128] sm:$0xf]
    %v2005 = vld [vmem:[#allocation5 + $0x12c] sm:$0xff]
    %v2006 = vld [vmem:[#allocation5 + $0x134] sm:$0xf]
    %v2007 = vld [vmem:[#allocation5 + $0x138] sm:$0xff]
    %v2008 = vld [vmem:[#allocation5 + $0x140] sm:$0xf]
    %v2009 = vld [vmem:[#allocation5 + $0x144] sm:$0xff]
    %v2010 = vld [vmem:[#allocation5 + $0x14c] sm:$0xf]
    %v2011 = vld [vmem:[#allocation5 + $0x150] sm:$0xff]
    %v2012 = vld [vmem:[#allocation5 + $0x158] sm:$0xf]
    %v2013 = vld [vmem:[#allocation5 + $0x15c] sm:$0xff]
    %v2014 = vld [vmem:[#allocation5 + $0x164] sm:$0xf]
    %v2015 = vld [vmem:[#allocation5 + $0x168] sm:$0xff]
    %v2016 = vld [vmem:[#allocation5 + $0x170] sm:$0xf]
    %v2017 = vld [vmem:[#allocation5 + $0x174] sm:$0xff]
    %v2018 = vld [vmem:[#allocation5 + $0x17c] sm:$0xf]
    %v2019 = vld [vmem:[#allocation5 + $0x180] sm:$0xff]
    %v2020 = vld [vmem:[#allocation5 + $0x188] sm:$0xf]
    %v2021 = vld [vmem:[#allocation5 + $0x18c] sm:$0xff]
    %v2022 = vld [vmem:[#allocation5 + $0x194] sm:$0xf]
    %v2023 = vld [vmem:[#allocation5 + $0x198] sm:$0xff]
    %v2024 = vld [vmem:[#allocation5 + $0x1a0] sm:$0xf]
    %v2025 = vld [vmem:[#allocation5 + $0x1a4] sm:$0xff]
    %v2026 = vld [vmem:[#allocation5 + $0x1ac] sm:$0xf]
    %v2027 = vld [vmem:[#allocation5 + $0x1b0] sm:$0xff]
    %v2028 = vld [vmem:[#allocation5 + $0x1b8] sm:$0xf]
    %v2029 = vld [vmem:[#allocation5 + $0x1bc] sm:$0xff]
    %v2030 = vld [vmem:[#allocation5 + $0x1c4] sm:$0xf]
    %v2031 = vld [vmem:[#allocation5 + $0x1c8] sm:$0xff]
    %v2032 = vld [vmem:[#allocation5 + $0x1d0] sm:$0xf]
    %v2033 = vld [vmem:[#allocation5 + $0x1d4] sm:$0xff]
    %v2034 = vld [vmem:[#allocation5 + $0x1dc] sm:$0xf]
    %v2035 = vld [vmem:[#allocation5 + $0x1e0] sm:$0xff]
    %v2036 = vld [vmem:[#allocation5 + $0x1e8] sm:$0xf]
    %v2037 = vld [vmem:[#allocation5 + $0x1ec] sm:$0xff]
    %v2038 = vld [vmem:[#allocation5 + $0x1f4] sm:$0xf]
    %v2039 = vld [vmem:[#allocation5 + $0x1f8] sm:$0xff]
    %v2040 = vld [vmem:[#allocation5 + $0x200] sm:$0xf]
    %v2041 = vld [vmem:[#allocation5 + $0x204] sm:$0xff]
    %v2042 = vld [vmem:[#allocation5 + $0x20c] sm:$0xf]
    %v2043 = vld [vmem:[#allocation5 + $0x210] sm:$0xff]
    %v2044 = vld [vmem:[#allocation5 + $0x218] sm:$0xf]
    %v2045 = vld [vmem:[#allocation5 + $0x21c] sm:$0xff]
    %v2046 = vld [vmem:[#allocation5 + $0x224] sm:$0xf]
    %v2047 = vld [vmem:[#allocation5 + $0x228] sm:$0xff]
    %v2048 = vld [vmem:[#allocation5 + $0x230] sm:$0xf]
    %v2049 = vld [vmem:[#allocation5 + $0x234] sm:$0xff]
    %v2050 = vld [vmem:[#allocation5 + $0x23c] sm:$0xf]
    %2053 = vrot.lane.b32.xlu0 %v1486, 64
    %v2054 = vpop.permute.xlu0 %2053
    %2055 = vrot.lane.b32.xlu0 %v1488, 64
    %v2056 = vpop.permute.xlu0 %2055
    %v2059 = vmul.f32 %v1486, %v1951
    %v2060 = vmul.f32 %v1488, %v1952
    %v2061 = vmul.f32 %v2054, %v1953
    %v2062 = vmul.f32 %v2056, %v1954
    %v2063 = vadd.f32 %v2059, %v2061
    %v2064 = vadd.f32 %v2060, %v2062
    %v2065 = vpack.c.bf16 %v2064, %v2063
    %2068 = vrot.lane.b32.xlu0 %v1657, 64
    %v2069 = vpop.permute.xlu0 %2068
    %2070 = vrot.lane.b32.xlu0 %v1659, 64
    %v2071 = vpop.permute.xlu0 %2070
    %v2074 = vmul.f32 %v1657, %v1951
    %v2075 = vmul.f32 %v1659, %v1952
    %v2076 = vmul.f32 %v2069, %v1953
    %v2077 = vmul.f32 %v2071, %v1954
    %v2078 = vadd.f32 %v2074, %v2076
    %v2079 = vadd.f32 %v2075, %v2077
    %v2080 = vpack.c.bf16 %v2079, %v2078
    %v2081 = vpack.c.bf16 %v1830, %v1828
    %2082 = vmatpush.bf16.xpose.msra.mxu0 0
    %2083 = vmatpush.bf16.xpose.msra.mxu0 0
    %2084 = vmatpush.bf16.xpose.msra.mxu0 0
    %2085 = vmatpush.bf16.xpose.msra.mxu0 0
    %2086 = vmatpush.bf16.xpose.msra.mxu0 0
    %2087 = vmatpush.bf16.xpose.msra.mxu0 0
    %2088 = vmatpush.bf16.xpose.msra.mxu0 0
    %2089 = vmatpush.bf16.xpose.msra.mxu0 %v2080
    %2090 = vmatmul.bf16.gmra.mxu0 %v2065
    %v2091 = vpop.f32.mrf.mxu0
    %v2092 = vadd.f32 0.0, %v2091
    %v2093 = vpop.f32.mrf.mxu0
    %v2094 = vadd.f32 0.0, %v2093
    %2095 = vdwg.mxu0
    %v2096 = vmul.f32 %v2092, 0.088388346
    %v2097 = vmul.f32 %v2094, 0.088388346
    %vm2098 = vcmask 130048
    %v2099 = vsel %vm2098, %v2096, -inf
    %2100 = vmax.xlane.f32.xlu0 %v2099
    %v2101 = vpop.xlane.xlu0 %2100
    %v2102 = vsel %vm2098, %v2097, -inf
    %2103 = vmax.xlane.f32.xlu0 %v2102
    %v2104 = vpop.xlane.xlu0 %2103
    %v2105 = vsub.f32 %v2096, %v2101
    %v2106 = vsub.f32 %v2097, %v2104
    %v2107 = vmul.f32 %v2105, 1.442695
    %v2108 = vpow.pop %v2107
    %v2109 = vmul.f32 %v2106, 1.442695
    %v2110 = vpow.pop %v2109
    %v2111 = vsel %vm2098, %v2108, 0.0
    %2112 = vadd.xlane.f32.xlu0 %v2111
    %v2113 = vpop.xlane.xlu0 %2112
    %v2114 = vsel %vm2098, %v2110, 0.0
    %2115 = vadd.xlane.f32.xlu0 %v2114
    %v2116 = vpop.xlane.xlu0 %2115
    %v2117 = vrcp.pop %v2113
    %v2118 = vmul.f32 %v2113, %v2117
    %v2119 = vsub.f32 1.0, %v2118
    %v2120 = vmul.f32 %v2117, %v2119
    %v2121 = vadd.f32 %v2117, %v2120
    %vm2122 = vweird.f32 %v2113
    %vm2123 = vweird.f32 %v2117
    %vm2124 = vmor %vm2122, %vm2123
    %v2125 = vsel %vm2124, %v2117, %v2121
    %v2126 = vand.u32 2147483647, %v2113
    %vm2127 = vcmp.eq.f32.partialorder %v2126, 8.507059e+37
    %v2128 = vand.u32 %v2113, 2147483648
    %v2129 = vor.u32 1.1754944e-38, %v2128
    %v2130 = vsel %vm2127, %v2129, %v2125
    %v2131 = vmul.f32 %v2108, %v2130
    %v2132 = vrcp.pop %v2116
    %v2133 = vmul.f32 %v2116, %v2132
    %v2134 = vsub.f32 1.0, %v2133
    %v2135 = vmul.f32 %v2132, %v2134
    %v2136 = vadd.f32 %v2132, %v2135
    %vm2137 = vweird.f32 %v2116
    %vm2138 = vweird.f32 %v2132
    %vm2139 = vmor %vm2137, %vm2138
    %v2140 = vsel %vm2139, %v2132, %v2136
    %v2141 = vand.u32 2147483647, %v2116
    %vm2142 = vcmp.eq.f32.partialorder %v2141, 8.507059e+37
    %v2143 = vand.u32 %v2116, 2147483648
    %v2144 = vor.u32 1.1754944e-38, %v2143
    %v2145 = vsel %vm2142, %v2144, %v2140
    %v2146 = vmul.f32 %v2110, %v2145
    %v2147 = vpack.c.bf16 %v2146, %v2131
    %v2149 = vsel %vm2098, %v2147, 0
    %2151 = vmatpush.bf16.msra.mxu0 0
    %2152 = vmatpush.bf16.msra.mxu0 0
    %2153 = vmatpush.bf16.msra.mxu0 0
    %2154 = vmatpush.bf16.msra.mxu0 0
    %2155 = vmatpush.bf16.msra.mxu0 0
    %2156 = vmatpush.bf16.msra.mxu0 0
    %2157 = vmatpush.bf16.msra.mxu0 0
    %2158 = vmatpush.bf16.msra.mxu0 %v2081
    %2159 = vmatmul.bf16.gmra.mxu0 %v2149
    %v2160 = vpop.f32.mrf.mxu0
    %v2161 = vadd.f32 0.0, %v2160
    %v2162 = vpop.f32.mrf.mxu0
    %v2163 = vadd.f32 0.0, %v2162
    %2164 = vdwg.mxu0
    %v2165 = vpack.c.bf16 %v2163, %v2161
    %2168 = vrot.lane.b32.xlu0 %v1543, 64
    %v2169 = vpop.permute.xlu0 %2168
    %2170 = vrot.lane.b32.xlu0 %v1545, 64
    %v2171 = vpop.permute.xlu0 %2170
    %v2174 = vmul.f32 %v1543, %v1951
    %v2175 = vmul.f32 %v1545, %v1952
    %v2176 = vmul.f32 %v2169, %v1953
    %v2177 = vmul.f32 %v2171, %v1954
    %v2178 = vadd.f32 %v2174, %v2176
    %v2179 = vadd.f32 %v2175, %v2177
    %v2180 = vpack.c.bf16 %v2179, %v2178
    %2183 = vrot.lane.b32.xlu0 %v1714, 64
    %v2184 = vpop.permute.xlu0 %2183
    %2185 = vrot.lane.b32.xlu0 %v1716, 64
    %v2186 = vpop.permute.xlu0 %2185
    %v2189 = vmul.f32 %v1714, %v1951
    %v2190 = vmul.f32 %v1716, %v1952
    %v2191 = vmul.f32 %v2184, %v1953
    %v2192 = vmul.f32 %v2186, %v1954
    %v2193 = vadd.f32 %v2189, %v2191
    %v2194 = vadd.f32 %v2190, %v2192
    %v2195 = vpack.c.bf16 %v2194, %v2193
    %v2196 = vpack.c.bf16 %v1887, %v1885
    %2197 = vmatpush.bf16.xpose.msra.mxu0 0
    %2198 = vmatpush.bf16.xpose.msra.mxu0 0
    %2199 = vmatpush.bf16.xpose.msra.mxu0 0
    %2200 = vmatpush.bf16.xpose.msra.mxu0 0
    %2201 = vmatpush.bf16.xpose.msra.mxu0 0
    %2202 = vmatpush.bf16.xpose.msra.mxu0 0
    %2203 = vmatpush.bf16.xpose.msra.mxu0 0
    %2204 = vmatpush.bf16.xpose.msra.mxu0 %v2195
    %2205 = vmatmul.bf16.gmra.mxu0 %v2180
    %v2206 = vpop.f32.mrf.mxu0
    %v2207 = vadd.f32 0.0, %v2206
    %v2208 = vpop.f32.mrf.mxu0
    %v2209 = vadd.f32 0.0, %v2208
    %2210 = vdwg.mxu0
    %v2211 = vmul.f32 %v2207, 0.088388346
    %v2212 = vmul.f32 %v2209, 0.088388346
    %v2213 = vsel %vm2098, %v2211, -inf
    %2214 = vmax.xlane.f32.xlu0 %v2213
    %v2215 = vpop.xlane.xlu0 %2214
    %v2216 = vsel %vm2098, %v2212, -inf
    %2217 = vmax.xlane.f32.xlu0 %v2216
    %v2218 = vpop.xlane.xlu0 %2217
    %v2219 = vsub.f32 %v2211, %v2215
    %v2220 = vsub.f32 %v2212, %v2218
    %v2221 = vmul.f32 %v2219, 1.442695
    %v2222 = vpow.pop %v2221
    %v2223 = vmul.f32 %v2220, 1.442695
    %v2224 = vpow.pop %v2223
    %v2225 = vsel %vm2098, %v2222, 0.0
    %2226 = vadd.xlane.f32.xlu0 %v2225
    %v2227 = vpop.xlane.xlu0 %2226
    %v2228 = vsel %vm2098, %v2224, 0.0
    %2229 = vadd.xlane.f32.xlu0 %v2228
    %v2230 = vpop.xlane.xlu0 %2229
    %v2231 = vrcp.pop %v2227
    %v2232 = vmul.f32 %v2227, %v2231
    %v2233 = vsub.f32 1.0, %v2232
    %v2234 = vmul.f32 %v2231, %v2233
    %v2235 = vadd.f32 %v2231, %v2234
    %vm2236 = vweird.f32 %v2227
    %vm2237 = vweird.f32 %v2231
    %vm2238 = vmor %vm2236, %vm2237
    %v2239 = vsel %vm2238, %v2231, %v2235
    %v2240 = vand.u32 2147483647, %v2227
    %vm2241 = vcmp.eq.f32.partialorder %v2240, 8.507059e+37
    %v2242 = vand.u32 %v2227, 2147483648
    %v2243 = vor.u32 1.1754944e-38, %v2242
    %v2244 = vsel %vm2241, %v2243, %v2239
    %v2245 = vmul.f32 %v2222, %v2244
    %v2246 = vrcp.pop %v2230
    %v2247 = vmul.f32 %v2230, %v2246
    %v2248 = vsub.f32 1.0, %v2247
    %v2249 = vmul.f32 %v2246, %v2248
    %v2250 = vadd.f32 %v2246, %v2249
    %vm2251 = vweird.f32 %v2230
    %vm2252 = vweird.f32 %v2246
    %vm2253 = vmor %vm2251, %vm2252
    %v2254 = vsel %vm2253, %v2246, %v2250
    %v2255 = vand.u32 2147483647, %v2230
    %vm2256 = vcmp.eq.f32.partialorder %v2255, 8.507059e+37
    %v2257 = vand.u32 %v2230, 2147483648
    %v2258 = vor.u32 1.1754944e-38, %v2257
    %v2259 = vsel %vm2256, %v2258, %v2254
    %v2260 = vmul.f32 %v2224, %v2259
    %v2261 = vpack.c.bf16 %v2260, %v2245
    %v2263 = vsel %vm2098, %v2261, 0
    %2265 = vmatpush.bf16.msra.mxu0 0
    %2266 = vmatpush.bf16.msra.mxu0 0
    %2267 = vmatpush.bf16.msra.mxu0 0
    %2268 = vmatpush.bf16.msra.mxu0 0
    %2269 = vmatpush.bf16.msra.mxu0 0
    %2270 = vmatpush.bf16.msra.mxu0 0
    %2271 = vmatpush.bf16.msra.mxu0 0
    %2272 = vmatpush.bf16.msra.mxu0 %v2196
    %2273 = vmatmul.bf16.gmra.mxu0 %v2263
    %v2274 = vpop.f32.mrf.mxu0
    %v2275 = vadd.f32 0.0, %v2274
    %v2276 = vpop.f32.mrf.mxu0
    %v2277 = vadd.f32 0.0, %v2276
    %2278 = vdwg.mxu0
    %v2279 = vpack.c.bf16 %v2277, %v2275
    %v2312 = vunpack.c.l.b16 %v1987
    %v2313 = vunpack.c.h.b16 %v1987
    %v2314 = vunpack.c.l.b16 %v1988
    %v2315 = vunpack.c.l.b16 %v1989
    %v2316 = vunpack.c.h.b16 %v1989
    %v2317 = vunpack.c.l.b16 %v1990
    %v2318 = vunpack.c.l.b16 %v1991
    %v2319 = vunpack.c.h.b16 %v1991
    %v2320 = vunpack.c.l.b16 %v1992
    %v2321 = vunpack.c.l.b16 %v1993
    %v2322 = vunpack.c.h.b16 %v1993
    %v2323 = vunpack.c.l.b16 %v1994
    %v2324 = vunpack.c.l.b16 %v1995
    %v2325 = vunpack.c.h.b16 %v1995
    %v2326 = vunpack.c.l.b16 %v1996
    %v2327 = vunpack.c.l.b16 %v1997
    %v2328 = vunpack.c.h.b16 %v1997
    %v2329 = vunpack.c.l.b16 %v1998
    %v2330 = vunpack.c.l.b16 %v1999
    %v2331 = vunpack.c.h.b16 %v1999
    %v2332 = vunpack.c.l.b16 %v2000
    %v2333 = vunpack.c.l.b16 %v2001
    %v2334 = vunpack.c.h.b16 %v2001
    %v2335 = vunpack.c.l.b16 %v2002
    %v2336 = vunpack.c.l.b16 %v2003
    %v2337 = vunpack.c.h.b16 %v2003
    %v2338 = vunpack.c.l.b16 %v2004
    %v2339 = vunpack.c.l.b16 %v2005
    %v2340 = vunpack.c.h.b16 %v2005
    %v2341 = vunpack.c.l.b16 %v2006
    %v2342 = vunpack.c.l.b16 %v2007
    %v2343 = vunpack.c.h.b16 %v2007
    %v2344 = vunpack.c.l.b16 %v2008
    %v2345 = vunpack.c.l.b16 %v2009
    %v2346 = vunpack.c.h.b16 %v2009
    %v2347 = vunpack.c.l.b16 %v2010
    %v2348 = vunpack.c.l.b16 %v2011
    %v2349 = vunpack.c.h.b16 %v2011
    %v2350 = vunpack.c.l.b16 %v2012
    %v2351 = vunpack.c.l.b16 %v2013
    %v2352 = vunpack.c.h.b16 %v2013
    %v2353 = vunpack.c.l.b16 %v2014
    %v2354 = vunpack.c.l.b16 %v2015
    %v2355 = vunpack.c.h.b16 %v2015
    %v2356 = vunpack.c.l.b16 %v2016
    %v2357 = vunpack.c.l.b16 %v2017
    %v2358 = vunpack.c.h.b16 %v2017
    %v2359 = vunpack.c.l.b16 %v2018
    %v2360 = vpack.c.b16 %v2315, %v2312
    %v2361 = vpack.c.b16 %v2316, %v2313
    %v2362 = vpack.c.b16 %v2317, %v2314
    %v2363 = vpack.c.b16 %v2321, %v2318
    %v2364 = vpack.c.b16 %v2322, %v2319
    %v2365 = vpack.c.b16 %v2323, %v2320
    %v2366 = vpack.c.b16 %v2327, %v2324
    %v2367 = vpack.c.b16 %v2328, %v2325
    %v2368 = vpack.c.b16 %v2329, %v2326
    %v2369 = vpack.c.b16 %v2333, %v2330
    %v2370 = vpack.c.b16 %v2334, %v2331
    %v2371 = vpack.c.b16 %v2335, %v2332
    %v2372 = vpack.c.b16 %v2339, %v2336
    %v2373 = vpack.c.b16 %v2340, %v2337
    %v2374 = vpack.c.b16 %v2341, %v2338
    %v2375 = vpack.c.b16 %v2345, %v2342
    %v2376 = vpack.c.b16 %v2346, %v2343
    %v2377 = vpack.c.b16 %v2347, %v2344
    %v2378 = vpack.c.b16 %v2351, %v2348
    %v2379 = vpack.c.b16 %v2352, %v2349
    %v2380 = vpack.c.b16 %v2353, %v2350
    %v2381 = vpack.c.b16 %v2357, %v2354
    %v2382 = vpack.c.b16 %v2358, %v2355
    %v2383 = vpack.c.b16 %v2359, %v2356
    %2408 = vmatpush.bf16.msra.mxu0 %v2381
    %2409 = vmatpush.bf16.msra.mxu0 %v2378
    %2410 = vmatpush.bf16.msra.mxu0 %v2375
    %2411 = vmatpush.bf16.msra.mxu0 %v2372
    %2412 = vmatpush.bf16.msra.mxu0 %v2369
    %2413 = vmatpush.bf16.msra.mxu0 %v2366
    %2414 = vmatpush.bf16.msra.mxu0 %v2363
    %2415 = vmatpush.bf16.msra.mxu0 %v2360
    %2416 = vmatmul.bf16.gmra.mxu0 %v2279
    %v2417 = vpop.f32.mrf.mxu0
    %v2418 = vadd.f32 0.0, %v2417
    %v2419 = vpop.f32.mrf.mxu0
    %v2420 = vadd.f32 0.0, %v2419
    %2421 = vdwg.mxu0
    %2422 = vmatpush.bf16.msra.mxu0 %v2382
    %2423 = vmatpush.bf16.msra.mxu0 %v2379
    %2424 = vmatpush.bf16.msra.mxu0 %v2376
    %2425 = vmatpush.bf16.msra.mxu0 %v2373
    %2426 = vmatpush.bf16.msra.mxu0 %v2370
    %2427 = vmatpush.bf16.msra.mxu0 %v2367
    %2428 = vmatpush.bf16.msra.mxu0 %v2364
    %2429 = vmatpush.bf16.msra.mxu0 %v2361
    %2430 = vmatmul.bf16.gmra.mxu0 %v2279
    %v2431 = vpop.f32.mrf.mxu0
    %v2432 = vadd.f32 0.0, %v2431
    %v2433 = vpop.f32.mrf.mxu0
    %v2434 = vadd.f32 0.0, %v2433
    %2435 = vdwg.mxu0
    %2436 = vmatpush.bf16.msra.mxu0 %v2383
    %2437 = vmatpush.bf16.msra.mxu0 %v2380
    %2438 = vmatpush.bf16.msra.mxu0 %v2377
    %2439 = vmatpush.bf16.msra.mxu0 %v2374
    %2440 = vmatpush.bf16.msra.mxu0 %v2371
    %2441 = vmatpush.bf16.msra.mxu0 %v2368
    %2442 = vmatpush.bf16.msra.mxu0 %v2365
    %2443 = vmatpush.bf16.msra.mxu0 %v2362
    %2444 = vmatmul.bf16.gmra.mxu0 %v2279
    %v2445 = vpop.f32.mrf.mxu0
    %v2446 = vadd.f32 0.0, %v2445
    %v2447 = vpop.f32.mrf.mxu0
    %v2448 = vadd.f32 0.0, %v2447
    %2449 = vdwg.mxu0
    %v2482 = vunpack.c.l.b16 %v1955
    %v2483 = vunpack.c.h.b16 %v1955
    %v2484 = vunpack.c.l.b16 %v1956
    %v2485 = vunpack.c.l.b16 %v1957
    %v2486 = vunpack.c.h.b16 %v1957
    %v2487 = vunpack.c.l.b16 %v1958
    %v2488 = vunpack.c.l.b16 %v1959
    %v2489 = vunpack.c.h.b16 %v1959
    %v2490 = vunpack.c.l.b16 %v1960
    %v2491 = vunpack.c.l.b16 %v1961
    %v2492 = vunpack.c.h.b16 %v1961
    %v2493 = vunpack.c.l.b16 %v1962
    %v2494 = vunpack.c.l.b16 %v1963
    %v2495 = vunpack.c.h.b16 %v1963
    %v2496 = vunpack.c.l.b16 %v1964
    %v2497 = vunpack.c.l.b16 %v1965
    %v2498 = vunpack.c.h.b16 %v1965
    %v2499 = vunpack.c.l.b16 %v1966
    %v2500 = vunpack.c.l.b16 %v1967
    %v2501 = vunpack.c.h.b16 %v1967
    %v2502 = vunpack.c.l.b16 %v1968
    %v2503 = vunpack.c.l.b16 %v1969
    %v2504 = vunpack.c.h.b16 %v1969
    %v2505 = vunpack.c.l.b16 %v1970
    %v2506 = vunpack.c.l.b16 %v1971
    %v2507 = vunpack.c.h.b16 %v1971
    %v2508 = vunpack.c.l.b16 %v1972
    %v2509 = vunpack.c.l.b16 %v1973
    %v2510 = vunpack.c.h.b16 %v1973
    %v2511 = vunpack.c.l.b16 %v1974
    %v2512 = vunpack.c.l.b16 %v1975
    %v2513 = vunpack.c.h.b16 %v1975
    %v2514 = vunpack.c.l.b16 %v1976
    %v2515 = vunpack.c.l.b16 %v1977
    %v2516 = vunpack.c.h.b16 %v1977
    %v2517 = vunpack.c.l.b16 %v1978
    %v2518 = vunpack.c.l.b16 %v1979
    %v2519 = vunpack.c.h.b16 %v1979
    %v2520 = vunpack.c.l.b16 %v1980
    %v2521 = vunpack.c.l.b16 %v1981
    %v2522 = vunpack.c.h.b16 %v1981
    %v2523 = vunpack.c.l.b16 %v1982
    %v2524 = vunpack.c.l.b16 %v1983
    %v2525 = vunpack.c.h.b16 %v1983
    %v2526 = vunpack.c.l.b16 %v1984
    %v2527 = vunpack.c.l.b16 %v1985
    %v2528 = vunpack.c.h.b16 %v1985
    %v2529 = vunpack.c.l.b16 %v1986
    %v2530 = vpack.c.b16 %v2485, %v2482
    %v2531 = vpack.c.b16 %v2486, %v2483
    %v2532 = vpack.c.b16 %v2487, %v2484
    %v2533 = vpack.c.b16 %v2491, %v2488
    %v2534 = vpack.c.b16 %v2492, %v2489
    %v2535 = vpack.c.b16 %v2493, %v2490
    %v2536 = vpack.c.b16 %v2497, %v2494
    %v2537 = vpack.c.b16 %v2498, %v2495
    %v2538 = vpack.c.b16 %v2499, %v2496
    %v2539 = vpack.c.b16 %v2503, %v2500
    %v2540 = vpack.c.b16 %v2504, %v2501
    %v2541 = vpack.c.b16 %v2505, %v2502
    %v2542 = vpack.c.b16 %v2509, %v2506
    %v2543 = vpack.c.b16 %v2510, %v2507
    %v2544 = vpack.c.b16 %v2511, %v2508
    %v2545 = vpack.c.b16 %v2515, %v2512
    %v2546 = vpack.c.b16 %v2516, %v2513
    %v2547 = vpack.c.b16 %v2517, %v2514
    %v2548 = vpack.c.b16 %v2521, %v2518
    %v2549 = vpack.c.b16 %v2522, %v2519
    %v2550 = vpack.c.b16 %v2523, %v2520
    %v2551 = vpack.c.b16 %v2527, %v2524
    %v2552 = vpack.c.b16 %v2528, %v2525
    %v2553 = vpack.c.b16 %v2529, %v2526
    %2578 = vmatpush.bf16.msra.mxu0 %v2551
    %2579 = vmatpush.bf16.msra.mxu0 %v2548
    %2580 = vmatpush.bf16.msra.mxu0 %v2545
    %2581 = vmatpush.bf16.msra.mxu0 %v2542
    %2582 = vmatpush.bf16.msra.mxu0 %v2539
    %2583 = vmatpush.bf16.msra.mxu0 %v2536
    %2584 = vmatpush.bf16.msra.mxu0 %v2533
    %2585 = vmatpush.bf16.msra.mxu0 %v2530
    %2586 = vmatmul.bf16.gmra.mxu0 %v2165
    %v2587 = vpop.f32.mrf.mxu0
    %v2588 = vadd.f32 %v2418, %v2587
    %v2589 = vpop.f32.mrf.mxu0
    %v2590 = vadd.f32 %v2420, %v2589
    %2591 = vdwg.mxu0
    %2592 = vmatpush.bf16.msra.mxu0 %v2552
    %2593 = vmatpush.bf16.msra.mxu0 %v2549
    %2594 = vmatpush.bf16.msra.mxu0 %v2546
    %2595 = vmatpush.bf16.msra.mxu0 %v2543
    %2596 = vmatpush.bf16.msra.mxu0 %v2540
    %2597 = vmatpush.bf16.msra.mxu0 %v2537
    %2598 = vmatpush.bf16.msra.mxu0 %v2534
    %2599 = vmatpush.bf16.msra.mxu0 %v2531
    %2600 = vmatmul.bf16.gmra.mxu0 %v2165
    %v2601 = vpop.f32.mrf.mxu0
    %v2602 = vadd.f32 %v2432, %v2601
    %v2603 = vpop.f32.mrf.mxu0
    %v2604 = vadd.f32 %v2434, %v2603
    %2605 = vdwg.mxu0
    %2606 = vmatpush.bf16.msra.mxu0 %v2553
    %2607 = vmatpush.bf16.msra.mxu0 %v2550
    %2608 = vmatpush.bf16.msra.mxu0 %v2547
    %2609 = vmatpush.bf16.msra.mxu0 %v2544
    %2610 = vmatpush.bf16.msra.mxu0 %v2541
    %2611 = vmatpush.bf16.msra.mxu0 %v2538
    %2612 = vmatpush.bf16.msra.mxu0 %v2535
    %2613 = vmatpush.bf16.msra.mxu0 %v2532
    %2614 = vmatmul.bf16.gmra.mxu0 %v2165
    %v2615 = vpop.f32.mrf.mxu0
    %v2616 = vadd.f32 %v2446, %v2615
    %v2617 = vpop.f32.mrf.mxu0
    %v2618 = vadd.f32 %v2448, %v2617
    %2619 = vdwg.mxu0
    %2622 = vrot.lane.b32.xlu0 %v1600, 64
    %v2623 = vpop.permute.xlu0 %2622
    %2624 = vrot.lane.b32.xlu0 %v1602, 64
    %v2625 = vpop.permute.xlu0 %2624
    %v2628 = vmul.f32 %v1600, %v1951
    %v2629 = vmul.f32 %v1602, %v1952
    %v2630 = vmul.f32 %v2623, %v1953
    %v2631 = vmul.f32 %v2625, %v1954
    %v2632 = vadd.f32 %v2628, %v2630
    %v2633 = vadd.f32 %v2629, %v2631
    %v2634 = vpack.c.bf16 %v2633, %v2632
    %2637 = vrot.lane.b32.xlu0 %v1771, 64
    %v2638 = vpop.permute.xlu0 %2637
    %2639 = vrot.lane.b32.xlu0 %v1773, 64
    %v2640 = vpop.permute.xlu0 %2639
    %v2643 = vmul.f32 %v1771, %v1951
    %v2644 = vmul.f32 %v1773, %v1952
    %v2645 = vmul.f32 %v2638, %v1953
    %v2646 = vmul.f32 %v2640, %v1954
    %v2647 = vadd.f32 %v2643, %v2645
    %v2648 = vadd.f32 %v2644, %v2646
    %v2649 = vpack.c.bf16 %v2648, %v2647
    %v2650 = vpack.c.bf16 %v1944, %v1942
    %2651 = vmatpush.bf16.xpose.msra.mxu0 0
    %2652 = vmatpush.bf16.xpose.msra.mxu0 0
    %2653 = vmatpush.bf16.xpose.msra.mxu0 0
    %2654 = vmatpush.bf16.xpose.msra.mxu0 0
    %2655 = vmatpush.bf16.xpose.msra.mxu0 0
    %2656 = vmatpush.bf16.xpose.msra.mxu0 0
    %2657 = vmatpush.bf16.xpose.msra.mxu0 0
    %2658 = vmatpush.bf16.xpose.msra.mxu0 %v2649
    %2659 = vmatmul.bf16.gmra.mxu0 %v2634
    %v2660 = vpop.f32.mrf.mxu0
    %v2661 = vadd.f32 0.0, %v2660
    %v2662 = vpop.f32.mrf.mxu0
    %v2663 = vadd.f32 0.0, %v2662
    %2664 = vdwg.mxu0
    %v2665 = vmul.f32 %v2661, 0.088388346
    %v2666 = vmul.f32 %v2663, 0.088388346
    %v2667 = vsel %vm2098, %v2665, -inf
    %2668 = vmax.xlane.f32.xlu0 %v2667
    %v2669 = vpop.xlane.xlu0 %2668
    %v2670 = vsel %vm2098, %v2666, -inf
    %2671 = vmax.xlane.f32.xlu0 %v2670
    %v2672 = vpop.xlane.xlu0 %2671
    %v2673 = vsub.f32 %v2665, %v2669
    %v2674 = vsub.f32 %v2666, %v2672
    %v2675 = vmul.f32 %v2673, 1.442695
    %v2676 = vpow.pop %v2675
    %v2677 = vmul.f32 %v2674, 1.442695
    %v2678 = vpow.pop %v2677
    %v2679 = vsel %vm2098, %v2676, 0.0
    %2680 = vadd.xlane.f32.xlu0 %v2679
    %v2681 = vpop.xlane.xlu0 %2680
    %v2682 = vsel %vm2098, %v2678, 0.0
    %2683 = vadd.xlane.f32.xlu0 %v2682
    %v2684 = vpop.xlane.xlu0 %2683
    %v2685 = vrcp.pop %v2681
    %v2686 = vmul.f32 %v2681, %v2685
    %v2687 = vsub.f32 1.0, %v2686
    %v2688 = vmul.f32 %v2685, %v2687
    %v2689 = vadd.f32 %v2685, %v2688
    %vm2690 = vweird.f32 %v2681
    %vm2691 = vweird.f32 %v2685
    %vm2692 = vmor %vm2690, %vm2691
    %v2693 = vsel %vm2692, %v2685, %v2689
    %v2694 = vand.u32 2147483647, %v2681
    %vm2695 = vcmp.eq.f32.partialorder %v2694, 8.507059e+37
    %v2696 = vand.u32 %v2681, 2147483648
    %v2697 = vor.u32 1.1754944e-38, %v2696
    %v2698 = vsel %vm2695, %v2697, %v2693
    %v2699 = vmul.f32 %v2676, %v2698
    %v2700 = vrcp.pop %v2684
    %v2701 = vmul.f32 %v2684, %v2700
    %v2702 = vsub.f32 1.0, %v2701
    %v2703 = vmul.f32 %v2700, %v2702
    %v2704 = vadd.f32 %v2700, %v2703
    %vm2705 = vweird.f32 %v2684
    %vm2706 = vweird.f32 %v2700
    %vm2707 = vmor %vm2705, %vm2706
    %v2708 = vsel %vm2707, %v2700, %v2704
    %v2709 = vand.u32 2147483647, %v2684
    %vm2710 = vcmp.eq.f32.partialorder %v2709, 8.507059e+37
    %v2711 = vand.u32 %v2684, 2147483648
    %v2712 = vor.u32 1.1754944e-38, %v2711
    %v2713 = vsel %vm2710, %v2712, %v2708
    %v2714 = vmul.f32 %v2678, %v2713
    %v2715 = vpack.c.bf16 %v2714, %v2699
    %v2717 = vsel %vm2098, %v2715, 0
    %2719 = vmatpush.bf16.msra.mxu0 0
    %2720 = vmatpush.bf16.msra.mxu0 0
    %2721 = vmatpush.bf16.msra.mxu0 0
    %2722 = vmatpush.bf16.msra.mxu0 0
    %2723 = vmatpush.bf16.msra.mxu0 0
    %2724 = vmatpush.bf16.msra.mxu0 0
    %2725 = vmatpush.bf16.msra.mxu0 0
    %2726 = vmatpush.bf16.msra.mxu0 %v2650
    %2727 = vmatmul.bf16.gmra.mxu0 %v2717
    %v2728 = vpop.f32.mrf.mxu0
    %v2729 = vadd.f32 0.0, %v2728
    %v2730 = vpop.f32.mrf.mxu0
    %v2731 = vadd.f32 0.0, %v2730
    %2732 = vdwg.mxu0
    %v2733 = vpack.c.bf16 %v2731, %v2729
    %v2766 = vunpack.c.l.b16 %v2019
    %v2767 = vunpack.c.h.b16 %v2019
    %v2768 = vunpack.c.l.b16 %v2020
    %v2769 = vunpack.c.l.b16 %v2021
    %v2770 = vunpack.c.h.b16 %v2021
    %v2771 = vunpack.c.l.b16 %v2022
    %v2772 = vunpack.c.l.b16 %v2023
    %v2773 = vunpack.c.h.b16 %v2023
    %v2774 = vunpack.c.l.b16 %v2024
    %v2775 = vunpack.c.l.b16 %v2025
    %v2776 = vunpack.c.h.b16 %v2025
    %v2777 = vunpack.c.l.b16 %v2026
    %v2778 = vunpack.c.l.b16 %v2027
    %v2779 = vunpack.c.h.b16 %v2027
    %v2780 = vunpack.c.l.b16 %v2028
    %v2781 = vunpack.c.l.b16 %v2029
    %v2782 = vunpack.c.h.b16 %v2029
    %v2783 = vunpack.c.l.b16 %v2030
    %v2784 = vunpack.c.l.b16 %v2031
    %v2785 = vunpack.c.h.b16 %v2031
    %v2786 = vunpack.c.l.b16 %v2032
    %v2787 = vunpack.c.l.b16 %v2033
    %v2788 = vunpack.c.h.b16 %v2033
    %v2789 = vunpack.c.l.b16 %v2034
    %v2790 = vunpack.c.l.b16 %v2035
    %v2791 = vunpack.c.h.b16 %v2035
    %v2792 = vunpack.c.l.b16 %v2036
    %v2793 = vunpack.c.l.b16 %v2037
    %v2794 = vunpack.c.h.b16 %v2037
    %v2795 = vunpack.c.l.b16 %v2038
    %v2796 = vunpack.c.l.b16 %v2039
    %v2797 = vunpack.c.h.b16 %v2039
    %v2798 = vunpack.c.l.b16 %v2040
    %v2799 = vunpack.c.l.b16 %v2041
    %v2800 = vunpack.c.h.b16 %v2041
    %v2801 = vunpack.c.l.b16 %v2042
    %v2802 = vunpack.c.l.b16 %v2043
    %v2803 = vunpack.c.h.b16 %v2043
    %v2804 = vunpack.c.l.b16 %v2044
    %v2805 = vunpack.c.l.b16 %v2045
    %v2806 = vunpack.c.h.b16 %v2045
    %v2807 = vunpack.c.l.b16 %v2046
    %v2808 = vunpack.c.l.b16 %v2047
    %v2809 = vunpack.c.h.b16 %v2047
    %v2810 = vunpack.c.l.b16 %v2048
    %v2811 = vunpack.c.l.b16 %v2049
    %v2812 = vunpack.c.h.b16 %v2049
    %v2813 = vunpack.c.l.b16 %v2050
    %v2814 = vpack.c.b16 %v2769, %v2766
    %v2815 = vpack.c.b16 %v2770, %v2767
    %v2816 = vpack.c.b16 %v2771, %v2768
    %v2817 = vpack.c.b16 %v2775, %v2772
    %v2818 = vpack.c.b16 %v2776, %v2773
    %v2819 = vpack.c.b16 %v2777, %v2774
    %v2820 = vpack.c.b16 %v2781, %v2778
    %v2821 = vpack.c.b16 %v2782, %v2779
    %v2822 = vpack.c.b16 %v2783, %v2780
    %v2823 = vpack.c.b16 %v2787, %v2784
    %v2824 = vpack.c.b16 %v2788, %v2785
    %v2825 = vpack.c.b16 %v2789, %v2786
    %v2826 = vpack.c.b16 %v2793, %v2790
    %v2827 = vpack.c.b16 %v2794, %v2791
    %v2828 = vpack.c.b16 %v2795, %v2792
    %v2829 = vpack.c.b16 %v2799, %v2796
    %v2830 = vpack.c.b16 %v2800, %v2797
    %v2831 = vpack.c.b16 %v2801, %v2798
    %v2832 = vpack.c.b16 %v2805, %v2802
    %v2833 = vpack.c.b16 %v2806, %v2803
    %v2834 = vpack.c.b16 %v2807, %v2804
    %v2835 = vpack.c.b16 %v2811, %v2808
    %v2836 = vpack.c.b16 %v2812, %v2809
    %v2837 = vpack.c.b16 %v2813, %v2810
    %2862 = vmatpush.bf16.msra.mxu0 %v2835
    %2863 = vmatpush.bf16.msra.mxu0 %v2832
    %2864 = vmatpush.bf16.msra.mxu0 %v2829
    %2865 = vmatpush.bf16.msra.mxu0 %v2826
    %2866 = vmatpush.bf16.msra.mxu0 %v2823
    %2867 = vmatpush.bf16.msra.mxu0 %v2820
    %2868 = vmatpush.bf16.msra.mxu0 %v2817
    %2869 = vmatpush.bf16.msra.mxu0 %v2814
    %2870 = vmatmul.bf16.gmra.mxu0 %v2733
    %v2871 = vpop.f32.mrf.mxu0
    %v2872 = vadd.f32 0.0, %v2871
    %v2873 = vpop.f32.mrf.mxu0
    %v2874 = vadd.f32 0.0, %v2873
    %2875 = vdwg.mxu0
    %2876 = vmatpush.bf16.msra.mxu0 %v2836
    %2877 = vmatpush.bf16.msra.mxu0 %v2833
    %2878 = vmatpush.bf16.msra.mxu0 %v2830
    %2879 = vmatpush.bf16.msra.mxu0 %v2827
    %2880 = vmatpush.bf16.msra.mxu0 %v2824
    %2881 = vmatpush.bf16.msra.mxu0 %v2821
    %2882 = vmatpush.bf16.msra.mxu0 %v2818
    %2883 = vmatpush.bf16.msra.mxu0 %v2815
    %2884 = vmatmul.bf16.gmra.mxu0 %v2733
    %v2885 = vpop.f32.mrf.mxu0
    %v2886 = vadd.f32 0.0, %v2885
    %v2887 = vpop.f32.mrf.mxu0
    %v2888 = vadd.f32 0.0, %v2887
    %2889 = vdwg.mxu0
    %2890 = vmatpush.bf16.msra.mxu0 %v2837
    %2891 = vmatpush.bf16.msra.mxu0 %v2834
    %2892 = vmatpush.bf16.msra.mxu0 %v2831
    %2893 = vmatpush.bf16.msra.mxu0 %v2828
    %2894 = vmatpush.bf16.msra.mxu0 %v2825
    %2895 = vmatpush.bf16.msra.mxu0 %v2822
    %2896 = vmatpush.bf16.msra.mxu0 %v2819
    %2897 = vmatpush.bf16.msra.mxu0 %v2816
    %2898 = vmatmul.bf16.gmra.mxu0 %v2733
    %v2899 = vpop.f32.mrf.mxu0
    %v2900 = vadd.f32 0.0, %v2899
    %v2901 = vpop.f32.mrf.mxu0
    %v2902 = vadd.f32 0.0, %v2901
    %2903 = vdwg.mxu0
    %v2904 = vadd.f32 %v2588, %v2872
    %v2905 = vadd.f32 %v2602, %v2886
    %v2906 = vadd.f32 %v2616, %v2900
    %v2907 = vadd.f32 %v2590, %v2874
    %v2908 = vadd.f32 %v2604, %v2888
    %v2909 = vadd.f32 %v2618, %v2902
    %2910 = vst [vmem:[#allocation7] sm:$0xff] %v2904
    %2911 = vst [vmem:[#allocation7 + $0x8] sm:$0xff] %v2905
    %2912 = vst [vmem:[#allocation7 + $0x10] sm:$0xff] %v2906
    %2913 = vst [vmem:[#allocation7 + $0x18] sm:$0xff] %v2907
    %2914 = vst [vmem:[#allocation7 + $0x20] sm:$0xff] %v2908
    %2915 = vst [vmem:[#allocation7 + $0x28] sm:$0xff] %v2909
    %2918 = vrot.lane.b32.xlu0 %v1491, 64
    %v2919 = vpop.permute.xlu0 %2918
    %2920 = vrot.lane.b32.xlu0 %v1493, 64
    %v2921 = vpop.permute.xlu0 %2920
    %v2924 = vmul.f32 %v1491, %v1951
    %v2925 = vmul.f32 %v1493, %v1952
    %v2926 = vmul.f32 %v2919, %v1953
    %v2927 = vmul.f32 %v2921, %v1954
    %v2928 = vadd.f32 %v2924, %v2926
    %v2929 = vadd.f32 %v2925, %v2927
    %v2930 = vpack.c.bf16 %v2929, %v2928
    %2933 = vrot.lane.b32.xlu0 %v1662, 64
    %v2934 = vpop.permute.xlu0 %2933
    %2935 = vrot.lane.b32.xlu0 %v1664, 64
    %v2936 = vpop.permute.xlu0 %2935
    %v2939 = vmul.f32 %v1662, %v1951
    %v2940 = vmul.f32 %v1664, %v1952
    %v2941 = vmul.f32 %v2934, %v1953
    %v2942 = vmul.f32 %v2936, %v1954
    %v2943 = vadd.f32 %v2939, %v2941
    %v2944 = vadd.f32 %v2940, %v2942
    %v2945 = vpack.c.bf16 %v2944, %v2943
    %v2946 = vpack.c.bf16 %v1835, %v1833
    %2947 = vmatpush.bf16.xpose.msra.mxu0 0
    %2948 = vmatpush.bf16.xpose.msra.mxu0 0
    %2949 = vmatpush.bf16.xpose.msra.mxu0 0
    %2950 = vmatpush.bf16.xpose.msra.mxu0 0
    %2951 = vmatpush.bf16.xpose.msra.mxu0 0
    %2952 = vmatpush.bf16.xpose.msra.mxu0 0
    %2953 = vmatpush.bf16.xpose.msra.mxu0 0
    %2954 = vmatpush.bf16.xpose.msra.mxu0 %v2945
    %2955 = vmatmul.bf16.gmra.mxu0 %v2930
    %v2956 = vpop.f32.mrf.mxu0
    %v2957 = vadd.f32 0.0, %v2956
    %v2958 = vpop.f32.mrf.mxu0
    %v2959 = vadd.f32 0.0, %v2958
    %2960 = vdwg.mxu0
    %v2961 = vmul.f32 %v2957, 0.088388346
    %v2962 = vmul.f32 %v2959, 0.088388346
    %v2963 = vsel %vm2098, %v2961, -inf
    %2964 = vmax.xlane.f32.xlu0 %v2963
    %v2965 = vpop.xlane.xlu0 %2964
    %v2966 = vsel %vm2098, %v2962, -inf
    %2967 = vmax.xlane.f32.xlu0 %v2966
    %v2968 = vpop.xlane.xlu0 %2967
    %v2969 = vsub.f32 %v2961, %v2965
    %v2970 = vsub.f32 %v2962, %v2968
    %v2971 = vmul.f32 %v2969, 1.442695
    %v2972 = vpow.pop %v2971
    %v2973 = vmul.f32 %v2970, 1.442695
    %v2974 = vpow.pop %v2973
    %v2975 = vsel %vm2098, %v2972, 0.0
    %2976 = vadd.xlane.f32.xlu0 %v2975
    %v2977 = vpop.xlane.xlu0 %2976
    %v2978 = vsel %vm2098, %v2974, 0.0
    %2979 = vadd.xlane.f32.xlu0 %v2978
    %v2980 = vpop.xlane.xlu0 %2979
    %v2981 = vrcp.pop %v2977
    %v2982 = vmul.f32 %v2977, %v2981
    %v2983 = vsub.f32 1.0, %v2982
    %v2984 = vmul.f32 %v2981, %v2983
    %v2985 = vadd.f32 %v2981, %v2984
    %vm2986 = vweird.f32 %v2977
    %vm2987 = vweird.f32 %v2981
    %vm2988 = vmor %vm2986, %vm2987
    %v2989 = vsel %vm2988, %v2981, %v2985
    %v2990 = vand.u32 2147483647, %v2977
    %vm2991 = vcmp.eq.f32.partialorder %v2990, 8.507059e+37
    %v2992 = vand.u32 %v2977, 2147483648
    %v2993 = vor.u32 1.1754944e-38, %v2992
    %v2994 = vsel %vm2991, %v2993, %v2989
    %v2995 = vmul.f32 %v2972, %v2994
    %v2996 = vrcp.pop %v2980
    %v2997 = vmul.f32 %v2980, %v2996
    %v2998 = vsub.f32 1.0, %v2997
    %v2999 = vmul.f32 %v2996, %v2998
    %v3000 = vadd.f32 %v2996, %v2999
    %vm3001 = vweird.f32 %v2980
    %vm3002 = vweird.f32 %v2996
    %vm3003 = vmor %vm3001, %vm3002
    %v3004 = vsel %vm3003, %v2996, %v3000
    %v3005 = vand.u32 2147483647, %v2980
    %vm3006 = vcmp.eq.f32.partialorder %v3005, 8.507059e+37
    %v3007 = vand.u32 %v2980, 2147483648
    %v3008 = vor.u32 1.1754944e-38, %v3007
    %v3009 = vsel %vm3006, %v3008, %v3004
    %v3010 = vmul.f32 %v2974, %v3009
    %v3011 = vpack.c.bf16 %v3010, %v2995
    %v3013 = vsel %vm2098, %v3011, 0
    %3015 = vmatpush.bf16.msra.mxu0 0
    %3016 = vmatpush.bf16.msra.mxu0 0
    %3017 = vmatpush.bf16.msra.mxu0 0
    %3018 = vmatpush.bf16.msra.mxu0 0
    %3019 = vmatpush.bf16.msra.mxu0 0
    %3020 = vmatpush.bf16.msra.mxu0 0
    %3021 = vmatpush.bf16.msra.mxu0 0
    %3022 = vmatpush.bf16.msra.mxu0 %v2946
    %3023 = vmatmul.bf16.gmra.mxu0 %v3013
    %v3024 = vpop.f32.mrf.mxu0
    %v3025 = vadd.f32 0.0, %v3024
    %v3026 = vpop.f32.mrf.mxu0
    %v3027 = vadd.f32 0.0, %v3026
    %3028 = vdwg.mxu0
    %v3029 = vpack.c.bf16 %v3027, %v3025
    %3032 = vrot.lane.b32.xlu0 %v1548, 64
    %v3033 = vpop.permute.xlu0 %3032
    %3034 = vrot.lane.b32.xlu0 %v1550, 64
    %v3035 = vpop.permute.xlu0 %3034
    %v3038 = vmul.f32 %v1548, %v1951
    %v3039 = vmul.f32 %v1550, %v1952
    %v3040 = vmul.f32 %v3033, %v1953
    %v3041 = vmul.f32 %v3035, %v1954
    %v3042 = vadd.f32 %v3038, %v3040
    %v3043 = vadd.f32 %v3039, %v3041
    %v3044 = vpack.c.bf16 %v3043, %v3042
    %3047 = vrot.lane.b32.xlu0 %v1719, 64
    %v3048 = vpop.permute.xlu0 %3047
    %3049 = vrot.lane.b32.xlu0 %v1721, 64
    %v3050 = vpop.permute.xlu0 %3049
    %v3053 = vmul.f32 %v1719, %v1951
    %v3054 = vmul.f32 %v1721, %v1952
    %v3055 = vmul.f32 %v3048, %v1953
    %v3056 = vmul.f32 %v3050, %v1954
    %v3057 = vadd.f32 %v3053, %v3055
    %v3058 = vadd.f32 %v3054, %v3056
    %v3059 = vpack.c.bf16 %v3058, %v3057
    %v3060 = vpack.c.bf16 %v1892, %v1890
    %3061 = vmatpush.bf16.xpose.msra.mxu0 0
    %3062 = vmatpush.bf16.xpose.msra.mxu0 0
    %3063 = vmatpush.bf16.xpose.msra.mxu0 0
    %3064 = vmatpush.bf16.xpose.msra.mxu0 0
    %3065 = vmatpush.bf16.xpose.msra.mxu0 0
    %3066 = vmatpush.bf16.xpose.msra.mxu0 0
    %3067 = vmatpush.bf16.xpose.msra.mxu0 0
    %3068 = vmatpush.bf16.xpose.msra.mxu0 %v3059
    %3069 = vmatmul.bf16.gmra.mxu0 %v3044
    %v3070 = vpop.f32.mrf.mxu0
    %v3071 = vadd.f32 0.0, %v3070
    %v3072 = vpop.f32.mrf.mxu0
    %v3073 = vadd.f32 0.0, %v3072
    %3074 = vdwg.mxu0
    %v3075 = vmul.f32 %v3071, 0.088388346
    %v3076 = vmul.f32 %v3073, 0.088388346
    %v3077 = vsel %vm2098, %v3075, -inf
    %3078 = vmax.xlane.f32.xlu0 %v3077
    %v3079 = vpop.xlane.xlu0 %3078
    %v3080 = vsel %vm2098, %v3076, -inf
    %3081 = vmax.xlane.f32.xlu0 %v3080
    %v3082 = vpop.xlane.xlu0 %3081
    %v3083 = vsub.f32 %v3075, %v3079
    %v3084 = vsub.f32 %v3076, %v3082
    %v3085 = vmul.f32 %v3083, 1.442695
    %v3086 = vpow.pop %v3085
    %v3087 = vmul.f32 %v3084, 1.442695
    %v3088 = vpow.pop %v3087
    %v3089 = vsel %vm2098, %v3086, 0.0
    %3090 = vadd.xlane.f32.xlu0 %v3089
    %v3091 = vpop.xlane.xlu0 %3090
    %v3092 = vsel %vm2098, %v3088, 0.0
    %3093 = vadd.xlane.f32.xlu0 %v3092
    %v3094 = vpop.xlane.xlu0 %3093
    %v3095 = vrcp.pop %v3091
    %v3096 = vmul.f32 %v3091, %v3095
    %v3097 = vsub.f32 1.0, %v3096
    %v3098 = vmul.f32 %v3095, %v3097
    %v3099 = vadd.f32 %v3095, %v3098
    %vm3100 = vweird.f32 %v3091
    %vm3101 = vweird.f32 %v3095
    %vm3102 = vmor %vm3100, %vm3101
    %v3103 = vsel %vm3102, %v3095, %v3099
    %v3104 = vand.u32 2147483647, %v3091
    %vm3105 = vcmp.eq.f32.partialorder %v3104, 8.507059e+37
    %v3106 = vand.u32 %v3091, 2147483648
    %v3107 = vor.u32 1.1754944e-38, %v3106
    %v3108 = vsel %vm3105, %v3107, %v3103
    %v3109 = vmul.f32 %v3086, %v3108
    %v3110 = vrcp.pop %v3094
    %v3111 = vmul.f32 %v3094, %v3110
    %v3112 = vsub.f32 1.0, %v3111
    %v3113 = vmul.f32 %v3110, %v3112
    %v3114 = vadd.f32 %v3110, %v3113
    %vm3115 = vweird.f32 %v3094
    %vm3116 = vweird.f32 %v3110
    %vm3117 = vmor %vm3115, %vm3116
    %v3118 = vsel %vm3117, %v3110, %v3114
    %v3119 = vand.u32 2147483647, %v3094
    %vm3120 = vcmp.eq.f32.partialorder %v3119, 8.507059e+37
    %v3121 = vand.u32 %v3094, 2147483648
    %v3122 = vor.u32 1.1754944e-38, %v3121
    %v3123 = vsel %vm3120, %v3122, %v3118
    %v3124 = vmul.f32 %v3088, %v3123
    %v3125 = vpack.c.bf16 %v3124, %v3109
    %v3127 = vsel %vm2098, %v3125, 0
    %3129 = vmatpush.bf16.msra.mxu0 0
    %3130 = vmatpush.bf16.msra.mxu0 0
    %3131 = vmatpush.bf16.msra.mxu0 0
    %3132 = vmatpush.bf16.msra.mxu0 0
    %3133 = vmatpush.bf16.msra.mxu0 0
    %3134 = vmatpush.bf16.msra.mxu0 0
    %3135 = vmatpush.bf16.msra.mxu0 0
    %3136 = vmatpush.bf16.msra.mxu0 %v3060
    %3137 = vmatmul.bf16.gmra.mxu0 %v3127
    %v3138 = vpop.f32.mrf.mxu0
    %v3139 = vadd.f32 0.0, %v3138
    %v3140 = vpop.f32.mrf.mxu0
    %v3141 = vadd.f32 0.0, %v3140
    %3142 = vdwg.mxu0
    %v3143 = vpack.c.bf16 %v3141, %v3139
    %3144 = vmatpush.bf16.msra.mxu0 %v2381
    %3145 = vmatpush.bf16.msra.mxu0 %v2378
    %3146 = vmatpush.bf16.msra.mxu0 %v2375
    %3147 = vmatpush.bf16.msra.mxu0 %v2372
    %3148 = vmatpush.bf16.msra.mxu0 %v2369
    %3149 = vmatpush.bf16.msra.mxu0 %v2366
    %3150 = vmatpush.bf16.msra.mxu0 %v2363
    %3151 = vmatpush.bf16.msra.mxu0 %v2360
    %3152 = vmatmul.bf16.gmra.mxu0 %v3143
    %v3153 = vpop.f32.mrf.mxu0
    %v3154 = vadd.f32 0.0, %v3153
    %v3155 = vpop.f32.mrf.mxu0
    %v3156 = vadd.f32 0.0, %v3155
    %3157 = vdwg.mxu0
    %3158 = vmatpush.bf16.msra.mxu0 %v2382
    %3159 = vmatpush.bf16.msra.mxu0 %v2379
    %3160 = vmatpush.bf16.msra.mxu0 %v2376
    %3161 = vmatpush.bf16.msra.mxu0 %v2373
    %3162 = vmatpush.bf16.msra.mxu0 %v2370
    %3163 = vmatpush.bf16.msra.mxu0 %v2367
    %3164 = vmatpush.bf16.msra.mxu0 %v2364
    %3165 = vmatpush.bf16.msra.mxu0 %v2361
    %3166 = vmatmul.bf16.gmra.mxu0 %v3143
    %v3167 = vpop.f32.mrf.mxu0
    %v3168 = vadd.f32 0.0, %v3167
    %v3169 = vpop.f32.mrf.mxu0
    %v3170 = vadd.f32 0.0, %v3169
    %3171 = vdwg.mxu0
    %3172 = vmatpush.bf16.msra.mxu0 %v2383
    %3173 = vmatpush.bf16.msra.mxu0 %v2380
    %3174 = vmatpush.bf16.msra.mxu0 %v2377
    %3175 = vmatpush.bf16.msra.mxu0 %v2374
    %3176 = vmatpush.bf16.msra.mxu0 %v2371
    %3177 = vmatpush.bf16.msra.mxu0 %v2368
    %3178 = vmatpush.bf16.msra.mxu0 %v2365
    %3179 = vmatpush.bf16.msra.mxu0 %v2362
    %3180 = vmatmul.bf16.gmra.mxu0 %v3143
    %v3181 = vpop.f32.mrf.mxu0
    %v3182 = vadd.f32 0.0, %v3181
    %v3183 = vpop.f32.mrf.mxu0
    %v3184 = vadd.f32 0.0, %v3183
    %3185 = vdwg.mxu0
    %3186 = vmatpush.bf16.msra.mxu0 %v2551
    %3187 = vmatpush.bf16.msra.mxu0 %v2548
    %3188 = vmatpush.bf16.msra.mxu0 %v2545
    %3189 = vmatpush.bf16.msra.mxu0 %v2542
    %3190 = vmatpush.bf16.msra.mxu0 %v2539
    %3191 = vmatpush.bf16.msra.mxu0 %v2536
    %3192 = vmatpush.bf16.msra.mxu0 %v2533
    %3193 = vmatpush.bf16.msra.mxu0 %v2530
    %3194 = vmatmul.bf16.gmra.mxu0 %v3029
    %v3195 = vpop.f32.mrf.mxu0
    %v3196 = vadd.f32 %v3154, %v3195
    %v3197 = vpop.f32.mrf.mxu0
    %v3198 = vadd.f32 %v3156, %v3197
    %3199 = vdwg.mxu0
    %3200 = vmatpush.bf16.msra.mxu0 %v2552
    %3201 = vmatpush.bf16.msra.mxu0 %v2549
    %3202 = vmatpush.bf16.msra.mxu0 %v2546
    %3203 = vmatpush.bf16.msra.mxu0 %v2543
    %3204 = vmatpush.bf16.msra.mxu0 %v2540
    %3205 = vmatpush.bf16.msra.mxu0 %v2537
    %3206 = vmatpush.bf16.msra.mxu0 %v2534
    %3207 = vmatpush.bf16.msra.mxu0 %v2531
    %3208 = vmatmul.bf16.gmra.mxu0 %v3029
    %v3209 = vpop.f32.mrf.mxu0
    %v3210 = vadd.f32 %v3168, %v3209
    %v3211 = vpop.f32.mrf.mxu0
    %v3212 = vadd.f32 %v3170, %v3211
    %3213 = vdwg.mxu0
    %3214 = vmatpush.bf16.msra.mxu0 %v2553
    %3215 = vmatpush.bf16.msra.mxu0 %v2550
    %3216 = vmatpush.bf16.msra.mxu0 %v2547
    %3217 = vmatpush.bf16.msra.mxu0 %v2544
    %3218 = vmatpush.bf16.msra.mxu0 %v2541
    %3219 = vmatpush.bf16.msra.mxu0 %v2538
    %3220 = vmatpush.bf16.msra.mxu0 %v2535
    %3221 = vmatpush.bf16.msra.mxu0 %v2532
    %3222 = vmatmul.bf16.gmra.mxu0 %v3029
    %v3223 = vpop.f32.mrf.mxu0
    %v3224 = vadd.f32 %v3182, %v3223
    %v3225 = vpop.f32.mrf.mxu0
    %v3226 = vadd.f32 %v3184, %v3225
    %3227 = vdwg.mxu0
    %3230 = vrot.lane.b32.xlu0 %v1605, 64
    %v3231 = vpop.permute.xlu0 %3230
    %3232 = vrot.lane.b32.xlu0 %v1607, 64
    %v3233 = vpop.permute.xlu0 %3232
    %v3236 = vmul.f32 %v1605, %v1951
    %v3237 = vmul.f32 %v1607, %v1952
    %v3238 = vmul.f32 %v3231, %v1953
    %v3239 = vmul.f32 %v3233, %v1954
    %v3240 = vadd.f32 %v3236, %v3238
    %v3241 = vadd.f32 %v3237, %v3239
    %v3242 = vpack.c.bf16 %v3241, %v3240
    %3245 = vrot.lane.b32.xlu0 %v1776, 64
    %v3246 = vpop.permute.xlu0 %3245
    %3247 = vrot.lane.b32.xlu0 %v1778, 64
    %v3248 = vpop.permute.xlu0 %3247
    %v3251 = vmul.f32 %v1776, %v1951
    %v3252 = vmul.f32 %v1778, %v1952
    %v3253 = vmul.f32 %v3246, %v1953
    %v3254 = vmul.f32 %v3248, %v1954
    %v3255 = vadd.f32 %v3251, %v3253
    %v3256 = vadd.f32 %v3252, %v3254
    %v3257 = vpack.c.bf16 %v3256, %v3255
    %v3258 = vpack.c.bf16 %v1949, %v1947
    %3259 = vmatpush.bf16.xpose.msra.mxu0 0
    %3260 = vmatpush.bf16.xpose.msra.mxu0 0
    %3261 = vmatpush.bf16.xpose.msra.mxu0 0
    %3262 = vmatpush.bf16.xpose.msra.mxu0 0
    %3263 = vmatpush.bf16.xpose.msra.mxu0 0
    %3264 = vmatpush.bf16.xpose.msra.mxu0 0
    %3265 = vmatpush.bf16.xpose.msra.mxu0 0
    %3266 = vmatpush.bf16.xpose.msra.mxu0 %v3257
    %3267 = vmatmul.bf16.gmra.mxu0 %v3242
    %v3268 = vpop.f32.mrf.mxu0
    %v3269 = vadd.f32 0.0, %v3268
    %v3270 = vpop.f32.mrf.mxu0
    %v3271 = vadd.f32 0.0, %v3270
    %3272 = vdwg.mxu0
    %v3273 = vmul.f32 %v3269, 0.088388346
    %v3274 = vmul.f32 %v3271, 0.088388346
    %v3275 = vsel %vm2098, %v3273, -inf
    %3276 = vmax.xlane.f32.xlu0 %v3275
    %v3277 = vpop.xlane.xlu0 %3276
    %v3278 = vsel %vm2098, %v3274, -inf
    %3279 = vmax.xlane.f32.xlu0 %v3278
    %v3280 = vpop.xlane.xlu0 %3279
    %v3281 = vsub.f32 %v3273, %v3277
    %v3282 = vsub.f32 %v3274, %v3280
    %v3283 = vmul.f32 %v3281, 1.442695
    %v3284 = vpow.pop %v3283
    %v3285 = vmul.f32 %v3282, 1.442695
    %v3286 = vpow.pop %v3285
    %v3287 = vsel %vm2098, %v3284, 0.0
    %3288 = vadd.xlane.f32.xlu0 %v3287
    %v3289 = vpop.xlane.xlu0 %3288
    %v3290 = vsel %vm2098, %v3286, 0.0
    %3291 = vadd.xlane.f32.xlu0 %v3290
    %v3292 = vpop.xlane.xlu0 %3291
    %v3293 = vrcp.pop %v3289
    %v3294 = vmul.f32 %v3289, %v3293
    %v3295 = vsub.f32 1.0, %v3294
    %v3296 = vmul.f32 %v3293, %v3295
    %v3297 = vadd.f32 %v3293, %v3296
    %vm3298 = vweird.f32 %v3289
    %vm3299 = vweird.f32 %v3293
    %vm3300 = vmor %vm3298, %vm3299
    %v3301 = vsel %vm3300, %v3293, %v3297
    %v3302 = vand.u32 2147483647, %v3289
    %vm3303 = vcmp.eq.f32.partialorder %v3302, 8.507059e+37
    %v3304 = vand.u32 %v3289, 2147483648
    %v3305 = vor.u32 1.1754944e-38, %v3304
    %v3306 = vsel %vm3303, %v3305, %v3301
    %v3307 = vmul.f32 %v3284, %v3306
    %v3308 = vrcp.pop %v3292
    %v3309 = vmul.f32 %v3292, %v3308
    %v3310 = vsub.f32 1.0, %v3309
    %v3311 = vmul.f32 %v3308, %v3310
    %v3312 = vadd.f32 %v3308, %v3311
    %vm3313 = vweird.f32 %v3292
    %vm3314 = vweird.f32 %v3308
    %vm3315 = vmor %vm3313, %vm3314
    %v3316 = vsel %vm3315, %v3308, %v3312
    %v3317 = vand.u32 2147483647, %v3292
    %vm3318 = vcmp.eq.f32.partialorder %v3317, 8.507059e+37
    %v3319 = vand.u32 %v3292, 2147483648
    %v3320 = vor.u32 1.1754944e-38, %v3319
    %v3321 = vsel %vm3318, %v3320, %v3316
    %v3322 = vmul.f32 %v3286, %v3321
    %v3323 = vpack.c.bf16 %v3322, %v3307
    %v3325 = vsel %vm2098, %v3323, 0
    %3327 = vmatpush.bf16.msra.mxu0 0
    %3328 = vmatpush.bf16.msra.mxu0 0
    %3329 = vmatpush.bf16.msra.mxu0 0
    %3330 = vmatpush.bf16.msra.mxu0 0
    %3331 = vmatpush.bf16.msra.mxu0 0
    %3332 = vmatpush.bf16.msra.mxu0 0
    %3333 = vmatpush.bf16.msra.mxu0 0
    %3334 = vmatpush.bf16.msra.mxu0 %v3258
    %3335 = vmatmul.bf16.gmra.mxu0 %v3325
    %v3336 = vpop.f32.mrf.mxu0
    %v3337 = vadd.f32 0.0, %v3336
    %v3338 = vpop.f32.mrf.mxu0
    %v3339 = vadd.f32 0.0, %v3338
    %3340 = vdwg.mxu0
    %v3341 = vpack.c.bf16 %v3339, %v3337
    %3342 = vmatpush.bf16.msra.mxu0 %v2835
    %3343 = vmatpush.bf16.msra.mxu0 %v2832
    %3344 = vmatpush.bf16.msra.mxu0 %v2829
    %3345 = vmatpush.bf16.msra.mxu0 %v2826
    %3346 = vmatpush.bf16.msra.mxu0 %v2823
    %3347 = vmatpush.bf16.msra.mxu0 %v2820
    %3348 = vmatpush.bf16.msra.mxu0 %v2817
    %3349 = vmatpush.bf16.msra.mxu0 %v2814
    %3350 = vmatmul.bf16.gmra.mxu0 %v3341
    %v3351 = vpop.f32.mrf.mxu0
    %v3352 = vadd.f32 0.0, %v3351
    %v3353 = vpop.f32.mrf.mxu0
    %v3354 = vadd.f32 0.0, %v3353
    %3355 = vdwg.mxu0
    %3356 = vmatpush.bf16.msra.mxu0 %v2836
    %3357 = vmatpush.bf16.msra.mxu0 %v2833
    %3358 = vmatpush.bf16.msra.mxu0 %v2830
    %3359 = vmatpush.bf16.msra.mxu0 %v2827
    %3360 = vmatpush.bf16.msra.mxu0 %v2824
    %3361 = vmatpush.bf16.msra.mxu0 %v2821
    %3362 = vmatpush.bf16.msra.mxu0 %v2818
    %3363 = vmatpush.bf16.msra.mxu0 %v2815
    %3364 = vmatmul.bf16.gmra.mxu0 %v3341
    %v3365 = vpop.f32.mrf.mxu0
    %v3366 = vadd.f32 0.0, %v3365
    %v3367 = vpop.f32.mrf.mxu0
    %v3368 = vadd.f32 0.0, %v3367
    %3369 = vdwg.mxu0
    %3370 = vmatpush.bf16.msra.mxu0 %v2837
    %3371 = vmatpush.bf16.msra.mxu0 %v2834
    %3372 = vmatpush.bf16.msra.mxu0 %v2831
    %3373 = vmatpush.bf16.msra.mxu0 %v2828
    %3374 = vmatpush.bf16.msra.mxu0 %v2825
    %3375 = vmatpush.bf16.msra.mxu0 %v2822
    %3376 = vmatpush.bf16.msra.mxu0 %v2819
    %3377 = vmatpush.bf16.msra.mxu0 %v2816
    %3378 = vmatmul.bf16.gmra.mxu0 %v3341
    %v3379 = vpop.f32.mrf.mxu0
    %v3380 = vadd.f32 0.0, %v3379
    %v3381 = vpop.f32.mrf.mxu0
    %v3382 = vadd.f32 0.0, %v3381
    %3383 = vdwg.mxu0
    %v3384 = vadd.f32 %v3196, %v3352
    %v3385 = vadd.f32 %v3210, %v3366
    %v3386 = vadd.f32 %v3224, %v3380
    %v3387 = vadd.f32 %v3198, %v3354
    %v3388 = vadd.f32 %v3212, %v3368
    %v3389 = vadd.f32 %v3226, %v3382
    %3390 = vst [vmem:[#allocation7 + $0x30] sm:$0xff] %v3384
    %3391 = vst [vmem:[#allocation7 + $0x38] sm:$0xff] %v3385
    %3392 = vst [vmem:[#allocation7 + $0x40] sm:$0xff] %v3386
    %3393 = vst [vmem:[#allocation7 + $0x48] sm:$0xff] %v3387
    %3394 = vst [vmem:[#allocation7 + $0x50] sm:$0xff] %v3388
    %3395 = vst [vmem:[#allocation7 + $0x58] sm:$0xff] %v3389
    // Predicated region
    $region30: #{smollm2_attention_pallas.1} parent=1 // pred_check
      _
    $region31: #{smollm2_attention_pallas.1} parent=1 // pred_check_branch
      %3397 = sbr.rel (0) target = $region33
    $region32: #{smollm2_attention_pallas.1} parent=1 // pred_region
      %3399 = vsyncadd [#allocation4], 0
      %s3400 = sshll.u32 [#allocation7], 4
      %s3401 = int_to_ptr.vmem [resolvable:$true] %s3400
      %s3402 = sshll.u32 %s5, 4
      %s3403 = int_to_ptr.hbm [resolvable:$true] %s3402
      %3408 = dma.vmem_to_hbm [thread:$0]  %s3401, 1536, %s3403, [#allocation4], 384, 384, 24
    $region33: #{smollm2_attention_pallas.1} parent=1 // pred_fallthru
      _
    // Predicated region
    $region34: #{smollm2_attention_pallas.1} parent=1 // pred_check
      _
    $region35: #{smollm2_attention_pallas.1} parent=1 // pred_check_branch
      %3410 = sbr.rel (0) target = $region37
    $region36: #{smollm2_attention_pallas.1} parent=1 // pred_region
      %3412 = dma.done [#allocation4], 1536
    $region37: #{smollm2_attention_pallas.1} parent=1 // pred_fallthru
      _
    %3413 = vsyncpa [#allocation3], 1
    %3414 = vsyncpa [#allocation6], 1
    %3415 = vsyncpa [#allocation4], 1

</llo_original>
